<compile_context>
chip_gen: v7x
topology: tpu7x:2x2x1
jax: 0.10.0
libtpu: 0.0.40
codegen_flags: <defaults>
</compile_context>

<pallas_src>
import jax
import jax.numpy as jnp
from jax.experimental import pallas as pl
from jax.experimental.pallas import tpu as pltpu


def _round_up(x: int, m: int) -> int:
    return -(-x // m) * m


def _yolo_permute_kernel(x_ref, o_ref):
    # x_ref: (B, no, T) block in VMEM; o_ref: (B, T*no) lane-dense block.
    # out[p, t*no + c] = in[p, c, t]  ->  minor-dims transpose + flatten.
    o_ref[...] = jnp.swapaxes(x_ref[...], 1, 2).reshape(o_ref.shape)


def _device_profile():
    """Best-effort (TensorCores sharing the grid, per-step VMEM block budget)."""
    try:
        kind = jax.devices()[0].device_kind.lower()
    except Exception:
        kind = ""
    mib = 1024 * 1024
    if "7x" in kind or "v7" in kind:
        return 2, 28 * mib            # 2 TCs, only 64 MiB physical VMEM per TC
    if "v6" in kind:
        return 1, 56 * mib            # 1 TC, 128 MiB physical VMEM
    if "v5p" in kind or "v4" in kind:
        return 2, 48 * mib            # megacore parts
    if "v5" in kind:
        return 1, 48 * mib            # v5e / v5 lite: 1 TC
    return 1, 28 * mib                # unknown: conservative


def _choose_tiles(P, HW, no, sublane, itemsize, budget, num_tc):
    """Pick (B planes per block, T spatial positions per block) under the VMEM budget."""
    no_pad = _round_up(no, sublane)

    def block_bytes(b, t):
        # Double-buffered input (b, no, t) + lane-dense output (b, t*no),
        # including (sublane, 128) VMEM tile padding.
        in_b = b * no_pad * _round_up(t, 128) * itemsize
        out_b = _round_up(b, sublane) * _round_up(t * no, 128) * itemsize
        return 2 * (in_b + out_b)

    def largest_plane_block(t):
        # B must equal P (full dim) or be a multiple of `sublane` (it is the
        # second-minor dim of the lane-dense output block).
        if block_bytes(P, t) <= budget:
            return P
        b = (P // sublane) * sublane
        while b >= sublane:
            if block_bytes(b, t) <= budget:
                return b
            b -= sublane
        return 0

    # Prefer whole planes per grid step.
    T = HW
    B = largest_plane_block(T)
    if B == 0:
        # A whole plane does not fit the budget: tile HW in 128-lane chunks.
        B = P if P < sublane else sublane
        denom = 2 * itemsize * (B * no_pad + _round_up(B, sublane) * no)
        T = max(128, (budget // denom) // 128 * 128)
        T = min(T, _round_up(HW, 128))

    # Dual-TensorCore parts: give both cores work and keep the steps balanced.
    if num_tc > 1:
        n_p, n_t = -(-P // B), -(-HW // T)
        if n_p * n_t < num_tc and T == HW and HW > 128:
            T = min(HW, _round_up(-(-HW // num_tc), 128))
        elif n_p > 1 and n_p % num_tc != 0 and B > sublane:
            b = B - sublane
            while b >= max(sublane, B // 2):
                if (-(-P // b)) % num_tc == 0:
                    B = b
                    break
                b -= sublane
    return B, T


def yolo_layer_forward(x, img_size, anchors, num_classes,
                       new_coords=False, training=False, use_pallas=None):
    """Pallas equivalent of YOLOLayer(anchors, num_classes, new_coords).forward(x, img_size)."""
    del new_coords                      # does not affect the forward relayout
    num_anchors = len(anchors)
    no = num_classes + 5
    bs, ch, ny, nx = x.shape
    assert ch == num_anchors * no, (ch, num_anchors, no)
    _stride = img_size // ny            # parity with the PyTorch module (stored there, unused)

    P = bs * num_anchors                # independent (no, ny*nx) planes
    HW = ny * nx
    itemsize = jnp.dtype(x.dtype).itemsize
    total_bytes = int(x.size) * itemsize

    if use_pallas is None:              # auto: tiny tensors are not worth a kernel launch
        use_pallas = total_bytes >= (1 << 20)

    if not use_pallas:
        out = jnp.transpose(x.reshape(bs, num_anchors, no, ny, nx), (0, 1, 3, 4, 2))
        return out if training else out.reshape(bs, num_anchors * ny * nx, no)

    xr = x.reshape(P, no, HW)           # free, contiguous reshape outside the kernel

    num_tc, budget = _device_profile()
    sublane = max(8, 32 // itemsize)    # 8 for f32, 16 for bf16, 32 for int8/fp8
    B, T = _choose_tiles(P, HW, no, sublane, itemsize, budget, num_tc)

    grid = (pl.cdiv(P, B), pl.cdiv(HW, T))
    bytes_accessed = 2 * total_bytes    # read once + write once

    out_flat = pl.pallas_call(
        _yolo_permute_kernel,
        out_shape=jax.ShapeDtypeStruct((P, HW * no), x.dtype),
        grid=grid,
        in_specs=[pl.BlockSpec((B, no, T), lambda i, t: (i, 0, t))],
        out_specs=pl.BlockSpec((B, T * no), lambda i, t: (i, t)),
        compiler_params=pltpu.CompilerParams(
            dimension_semantics=("parallel", "parallel"),
            vmem_limit_bytes=budget + 8 * 1024 * 1024),
        cost_estimate=pl.CostEstimate(
            flops=0, transcendentals=0, bytes_accessed=bytes_accessed),
    )(xr)

    # Free, contiguous reshapes back to the PyTorch output layouts.
    if training:
        return out_flat.reshape(bs, num_anchors, ny, nx, no)
    return out_flat.reshape(bs, num_anchors * ny * nx, no)


# TODO(synk): nn.MSELoss / nn.BCELoss, the anchors / anchor_grid buffers and
# _make_grid are loss/decode-time utilities never touched by forward(), so they
# have no kernel equivalent here.


if __name__ == "__main__":
    key = jax.random.PRNGKey(0)
    bs, num_classes, ny, nx = 2, 3, 16, 16
    anchors = [(10, 13), (16, 30), (33, 23)]       # 3 anchors
    no = num_classes + 5                           # 8
    img_size = 16 * 26                             # -> stride = 26

    x = jax.random.normal(
        key, (bs, len(anchors) * no, ny, nx), dtype=jnp.float32)

    ref5 = x.reshape(bs, len(anchors), no, ny, nx).transpose(0, 1, 3, 4, 2)
    ref = ref5.reshape(bs, -1, no)

    # Pallas kernel, inference (eval) path: (bs, na*ny*nx, no)
    y = jax.block_until_ready(
        yolo_layer_forward(x, img_size, anchors, num_classes, use_pallas=True))
    assert y.shape == (bs, len(anchors) * ny * nx, no), y.shape
    assert y.dtype == x.dtype
    assert jnp.array_equal(y, ref), "mismatch vs reference YOLOLayer forward (eval)"

    # Pallas kernel, training path: (bs, na, ny, nx, no)
    y5 = jax.block_until_ready(
        yolo_layer_forward(x, img_size, anchors, num_classes, training=True,
                           use_pallas=True))
    assert y5.shape == (bs, len(anchors), ny, nx, no), y5.shape
    assert jnp.array_equal(y5, ref5), "mismatch vs reference YOLOLayer forward (train)"

    # Auto dispatch (small input -> plain XLA relayout), same semantics.
    y_auto = jax.block_until_ready(
        yolo_layer_forward(x, img_size, anchors, num_classes))
    assert jnp.array_equal(y_auto, ref), "mismatch vs reference (auto path)"

    print("KERNEL_OK")
</pallas_src>

<mosaic_0001>
module attributes {stable_mosaic.version = 11 : i64} {
  func.func @_yolo_permute_kernel(%arg0: i32, %arg1: i32, %arg2: memref<6x8x256xf32, #tpu.memory_space<vmem>>, %arg3: memref<6x2048xf32, #tpu.memory_space<vmem>>) attributes {dimension_semantics = [#tpu.dimension_semantics<parallel>, #tpu.dimension_semantics<parallel>], iteration_bounds = array<i64: 1, 1>, scalar_prefetch = 0 : i64, scratch_operands = 0 : i64, tpu.core_type = #tpu.core_type<tc>, window_params = [{transform_indices = @transform_0, window_bounds = array<i64: 6, 8, 256>}, {transform_indices = @transform_1, window_bounds = array<i64: 6, 2048>}]} {
    %c0 = arith.constant 0 : index
    %c0_0 = arith.constant 0 : index
    %c0_1 = arith.constant 0 : index
    %0 = vector.load %arg2[%c0, %c0_0, %c0_1] : memref<6x8x256xf32, #tpu.memory_space<vmem>>, vector<6x8x256xf32>
    %1 = tpu.transpose %0, [0, 2, 1] : vector<6x8x256xf32> -> vector<6x256x8xf32>
    %2 = vector.shape_cast %1 : vector<6x256x8xf32> to vector<6x2048xf32>
    %c0_2 = arith.constant 0 : index
    %c0_3 = arith.constant 0 : index
    %3 = vector.load %arg3[%c0_2, %c0_3] : memref<6x2048xf32, #tpu.memory_space<vmem>>, vector<6x2048xf32>
    tpu.vector_store %arg3[%c0_2, %c0_3], %2 {strides = array<i32>} : memref<6x2048xf32, #tpu.memory_space<vmem>>, vector<6x2048xf32>,
    return
  }
  func.func @transform_0(%arg0: i32, %arg1: i32) -> (i32, i32, i32) {
    %c0_i32 = arith.constant 0 : i32
    %c0_i32_0 = arith.constant 0 : i32
    return %arg0, %c0_i32, %arg1 : i32, i32, i32
  }
  func.func @transform_1(%arg0: i32, %arg1: i32) -> (i32, i32) {
    %c0_i32 = arith.constant 0 : i32
    return %arg0, %arg1 : i32, i32
  }
}

</mosaic_0001>

<llo_original>
// kernel: tpu_custom_call.1
$region0: #{tpu_custom_call.1}
  #allocation0 [shape = 'u32[]', space=smem, size = 0x4, offset = 0x4, fixed_abs, tag = 'smem constant byte address 0x4 - core index']
  #allocation1 [shape = 'u32[144,128]{1,0:T(1,128)}', space=vmem, size = 0x12000, scoped, tag = 'internal scratch']
  %s0 = inlined_call_operand.hbm [shape: f32[6,8,256], index: 0, kind: input, shape index: {}]
  %s1 = inlined_call_operand.hbm [shape: f32[6,2048], index: 1, kind: output, shape index: {}]
  %s2 = sld [smem:[#allocation0]]
  $region18: #{tpu_custom_call.1} parent=0
    _
  %s4 = ssub.s32 1, %s2
  %s5 = scalar_select 0, %s4, %s2
  $region1: #{tpu_custom_call.1} parent=0
    #allocation2 [shape = 'u8[49152]{0}', space=vmem, size = 0xc000, scoped, tag = 'input window, operand 0, single buffered']
    #allocation3 [shape = 's32[1]{0}', space=sflag, size = 0x4, scoped, tag = 'scoped memory for tpu_custom_call.1']
    #allocation4 [shape = 's32[1]{0}', space=sflag, size = 0x4, scoped, tag = 'scoped memory for tpu_custom_call.1']
    #allocation5 [shape = 'u8[65536]{0}', space=vmem, size = 0x10000, scoped, tag = 'output window, operand 0, single buffered']
    %6 = vsyncpa [#allocation3], 0
    %7 = vsyncpa [#allocation4], 0
    // Predicated region
    $region2: #{tpu_custom_call.1} parent=1 // pred_check
      _
    $region3: #{tpu_custom_call.1} parent=1 // pred_check_branch
      %9 = sbr.rel (0) target = $region5
    $region4: #{tpu_custom_call.1} parent=1 // pred_region
      %s11 = ssub.s32 1536, 1536
      %12 = vsyncadd [#allocation3], %s11
      %s13 = sshll.u32 [#allocation2], 4
      %s14 = int_to_ptr.vmem [resolvable:$true] %s13
      %19 = dma.hbm_to_vmem [thread:$0]  %s0, 1536, %s14, [#allocation3], 256, 256, 16
    $region5: #{tpu_custom_call.1} parent=1 // pred_fallthru
      _
    // Predicated region
    $region6: #{tpu_custom_call.1} parent=1 // pred_check
      _
    $region7: #{tpu_custom_call.1} parent=1 // pred_check_branch
      %21 = sbr.rel (0) target = $region9
    $region8: #{tpu_custom_call.1} parent=1 // pred_region
      %22 = dma.done [#allocation3], 1536
    $region9: #{tpu_custom_call.1} parent=1 // pred_fallthru
      _
    %v23 = vld [vmem:[#allocation2] sm:$0xff]
    %v24 = vld [vmem:[#allocation2 + $0x8] sm:$0xff]
    %v25 = vld [vmem:[#allocation2 + $0x10] sm:$0xff]
    %v26 = vld [vmem:[#allocation2 + $0x18] sm:$0xff]
    %v27 = vld [vmem:[#allocation2 + $0x20] sm:$0xff]
    %v28 = vld [vmem:[#allocation2 + $0x28] sm:$0xff]
    %v29 = vld [vmem:[#allocation2 + $0x30] sm:$0xff]
    %v30 = vld [vmem:[#allocation2 + $0x38] sm:$0xff]
    %v31 = vld [vmem:[#allocation2 + $0x40] sm:$0xff]
    %v32 = vld [vmem:[#allocation2 + $0x48] sm:$0xff]
    %v33 = vld [vmem:[#allocation2 + $0x50] sm:$0xff]
    %v34 = vld [vmem:[#allocation2 + $0x58] sm:$0xff]
    %35 = vxpose.xlu0.b32.start [1/16] %v23, 128
    %36 = vxpose.xlu0.b32.cont [2/16] 0.0, 128
    %37 = vxpose.xlu0.b32.cont [3/16] 0.0, 128
    %38 = vxpose.xlu0.b32.cont [4/16] 0.0, 128
    %39 = vxpose.xlu0.b32.cont [5/16] 0.0, 128
    %40 = vxpose.xlu0.b32.cont [6/16] 0.0, 128
    %41 = vxpose.xlu0.b32.cont [7/16] 0.0, 128
    %42 = vxpose.xlu0.b32.cont [8/16] 0.0, 128
    %43 = vxpose.xlu0.b32.cont [9/16] 0.0, 128
    %44 = vxpose.xlu0.b32.cont [10/16] 0.0, 128
    %45 = vxpose.xlu0.b32.cont [11/16] 0.0, 128
    %46 = vxpose.xlu0.b32.cont [12/16] 0.0, 128
    %47 = vxpose.xlu0.b32.cont [13/16] 0.0, 128
    %48 = vxpose.xlu0.b32.cont [14/16] 0.0, 128
    %49 = vxpose.xlu0.b32.cont [15/16] 0.0, 128
    %50 = vxpose.xlu0.b32.end [16/16] 0.0, 128
    %v51 = vpop.trf.xlu0
    %v52 = vpop.trf.xlu0
    %v53 = vpop.trf.xlu0
    %v54 = vpop.trf.xlu0
    %v55 = vpop.trf.xlu0
    %v56 = vpop.trf.xlu0
    %v57 = vpop.trf.xlu0
    %v58 = vpop.trf.xlu0
    %v59 = vpop.trf.xlu0
    %v60 = vpop.trf.xlu0
    %v61 = vpop.trf.xlu0
    %v62 = vpop.trf.xlu0
    %v63 = vpop.trf.xlu0
    %v64 = vpop.trf.xlu0
    %v65 = vpop.trf.xlu0
    %v66 = vpop.trf.xlu0
    %67 = vxpose.xlu0.b32.start [1/16] %v24, 128
    %68 = vxpose.xlu0.b32.cont [2/16] 0.0, 128
    %69 = vxpose.xlu0.b32.cont [3/16] 0.0, 128
    %70 = vxpose.xlu0.b32.cont [4/16] 0.0, 128
    %71 = vxpose.xlu0.b32.cont [5/16] 0.0, 128
    %72 = vxpose.xlu0.b32.cont [6/16] 0.0, 128
    %73 = vxpose.xlu0.b32.cont [7/16] 0.0, 128
    %74 = vxpose.xlu0.b32.cont [8/16] 0.0, 128
    %75 = vxpose.xlu0.b32.cont [9/16] 0.0, 128
    %76 = vxpose.xlu0.b32.cont [10/16] 0.0, 128
    %77 = vxpose.xlu0.b32.cont [11/16] 0.0, 128
    %78 = vxpose.xlu0.b32.cont [12/16] 0.0, 128
    %79 = vxpose.xlu0.b32.cont [13/16] 0.0, 128
    %80 = vxpose.xlu0.b32.cont [14/16] 0.0, 128
    %81 = vxpose.xlu0.b32.cont [15/16] 0.0, 128
    %82 = vxpose.xlu0.b32.end [16/16] 0.0, 128
    %v83 = vpop.trf.xlu0
    %v84 = vpop.trf.xlu0
    %v85 = vpop.trf.xlu0
    %v86 = vpop.trf.xlu0
    %v87 = vpop.trf.xlu0
    %v88 = vpop.trf.xlu0
    %v89 = vpop.trf.xlu0
    %v90 = vpop.trf.xlu0
    %v91 = vpop.trf.xlu0
    %v92 = vpop.trf.xlu0
    %v93 = vpop.trf.xlu0
    %v94 = vpop.trf.xlu0
    %v95 = vpop.trf.xlu0
    %v96 = vpop.trf.xlu0
    %v97 = vpop.trf.xlu0
    %v98 = vpop.trf.xlu0
    %99 = vxpose.xlu0.b32.start [1/16] %v25, 128
    %100 = vxpose.xlu0.b32.cont [2/16] 0.0, 128
    %101 = vxpose.xlu0.b32.cont [3/16] 0.0, 128
    %102 = vxpose.xlu0.b32.cont [4/16] 0.0, 128
    %103 = vxpose.xlu0.b32.cont [5/16] 0.0, 128
    %104 = vxpose.xlu0.b32.cont [6/16] 0.0, 128
    %105 = vxpose.xlu0.b32.cont [7/16] 0.0, 128
    %106 = vxpose.xlu0.b32.cont [8/16] 0.0, 128
    %107 = vxpose.xlu0.b32.cont [9/16] 0.0, 128
    %108 = vxpose.xlu0.b32.cont [10/16] 0.0, 128
    %109 = vxpose.xlu0.b32.cont [11/16] 0.0, 128
    %110 = vxpose.xlu0.b32.cont [12/16] 0.0, 128
    %111 = vxpose.xlu0.b32.cont [13/16] 0.0, 128
    %112 = vxpose.xlu0.b32.cont [14/16] 0.0, 128
    %113 = vxpose.xlu0.b32.cont [15/16] 0.0, 128
    %114 = vxpose.xlu0.b32.end [16/16] 0.0, 128
    %v115 = vpop.trf.xlu0
    %v116 = vpop.trf.xlu0
    %v117 = vpop.trf.xlu0
    %v118 = vpop.trf.xlu0
    %v119 = vpop.trf.xlu0
    %v120 = vpop.trf.xlu0
    %v121 = vpop.trf.xlu0
    %v122 = vpop.trf.xlu0
    %v123 = vpop.trf.xlu0
    %v124 = vpop.trf.xlu0
    %v125 = vpop.trf.xlu0
    %v126 = vpop.trf.xlu0
    %v127 = vpop.trf.xlu0
    %v128 = vpop.trf.xlu0
    %v129 = vpop.trf.xlu0
    %v130 = vpop.trf.xlu0
    %131 = vxpose.xlu0.b32.start [1/16] %v26, 128
    %132 = vxpose.xlu0.b32.cont [2/16] 0.0, 128
    %133 = vxpose.xlu0.b32.cont [3/16] 0.0, 128
    %134 = vxpose.xlu0.b32.cont [4/16] 0.0, 128
    %135 = vxpose.xlu0.b32.cont [5/16] 0.0, 128
    %136 = vxpose.xlu0.b32.cont [6/16] 0.0, 128
    %137 = vxpose.xlu0.b32.cont [7/16] 0.0, 128
    %138 = vxpose.xlu0.b32.cont [8/16] 0.0, 128
    %139 = vxpose.xlu0.b32.cont [9/16] 0.0, 128
    %140 = vxpose.xlu0.b32.cont [10/16] 0.0, 128
    %141 = vxpose.xlu0.b32.cont [11/16] 0.0, 128
    %142 = vxpose.xlu0.b32.cont [12/16] 0.0, 128
    %143 = vxpose.xlu0.b32.cont [13/16] 0.0, 128
    %144 = vxpose.xlu0.b32.cont [14/16] 0.0, 128
    %145 = vxpose.xlu0.b32.cont [15/16] 0.0, 128
    %146 = vxpose.xlu0.b32.end [16/16] 0.0, 128
    %v147 = vpop.trf.xlu0
    %v148 = vpop.trf.xlu0
    %v149 = vpop.trf.xlu0
    %v150 = vpop.trf.xlu0
    %v151 = vpop.trf.xlu0
    %v152 = vpop.trf.xlu0
    %v153 = vpop.trf.xlu0
    %v154 = vpop.trf.xlu0
    %v155 = vpop.trf.xlu0
    %v156 = vpop.trf.xlu0
    %v157 = vpop.trf.xlu0
    %v158 = vpop.trf.xlu0
    %v159 = vpop.trf.xlu0
    %v160 = vpop.trf.xlu0
    %v161 = vpop.trf.xlu0
    %v162 = vpop.trf.xlu0
    %163 = vxpose.xlu0.b32.start [1/16] %v27, 128
    %164 = vxpose.xlu0.b32.cont [2/16] 0.0, 128
    %165 = vxpose.xlu0.b32.cont [3/16] 0.0, 128
    %166 = vxpose.xlu0.b32.cont [4/16] 0.0, 128
    %167 = vxpose.xlu0.b32.cont [5/16] 0.0, 128
    %168 = vxpose.xlu0.b32.cont [6/16] 0.0, 128
    %169 = vxpose.xlu0.b32.cont [7/16] 0.0, 128
    %170 = vxpose.xlu0.b32.cont [8/16] 0.0, 128
    %171 = vxpose.xlu0.b32.cont [9/16] 0.0, 128
    %172 = vxpose.xlu0.b32.cont [10/16] 0.0, 128
    %173 = vxpose.xlu0.b32.cont [11/16] 0.0, 128
    %174 = vxpose.xlu0.b32.cont [12/16] 0.0, 128
    %175 = vxpose.xlu0.b32.cont [13/16] 0.0, 128
    %176 = vxpose.xlu0.b32.cont [14/16] 0.0, 128
    %177 = vxpose.xlu0.b32.cont [15/16] 0.0, 128
    %178 = vxpose.xlu0.b32.end [16/16] 0.0, 128
    %v179 = vpop.trf.xlu0
    %v180 = vpop.trf.xlu0
    %v181 = vpop.trf.xlu0
    %v182 = vpop.trf.xlu0
    %v183 = vpop.trf.xlu0
    %v184 = vpop.trf.xlu0
    %v185 = vpop.trf.xlu0
    %v186 = vpop.trf.xlu0
    %v187 = vpop.trf.xlu0
    %v188 = vpop.trf.xlu0
    %v189 = vpop.trf.xlu0
    %v190 = vpop.trf.xlu0
    %v191 = vpop.trf.xlu0
    %v192 = vpop.trf.xlu0
    %v193 = vpop.trf.xlu0
    %v194 = vpop.trf.xlu0
    %195 = vxpose.xlu0.b32.start [1/16] %v28, 128
    %196 = vxpose.xlu0.b32.cont [2/16] 0.0, 128
    %197 = vxpose.xlu0.b32.cont [3/16] 0.0, 128
    %198 = vxpose.xlu0.b32.cont [4/16] 0.0, 128
    %199 = vxpose.xlu0.b32.cont [5/16] 0.0, 128
    %200 = vxpose.xlu0.b32.cont [6/16] 0.0, 128
    %201 = vxpose.xlu0.b32.cont [7/16] 0.0, 128
    %202 = vxpose.xlu0.b32.cont [8/16] 0.0, 128
    %203 = vxpose.xlu0.b32.cont [9/16] 0.0, 128
    %204 = vxpose.xlu0.b32.cont [10/16] 0.0, 128
    %205 = vxpose.xlu0.b32.cont [11/16] 0.0, 128
    %206 = vxpose.xlu0.b32.cont [12/16] 0.0, 128
    %207 = vxpose.xlu0.b32.cont [13/16] 0.0, 128
    %208 = vxpose.xlu0.b32.cont [14/16] 0.0, 128
    %209 = vxpose.xlu0.b32.cont [15/16] 0.0, 128
    %210 = vxpose.xlu0.b32.end [16/16] 0.0, 128
    %v211 = vpop.trf.xlu0
    %v212 = vpop.trf.xlu0
    %v213 = vpop.trf.xlu0
    %v214 = vpop.trf.xlu0
    %v215 = vpop.trf.xlu0
    %v216 = vpop.trf.xlu0
    %v217 = vpop.trf.xlu0
    %v218 = vpop.trf.xlu0
    %v219 = vpop.trf.xlu0
    %v220 = vpop.trf.xlu0
    %v221 = vpop.trf.xlu0
    %v222 = vpop.trf.xlu0
    %v223 = vpop.trf.xlu0
    %v224 = vpop.trf.xlu0
    %v225 = vpop.trf.xlu0
    %v226 = vpop.trf.xlu0
    %227 = vxpose.xlu0.b32.start [1/16] %v29, 128
    %228 = vxpose.xlu0.b32.cont [2/16] 0.0, 128
    %229 = vxpose.xlu0.b32.cont [3/16] 0.0, 128
    %230 = vxpose.xlu0.b32.cont [4/16] 0.0, 128
    %231 = vxpose.xlu0.b32.cont [5/16] 0.0, 128
    %232 = vxpose.xlu0.b32.cont [6/16] 0.0, 128
    %233 = vxpose.xlu0.b32.cont [7/16] 0.0, 128
    %234 = vxpose.xlu0.b32.cont [8/16] 0.0, 128
    %235 = vxpose.xlu0.b32.cont [9/16] 0.0, 128
    %236 = vxpose.xlu0.b32.cont [10/16] 0.0, 128
    %237 = vxpose.xlu0.b32.cont [11/16] 0.0, 128
    %238 = vxpose.xlu0.b32.cont [12/16] 0.0, 128
    %239 = vxpose.xlu0.b32.cont [13/16] 0.0, 128
    %240 = vxpose.xlu0.b32.cont [14/16] 0.0, 128
    %241 = vxpose.xlu0.b32.cont [15/16] 0.0, 128
    %242 = vxpose.xlu0.b32.end [16/16] 0.0, 128
    %v243 = vpop.trf.xlu0
    %v244 = vpop.trf.xlu0
    %v245 = vpop.trf.xlu0
    %v246 = vpop.trf.xlu0
    %v247 = vpop.trf.xlu0
    %v248 = vpop.trf.xlu0
    %v249 = vpop.trf.xlu0
    %v250 = vpop.trf.xlu0
    %v251 = vpop.trf.xlu0
    %v252 = vpop.trf.xlu0
    %v253 = vpop.trf.xlu0
    %v254 = vpop.trf.xlu0
    %v255 = vpop.trf.xlu0
    %v256 = vpop.trf.xlu0
    %v257 = vpop.trf.xlu0
    %v258 = vpop.trf.xlu0
    %259 = vxpose.xlu0.b32.start [1/16] %v30, 128
    %260 = vxpose.xlu0.b32.cont [2/16] 0.0, 128
    %261 = vxpose.xlu0.b32.cont [3/16] 0.0, 128
    %262 = vxpose.xlu0.b32.cont [4/16] 0.0, 128
    %263 = vxpose.xlu0.b32.cont [5/16] 0.0, 128
    %264 = vxpose.xlu0.b32.cont [6/16] 0.0, 128
    %265 = vxpose.xlu0.b32.cont [7/16] 0.0, 128
    %266 = vxpose.xlu0.b32.cont [8/16] 0.0, 128
    %267 = vxpose.xlu0.b32.cont [9/16] 0.0, 128
    %268 = vxpose.xlu0.b32.cont [10/16] 0.0, 128
    %269 = vxpose.xlu0.b32.cont [11/16] 0.0, 128
    %270 = vxpose.xlu0.b32.cont [12/16] 0.0, 128
    %271 = vxpose.xlu0.b32.cont [13/16] 0.0, 128
    %272 = vxpose.xlu0.b32.cont [14/16] 0.0, 128
    %273 = vxpose.xlu0.b32.cont [15/16] 0.0, 128
    %274 = vxpose.xlu0.b32.end [16/16] 0.0, 128
    %v275 = vpop.trf.xlu0
    %v276 = vpop.trf.xlu0
    %v277 = vpop.trf.xlu0
    %v278 = vpop.trf.xlu0
    %v279 = vpop.trf.xlu0
    %v280 = vpop.trf.xlu0
    %v281 = vpop.trf.xlu0
    %v282 = vpop.trf.xlu0
    %v283 = vpop.trf.xlu0
    %v284 = vpop.trf.xlu0
    %v285 = vpop.trf.xlu0
    %v286 = vpop.trf.xlu0
    %v287 = vpop.trf.xlu0
    %v288 = vpop.trf.xlu0
    %v289 = vpop.trf.xlu0
    %v290 = vpop.trf.xlu0
    %291 = vxpose.xlu0.b32.start [1/16] %v31, 128
    %292 = vxpose.xlu0.b32.cont [2/16] 0.0, 128
    %293 = vxpose.xlu0.b32.cont [3/16] 0.0, 128
    %294 = vxpose.xlu0.b32.cont [4/16] 0.0, 128
    %295 = vxpose.xlu0.b32.cont [5/16] 0.0, 128
    %296 = vxpose.xlu0.b32.cont [6/16] 0.0, 128
    %297 = vxpose.xlu0.b32.cont [7/16] 0.0, 128
    %298 = vxpose.xlu0.b32.cont [8/16] 0.0, 128
    %299 = vxpose.xlu0.b32.cont [9/16] 0.0, 128
    %300 = vxpose.xlu0.b32.cont [10/16] 0.0, 128
    %301 = vxpose.xlu0.b32.cont [11/16] 0.0, 128
    %302 = vxpose.xlu0.b32.cont [12/16] 0.0, 128
    %303 = vxpose.xlu0.b32.cont [13/16] 0.0, 128
    %304 = vxpose.xlu0.b32.cont [14/16] 0.0, 128
    %305 = vxpose.xlu0.b32.cont [15/16] 0.0, 128
    %306 = vxpose.xlu0.b32.end [16/16] 0.0, 128
    %v307 = vpop.trf.xlu0
    %v308 = vpop.trf.xlu0
    %v309 = vpop.trf.xlu0
    %v310 = vpop.trf.xlu0
    %v311 = vpop.trf.xlu0
    %v312 = vpop.trf.xlu0
    %v313 = vpop.trf.xlu0
    %v314 = vpop.trf.xlu0
    %v315 = vpop.trf.xlu0
    %v316 = vpop.trf.xlu0
    %v317 = vpop.trf.xlu0
    %v318 = vpop.trf.xlu0
    %v319 = vpop.trf.xlu0
    %v320 = vpop.trf.xlu0
    %v321 = vpop.trf.xlu0
    %v322 = vpop.trf.xlu0
    %323 = vxpose.xlu0.b32.start [1/16] %v32, 128
    %324 = vxpose.xlu0.b32.cont [2/16] 0.0, 128
    %325 = vxpose.xlu0.b32.cont [3/16] 0.0, 128
    %326 = vxpose.xlu0.b32.cont [4/16] 0.0, 128
    %327 = vxpose.xlu0.b32.cont [5/16] 0.0, 128
    %328 = vxpose.xlu0.b32.cont [6/16] 0.0, 128
    %329 = vxpose.xlu0.b32.cont [7/16] 0.0, 128
    %330 = vxpose.xlu0.b32.cont [8/16] 0.0, 128
    %331 = vxpose.xlu0.b32.cont [9/16] 0.0, 128
    %332 = vxpose.xlu0.b32.cont [10/16] 0.0, 128
    %333 = vxpose.xlu0.b32.cont [11/16] 0.0, 128
    %334 = vxpose.xlu0.b32.cont [12/16] 0.0, 128
    %335 = vxpose.xlu0.b32.cont [13/16] 0.0, 128
    %336 = vxpose.xlu0.b32.cont [14/16] 0.0, 128
    %337 = vxpose.xlu0.b32.cont [15/16] 0.0, 128
    %338 = vxpose.xlu0.b32.end [16/16] 0.0, 128
    %v339 = vpop.trf.xlu0
    %v340 = vpop.trf.xlu0
    %v341 = vpop.trf.xlu0
    %v342 = vpop.trf.xlu0
    %v343 = vpop.trf.xlu0
    %v344 = vpop.trf.xlu0
    %v345 = vpop.trf.xlu0
    %v346 = vpop.trf.xlu0
    %v347 = vpop.trf.xlu0
    %v348 = vpop.trf.xlu0
    %v349 = vpop.trf.xlu0
    %v350 = vpop.trf.xlu0
    %v351 = vpop.trf.xlu0
    %v352 = vpop.trf.xlu0
    %v353 = vpop.trf.xlu0
    %v354 = vpop.trf.xlu0
    %355 = vxpose.xlu0.b32.start [1/16] %v33, 128
    %356 = vxpose.xlu0.b32.cont [2/16] 0.0, 128
    %357 = vxpose.xlu0.b32.cont [3/16] 0.0, 128
    %358 = vxpose.xlu0.b32.cont [4/16] 0.0, 128
    %359 = vxpose.xlu0.b32.cont [5/16] 0.0, 128
    %360 = vxpose.xlu0.b32.cont [6/16] 0.0, 128
    %361 = vxpose.xlu0.b32.cont [7/16] 0.0, 128
    %362 = vxpose.xlu0.b32.cont [8/16] 0.0, 128
    %363 = vxpose.xlu0.b32.cont [9/16] 0.0, 128
    %364 = vxpose.xlu0.b32.cont [10/16] 0.0, 128
    %365 = vxpose.xlu0.b32.cont [11/16] 0.0, 128
    %366 = vxpose.xlu0.b32.cont [12/16] 0.0, 128
    %367 = vxpose.xlu0.b32.cont [13/16] 0.0, 128
    %368 = vxpose.xlu0.b32.cont [14/16] 0.0, 128
    %369 = vxpose.xlu0.b32.cont [15/16] 0.0, 128
    %370 = vxpose.xlu0.b32.end [16/16] 0.0, 128
    %v371 = vpop.trf.xlu0
    %v372 = vpop.trf.xlu0
    %v373 = vpop.trf.xlu0
    %v374 = vpop.trf.xlu0
    %v375 = vpop.trf.xlu0
    %v376 = vpop.trf.xlu0
    %v377 = vpop.trf.xlu0
    %v378 = vpop.trf.xlu0
    %v379 = vpop.trf.xlu0
    %v380 = vpop.trf.xlu0
    %v381 = vpop.trf.xlu0
    %v382 = vpop.trf.xlu0
    %v383 = vpop.trf.xlu0
    %v384 = vpop.trf.xlu0
    %v385 = vpop.trf.xlu0
    %v386 = vpop.trf.xlu0
    %387 = vxpose.xlu0.b32.start [1/16] %v34, 128
    %388 = vxpose.xlu0.b32.cont [2/16] 0.0, 128
    %389 = vxpose.xlu0.b32.cont [3/16] 0.0, 128
    %390 = vxpose.xlu0.b32.cont [4/16] 0.0, 128
    %391 = vxpose.xlu0.b32.cont [5/16] 0.0, 128
    %392 = vxpose.xlu0.b32.cont [6/16] 0.0, 128
    %393 = vxpose.xlu0.b32.cont [7/16] 0.0, 128
    %394 = vxpose.xlu0.b32.cont [8/16] 0.0, 128
    %395 = vxpose.xlu0.b32.cont [9/16] 0.0, 128
    %396 = vxpose.xlu0.b32.cont [10/16] 0.0, 128
    %397 = vxpose.xlu0.b32.cont [11/16] 0.0, 128
    %398 = vxpose.xlu0.b32.cont [12/16] 0.0, 128
    %399 = vxpose.xlu0.b32.cont [13/16] 0.0, 128
    %400 = vxpose.xlu0.b32.cont [14/16] 0.0, 128
    %401 = vxpose.xlu0.b32.cont [15/16] 0.0, 128
    %402 = vxpose.xlu0.b32.end [16/16] 0.0, 128
    %v403 = vpop.trf.xlu0
    %v404 = vpop.trf.xlu0
    %v405 = vpop.trf.xlu0
    %v406 = vpop.trf.xlu0
    %v407 = vpop.trf.xlu0
    %v408 = vpop.trf.xlu0
    %v409 = vpop.trf.xlu0
    %v410 = vpop.trf.xlu0
    %v411 = vpop.trf.xlu0
    %v412 = vpop.trf.xlu0
    %v413 = vpop.trf.xlu0
    %v414 = vpop.trf.xlu0
    %v415 = vpop.trf.xlu0
    %v416 = vpop.trf.xlu0
    %v417 = vpop.trf.xlu0
    %v418 = vpop.trf.xlu0
    %v419 = vcombine.low %v51, %v179
    %v420 = vcombine.high %v51, %v179
    %v422 = vunpack.c.l.s4 1983009808
    %v423 = vunpack.c.0.s8 %v422
    %v424 = vlaneseq
    %v425 = vshrl.u32 %v424, 7
    %v426 = vsub.s32 %v423, %v425
    %v427 = vrot.slane %v419, %v426
    %v429 = vunpack.c.l.s4 1983009808
    %v430 = vunpack.c.0.s8 %v429
    %v431 = vlaneseq
    %v432 = vshrl.u32 %v431, 7
    %v433 = vsub.s32 %v430, %v432
    %v434 = vrot.slane %v420, %v433
    %v435 = vcombine.low %v115, %v243
    %v436 = vcombine.high %v115, %v243
    %v438 = vunpack.c.l.s4 1983009808
    %v439 = vunpack.c.0.s8 %v438
    %v440 = vlaneseq
    %v441 = vshrl.u32 %v440, 7
    %v442 = vsub.s32 %v439, %v441
    %v443 = vrot.slane %v435, %v442
    %v445 = vunpack.c.l.s4 1983009808
    %v446 = vunpack.c.0.s8 %v445
    %v447 = vlaneseq
    %v448 = vshrl.u32 %v447, 7
    %v449 = vsub.s32 %v446, %v448
    %v450 = vrot.slane %v436, %v449
    %v451 = vcombine.high %v307, 0.0
    %v453 = vunpack.c.l.s4 1983009808
    %v454 = vunpack.c.0.s8 %v453
    %v455 = vlaneseq
    %v456 = vshrl.u32 %v455, 7
    %v457 = vsub.s32 %v454, %v456
    %v458 = vrot.slane %v307, %v457
    %v460 = vunpack.c.l.s4 1983009808
    %v461 = vunpack.c.0.s8 %v460
    %v462 = vlaneseq
    %v463 = vshrl.u32 %v462, 7
    %v464 = vsub.s32 %v461, %v463
    %v465 = vrot.slane %v451, %v464
    %v466 = vcombine.high %v371, 0.0
    %v468 = vunpack.c.l.s4 1983009808
    %v469 = vunpack.c.0.s8 %v468
    %v470 = vlaneseq
    %v471 = vshrl.u32 %v470, 7
    %v472 = vsub.s32 %v469, %v471
    %v473 = vrot.slane %v371, %v472
    %v475 = vunpack.c.l.s4 1983009808
    %v476 = vunpack.c.0.s8 %v475
    %v477 = vlaneseq
    %v478 = vshrl.u32 %v477, 7
    %v479 = vsub.s32 %v476, %v478
    %v480 = vrot.slane %v466, %v479
    %v481 = vcombine.low %v427, %v443
    %v482 = vcombine.high %v427, %v443
    %v484 = vunpack.c.l.s4 1934713408
    %v485 = vunpack.c.0.s8 %v484
    %v486 = vlaneseq
    %v487 = vshrl.u32 %v486, 7
    %v488 = vsub.s32 %v485, %v487
    %v489 = vrot.slane %v481, %v488
    %v491 = vunpack.c.l.s4 1934713408
    %v492 = vunpack.c.0.s8 %v491
    %v493 = vlaneseq
    %v494 = vshrl.u32 %v493, 7
    %v495 = vsub.s32 %v492, %v494
    %v496 = vrot.slane %v482, %v495
    %v497 = vcombine.low %v434, %v450
    %v498 = vcombine.high %v434, %v450
    %v500 = vunpack.c.l.s4 1934713408
    %v501 = vunpack.c.0.s8 %v500
    %v502 = vlaneseq
    %v503 = vshrl.u32 %v502, 7
    %v504 = vsub.s32 %v501, %v503
    %v505 = vrot.slane %v497, %v504
    %v507 = vunpack.c.l.s4 1934713408
    %v508 = vunpack.c.0.s8 %v507
    %v509 = vlaneseq
    %v510 = vshrl.u32 %v509, 7
    %v511 = vsub.s32 %v508, %v510
    %v512 = vrot.slane %v498, %v511
    %v513 = vcombine.low %v458, %v473
    %v514 = vcombine.high %v458, %v473
    %v516 = vunpack.c.l.s4 1934713408
    %v517 = vunpack.c.0.s8 %v516
    %v518 = vlaneseq
    %v519 = vshrl.u32 %v518, 7
    %v520 = vsub.s32 %v517, %v519
    %v521 = vrot.slane %v513, %v520
    %v523 = vunpack.c.l.s4 1934713408
    %v524 = vunpack.c.0.s8 %v523
    %v525 = vlaneseq
    %v526 = vshrl.u32 %v525, 7
    %v527 = vsub.s32 %v524, %v526
    %v528 = vrot.slane %v514, %v527
    %v529 = vcombine.low %v465, %v480
    %v530 = vcombine.high %v465, %v480
    %v532 = vunpack.c.l.s4 1934713408
    %v533 = vunpack.c.0.s8 %v532
    %v534 = vlaneseq
    %v535 = vshrl.u32 %v534, 7
    %v536 = vsub.s32 %v533, %v535
    %v537 = vrot.slane %v529, %v536
    %v539 = vunpack.c.l.s4 1934713408
    %v540 = vunpack.c.0.s8 %v539
    %v541 = vlaneseq
    %v542 = vshrl.u32 %v541, 7
    %v543 = vsub.s32 %v540, %v542
    %v544 = vrot.slane %v530, %v543
    %v545 = vcombine.low %v489, %v521
    %v546 = vcombine.high %v489, %v521
    %v547 = vcombine.low %v496, %v528
    %v548 = vcombine.high %v496, %v528
    %v549 = vcombine.low %v505, %v537
    %v550 = vcombine.high %v505, %v537
    %v551 = vcombine.low %v512, %v544
    %v552 = vcombine.high %v512, %v544
    %v553 = vcombine.low %v52, %v180
    %v554 = vcombine.high %v52, %v180
    %v556 = vunpack.c.l.s4 1983009808
    %v557 = vunpack.c.0.s8 %v556
    %v558 = vlaneseq
    %v559 = vshrl.u32 %v558, 7
    %v560 = vsub.s32 %v557, %v559
    %v561 = vrot.slane %v553, %v560
    %v563 = vunpack.c.l.s4 1983009808
    %v564 = vunpack.c.0.s8 %v563
    %v565 = vlaneseq
    %v566 = vshrl.u32 %v565, 7
    %v567 = vsub.s32 %v564, %v566
    %v568 = vrot.slane %v554, %v567
    %v569 = vcombine.low %v116, %v244
    %v570 = vcombine.high %v116, %v244
    %v572 = vunpack.c.l.s4 1983009808
    %v573 = vunpack.c.0.s8 %v572
    %v574 = vlaneseq
    %v575 = vshrl.u32 %v574, 7
    %v576 = vsub.s32 %v573, %v575
    %v577 = vrot.slane %v569, %v576
    %v579 = vunpack.c.l.s4 1983009808
    %v580 = vunpack.c.0.s8 %v579
    %v581 = vlaneseq
    %v582 = vshrl.u32 %v581, 7
    %v583 = vsub.s32 %v580, %v582
    %v584 = vrot.slane %v570, %v583
    %v585 = vcombine.high %v308, 0.0
    %v587 = vunpack.c.l.s4 1983009808
    %v588 = vunpack.c.0.s8 %v587
    %v589 = vlaneseq
    %v590 = vshrl.u32 %v589, 7
    %v591 = vsub.s32 %v588, %v590
    %v592 = vrot.slane %v308, %v591
    %v594 = vunpack.c.l.s4 1983009808
    %v595 = vunpack.c.0.s8 %v594
    %v596 = vlaneseq
    %v597 = vshrl.u32 %v596, 7
    %v598 = vsub.s32 %v595, %v597
    %v599 = vrot.slane %v585, %v598
    %v600 = vcombine.high %v372, 0.0
    %v602 = vunpack.c.l.s4 1983009808
    %v603 = vunpack.c.0.s8 %v602
    %v604 = vlaneseq
    %v605 = vshrl.u32 %v604, 7
    %v606 = vsub.s32 %v603, %v605
    %v607 = vrot.slane %v372, %v606
    %v609 = vunpack.c.l.s4 1983009808
    %v610 = vunpack.c.0.s8 %v609
    %v611 = vlaneseq
    %v612 = vshrl.u32 %v611, 7
    %v613 = vsub.s32 %v610, %v612
    %v614 = vrot.slane %v600, %v613
    %v615 = vcombine.low %v561, %v577
    %v616 = vcombine.high %v561, %v577
    %v618 = vunpack.c.l.s4 1934713408
    %v619 = vunpack.c.0.s8 %v618
    %v620 = vlaneseq
    %v621 = vshrl.u32 %v620, 7
    %v622 = vsub.s32 %v619, %v621
    %v623 = vrot.slane %v615, %v622
    %v625 = vunpack.c.l.s4 1934713408
    %v626 = vunpack.c.0.s8 %v625
    %v627 = vlaneseq
    %v628 = vshrl.u32 %v627, 7
    %v629 = vsub.s32 %v626, %v628
    %v630 = vrot.slane %v616, %v629
    %v631 = vcombine.low %v568, %v584
    %v632 = vcombine.high %v568, %v584
    %v634 = vunpack.c.l.s4 1934713408
    %v635 = vunpack.c.0.s8 %v634
    %v636 = vlaneseq
    %v637 = vshrl.u32 %v636, 7
    %v638 = vsub.s32 %v635, %v637
    %v639 = vrot.slane %v631, %v638
    %v641 = vunpack.c.l.s4 1934713408
    %v642 = vunpack.c.0.s8 %v641
    %v643 = vlaneseq
    %v644 = vshrl.u32 %v643, 7
    %v645 = vsub.s32 %v642, %v644
    %v646 = vrot.slane %v632, %v645
    %v647 = vcombine.low %v592, %v607
    %v648 = vcombine.high %v592, %v607
    %v650 = vunpack.c.l.s4 1934713408
    %v651 = vunpack.c.0.s8 %v650
    %v652 = vlaneseq
    %v653 = vshrl.u32 %v652, 7
    %v654 = vsub.s32 %v651, %v653
    %v655 = vrot.slane %v647, %v654
    %v657 = vunpack.c.l.s4 1934713408
    %v658 = vunpack.c.0.s8 %v657
    %v659 = vlaneseq
    %v660 = vshrl.u32 %v659, 7
    %v661 = vsub.s32 %v658, %v660
    %v662 = vrot.slane %v648, %v661
    %v663 = vcombine.low %v599, %v614
    %v664 = vcombine.high %v599, %v614
    %v666 = vunpack.c.l.s4 1934713408
    %v667 = vunpack.c.0.s8 %v666
    %v668 = vlaneseq
    %v669 = vshrl.u32 %v668, 7
    %v670 = vsub.s32 %v667, %v669
    %v671 = vrot.slane %v663, %v670
    %v673 = vunpack.c.l.s4 1934713408
    %v674 = vunpack.c.0.s8 %v673
    %v675 = vlaneseq
    %v676 = vshrl.u32 %v675, 7
    %v677 = vsub.s32 %v674, %v676
    %v678 = vrot.slane %v664, %v677
    %v679 = vcombine.low %v623, %v655
    %v680 = vcombine.high %v623, %v655
    %v681 = vcombine.low %v630, %v662
    %v682 = vcombine.high %v630, %v662
    %v683 = vcombine.low %v639, %v671
    %v684 = vcombine.high %v639, %v671
    %v685 = vcombine.low %v646, %v678
    %v686 = vcombine.high %v646, %v678
    %v687 = vcombine.low %v53, %v181
    %v688 = vcombine.high %v53, %v181
    %v690 = vunpack.c.l.s4 1983009808
    %v691 = vunpack.c.0.s8 %v690
    %v692 = vlaneseq
    %v693 = vshrl.u32 %v692, 7
    %v694 = vsub.s32 %v691, %v693
    %v695 = vrot.slane %v687, %v694
    %v697 = vunpack.c.l.s4 1983009808
    %v698 = vunpack.c.0.s8 %v697
    %v699 = vlaneseq
    %v700 = vshrl.u32 %v699, 7
    %v701 = vsub.s32 %v698, %v700
    %v702 = vrot.slane %v688, %v701
    %v703 = vcombine.low %v117, %v245
    %v704 = vcombine.high %v117, %v245
    %v706 = vunpack.c.l.s4 1983009808
    %v707 = vunpack.c.0.s8 %v706
    %v708 = vlaneseq
    %v709 = vshrl.u32 %v708, 7
    %v710 = vsub.s32 %v707, %v709
    %v711 = vrot.slane %v703, %v710
    %v713 = vunpack.c.l.s4 1983009808
    %v714 = vunpack.c.0.s8 %v713
    %v715 = vlaneseq
    %v716 = vshrl.u32 %v715, 7
    %v717 = vsub.s32 %v714, %v716
    %v718 = vrot.slane %v704, %v717
    %v719 = vcombine.high %v309, 0.0
    %v721 = vunpack.c.l.s4 1983009808
    %v722 = vunpack.c.0.s8 %v721
    %v723 = vlaneseq
    %v724 = vshrl.u32 %v723, 7
    %v725 = vsub.s32 %v722, %v724
    %v726 = vrot.slane %v309, %v725
    %v728 = vunpack.c.l.s4 1983009808
    %v729 = vunpack.c.0.s8 %v728
    %v730 = vlaneseq
    %v731 = vshrl.u32 %v730, 7
    %v732 = vsub.s32 %v729, %v731
    %v733 = vrot.slane %v719, %v732
    %v734 = vcombine.high %v373, 0.0
    %v736 = vunpack.c.l.s4 1983009808
    %v737 = vunpack.c.0.s8 %v736
    %v738 = vlaneseq
    %v739 = vshrl.u32 %v738, 7
    %v740 = vsub.s32 %v737, %v739
    %v741 = vrot.slane %v373, %v740
    %v743 = vunpack.c.l.s4 1983009808
    %v744 = vunpack.c.0.s8 %v743
    %v745 = vlaneseq
    %v746 = vshrl.u32 %v745, 7
    %v747 = vsub.s32 %v744, %v746
    %v748 = vrot.slane %v734, %v747
    %v749 = vcombine.low %v695, %v711
    %v750 = vcombine.high %v695, %v711
    %v752 = vunpack.c.l.s4 1934713408
    %v753 = vunpack.c.0.s8 %v752
    %v754 = vlaneseq
    %v755 = vshrl.u32 %v754, 7
    %v756 = vsub.s32 %v753, %v755
    %v757 = vrot.slane %v749, %v756
    %v759 = vunpack.c.l.s4 1934713408
    %v760 = vunpack.c.0.s8 %v759
    %v761 = vlaneseq
    %v762 = vshrl.u32 %v761, 7
    %v763 = vsub.s32 %v760, %v762
    %v764 = vrot.slane %v750, %v763
    %v765 = vcombine.low %v702, %v718
    %v766 = vcombine.high %v702, %v718
    %v768 = vunpack.c.l.s4 1934713408
    %v769 = vunpack.c.0.s8 %v768
    %v770 = vlaneseq
    %v771 = vshrl.u32 %v770, 7
    %v772 = vsub.s32 %v769, %v771
    %v773 = vrot.slane %v765, %v772
    %v775 = vunpack.c.l.s4 1934713408
    %v776 = vunpack.c.0.s8 %v775
    %v777 = vlaneseq
    %v778 = vshrl.u32 %v777, 7
    %v779 = vsub.s32 %v776, %v778
    %v780 = vrot.slane %v766, %v779
    %v781 = vcombine.low %v726, %v741
    %v782 = vcombine.high %v726, %v741
    %v784 = vunpack.c.l.s4 1934713408
    %v785 = vunpack.c.0.s8 %v784
    %v786 = vlaneseq
    %v787 = vshrl.u32 %v786, 7
    %v788 = vsub.s32 %v785, %v787
    %v789 = vrot.slane %v781, %v788
    %v791 = vunpack.c.l.s4 1934713408
    %v792 = vunpack.c.0.s8 %v791
    %v793 = vlaneseq
    %v794 = vshrl.u32 %v793, 7
    %v795 = vsub.s32 %v792, %v794
    %v796 = vrot.slane %v782, %v795
    %v797 = vcombine.low %v733, %v748
    %v798 = vcombine.high %v733, %v748
    %v800 = vunpack.c.l.s4 1934713408
    %v801 = vunpack.c.0.s8 %v800
    %v802 = vlaneseq
    %v803 = vshrl.u32 %v802, 7
    %v804 = vsub.s32 %v801, %v803
    %v805 = vrot.slane %v797, %v804
    %v807 = vunpack.c.l.s4 1934713408
    %v808 = vunpack.c.0.s8 %v807
    %v809 = vlaneseq
    %v810 = vshrl.u32 %v809, 7
    %v811 = vsub.s32 %v808, %v810
    %v812 = vrot.slane %v798, %v811
    %v813 = vcombine.low %v757, %v789
    %v814 = vcombine.high %v757, %v789
    %v815 = vcombine.low %v764, %v796
    %v816 = vcombine.high %v764, %v796
    %v817 = vcombine.low %v773, %v805
    %v818 = vcombine.high %v773, %v805
    %v819 = vcombine.low %v780, %v812
    %v820 = vcombine.high %v780, %v812
    %v821 = vcombine.low %v54, %v182
    %v822 = vcombine.high %v54, %v182
    %v824 = vunpack.c.l.s4 1983009808
    %v825 = vunpack.c.0.s8 %v824
    %v826 = vlaneseq
    %v827 = vshrl.u32 %v826, 7
    %v828 = vsub.s32 %v825, %v827
    %v829 = vrot.slane %v821, %v828
    %v831 = vunpack.c.l.s4 1983009808
    %v832 = vunpack.c.0.s8 %v831
    %v833 = vlaneseq
    %v834 = vshrl.u32 %v833, 7
    %v835 = vsub.s32 %v832, %v834
    %v836 = vrot.slane %v822, %v835
    %v837 = vcombine.low %v118, %v246
    %v838 = vcombine.high %v118, %v246
    %v840 = vunpack.c.l.s4 1983009808
    %v841 = vunpack.c.0.s8 %v840
    %v842 = vlaneseq
    %v843 = vshrl.u32 %v842, 7
    %v844 = vsub.s32 %v841, %v843
    %v845 = vrot.slane %v837, %v844
    %v847 = vunpack.c.l.s4 1983009808
    %v848 = vunpack.c.0.s8 %v847
    %v849 = vlaneseq
    %v850 = vshrl.u32 %v849, 7
    %v851 = vsub.s32 %v848, %v850
    %v852 = vrot.slane %v838, %v851
    %v853 = vcombine.high %v310, 0.0
    %v855 = vunpack.c.l.s4 1983009808
    %v856 = vunpack.c.0.s8 %v855
    %v857 = vlaneseq
    %v858 = vshrl.u32 %v857, 7
    %v859 = vsub.s32 %v856, %v858
    %v860 = vrot.slane %v310, %v859
    %v862 = vunpack.c.l.s4 1983009808
    %v863 = vunpack.c.0.s8 %v862
    %v864 = vlaneseq
    %v865 = vshrl.u32 %v864, 7
    %v866 = vsub.s32 %v863, %v865
    %v867 = vrot.slane %v853, %v866
    %v868 = vcombine.high %v374, 0.0
    %v870 = vunpack.c.l.s4 1983009808
    %v871 = vunpack.c.0.s8 %v870
    %v872 = vlaneseq
    %v873 = vshrl.u32 %v872, 7
    %v874 = vsub.s32 %v871, %v873
    %v875 = vrot.slane %v374, %v874
    %v877 = vunpack.c.l.s4 1983009808
    %v878 = vunpack.c.0.s8 %v877
    %v879 = vlaneseq
    %v880 = vshrl.u32 %v879, 7
    %v881 = vsub.s32 %v878, %v880
    %v882 = vrot.slane %v868, %v881
    %v883 = vcombine.low %v829, %v845
    %v884 = vcombine.high %v829, %v845
    %v886 = vunpack.c.l.s4 1934713408
    %v887 = vunpack.c.0.s8 %v886
    %v888 = vlaneseq
    %v889 = vshrl.u32 %v888, 7
    %v890 = vsub.s32 %v887, %v889
    %v891 = vrot.slane %v883, %v890
    %v893 = vunpack.c.l.s4 1934713408
    %v894 = vunpack.c.0.s8 %v893
    %v895 = vlaneseq
    %v896 = vshrl.u32 %v895, 7
    %v897 = vsub.s32 %v894, %v896
    %v898 = vrot.slane %v884, %v897
    %v899 = vcombine.low %v836, %v852
    %v900 = vcombine.high %v836, %v852
    %v902 = vunpack.c.l.s4 1934713408
    %v903 = vunpack.c.0.s8 %v902
    %v904 = vlaneseq
    %v905 = vshrl.u32 %v904, 7
    %v906 = vsub.s32 %v903, %v905
    %v907 = vrot.slane %v899, %v906
    %v909 = vunpack.c.l.s4 1934713408
    %v910 = vunpack.c.0.s8 %v909
    %v911 = vlaneseq
    %v912 = vshrl.u32 %v911, 7
    %v913 = vsub.s32 %v910, %v912
    %v914 = vrot.slane %v900, %v913
    %v915 = vcombine.low %v860, %v875
    %v916 = vcombine.high %v860, %v875
    %v918 = vunpack.c.l.s4 1934713408
    %v919 = vunpack.c.0.s8 %v918
    %v920 = vlaneseq
    %v921 = vshrl.u32 %v920, 7
    %v922 = vsub.s32 %v919, %v921
    %v923 = vrot.slane %v915, %v922
    %v925 = vunpack.c.l.s4 1934713408
    %v926 = vunpack.c.0.s8 %v925
    %v927 = vlaneseq
    %v928 = vshrl.u32 %v927, 7
    %v929 = vsub.s32 %v926, %v928
    %v930 = vrot.slane %v916, %v929
    %v931 = vcombine.low %v867, %v882
    %v932 = vcombine.high %v867, %v882
    %v934 = vunpack.c.l.s4 1934713408
    %v935 = vunpack.c.0.s8 %v934
    %v936 = vlaneseq
    %v937 = vshrl.u32 %v936, 7
    %v938 = vsub.s32 %v935, %v937
    %v939 = vrot.slane %v931, %v938
    %v941 = vunpack.c.l.s4 1934713408
    %v942 = vunpack.c.0.s8 %v941
    %v943 = vlaneseq
    %v944 = vshrl.u32 %v943, 7
    %v945 = vsub.s32 %v942, %v944
    %v946 = vrot.slane %v932, %v945
    %v947 = vcombine.low %v891, %v923
    %v948 = vcombine.high %v891, %v923
    %v949 = vcombine.low %v898, %v930
    %v950 = vcombine.high %v898, %v930
    %v951 = vcombine.low %v907, %v939
    %v952 = vcombine.high %v907, %v939
    %v953 = vcombine.low %v914, %v946
    %v954 = vcombine.high %v914, %v946
    %v955 = vcombine.low %v55, %v183
    %v956 = vcombine.high %v55, %v183
    %v958 = vunpack.c.l.s4 1983009808
    %v959 = vunpack.c.0.s8 %v958
    %v960 = vlaneseq
    %v961 = vshrl.u32 %v960, 7
    %v962 = vsub.s32 %v959, %v961
    %v963 = vrot.slane %v955, %v962
    %v965 = vunpack.c.l.s4 1983009808
    %v966 = vunpack.c.0.s8 %v965
    %v967 = vlaneseq
    %v968 = vshrl.u32 %v967, 7
    %v969 = vsub.s32 %v966, %v968
    %v970 = vrot.slane %v956, %v969
    %v971 = vcombine.low %v119, %v247
    %v972 = vcombine.high %v119, %v247
    %v974 = vunpack.c.l.s4 1983009808
    %v975 = vunpack.c.0.s8 %v974
    %v976 = vlaneseq
    %v977 = vshrl.u32 %v976, 7
    %v978 = vsub.s32 %v975, %v977
    %v979 = vrot.slane %v971, %v978
    %v981 = vunpack.c.l.s4 1983009808
    %v982 = vunpack.c.0.s8 %v981
    %v983 = vlaneseq
    %v984 = vshrl.u32 %v983, 7
    %v985 = vsub.s32 %v982, %v984
    %v986 = vrot.slane %v972, %v985
    %v987 = vcombine.high %v311, 0.0
    %v989 = vunpack.c.l.s4 1983009808
    %v990 = vunpack.c.0.s8 %v989
    %v991 = vlaneseq
    %v992 = vshrl.u32 %v991, 7
    %v993 = vsub.s32 %v990, %v992
    %v994 = vrot.slane %v311, %v993
    %v996 = vunpack.c.l.s4 1983009808
    %v997 = vunpack.c.0.s8 %v996
    %v998 = vlaneseq
    %v999 = vshrl.u32 %v998, 7
    %v1000 = vsub.s32 %v997, %v999
    %v1001 = vrot.slane %v987, %v1000
    %v1002 = vcombine.high %v375, 0.0
    %v1004 = vunpack.c.l.s4 1983009808
    %v1005 = vunpack.c.0.s8 %v1004
    %v1006 = vlaneseq
    %v1007 = vshrl.u32 %v1006, 7
    %v1008 = vsub.s32 %v1005, %v1007
    %v1009 = vrot.slane %v375, %v1008
    %v1011 = vunpack.c.l.s4 1983009808
    %v1012 = vunpack.c.0.s8 %v1011
    %v1013 = vlaneseq
    %v1014 = vshrl.u32 %v1013, 7
    %v1015 = vsub.s32 %v1012, %v1014
    %v1016 = vrot.slane %v1002, %v1015
    %v1017 = vcombine.low %v963, %v979
    %v1018 = vcombine.high %v963, %v979
    %v1020 = vunpack.c.l.s4 1934713408
    %v1021 = vunpack.c.0.s8 %v1020
    %v1022 = vlaneseq
    %v1023 = vshrl.u32 %v1022, 7
    %v1024 = vsub.s32 %v1021, %v1023
    %v1025 = vrot.slane %v1017, %v1024
    %v1027 = vunpack.c.l.s4 1934713408
    %v1028 = vunpack.c.0.s8 %v1027
    %v1029 = vlaneseq
    %v1030 = vshrl.u32 %v1029, 7
    %v1031 = vsub.s32 %v1028, %v1030
    %v1032 = vrot.slane %v1018, %v1031
    %v1033 = vcombine.low %v970, %v986
    %v1034 = vcombine.high %v970, %v986
    %v1036 = vunpack.c.l.s4 1934713408
    %v1037 = vunpack.c.0.s8 %v1036
    %v1038 = vlaneseq
    %v1039 = vshrl.u32 %v1038, 7
    %v1040 = vsub.s32 %v1037, %v1039
    %v1041 = vrot.slane %v1033, %v1040
    %v1043 = vunpack.c.l.s4 1934713408
    %v1044 = vunpack.c.0.s8 %v1043
    %v1045 = vlaneseq
    %v1046 = vshrl.u32 %v1045, 7
    %v1047 = vsub.s32 %v1044, %v1046
    %v1048 = vrot.slane %v1034, %v1047
    %v1049 = vcombine.low %v994, %v1009
    %v1050 = vcombine.high %v994, %v1009
    %v1052 = vunpack.c.l.s4 1934713408
    %v1053 = vunpack.c.0.s8 %v1052
    %v1054 = vlaneseq
    %v1055 = vshrl.u32 %v1054, 7
    %v1056 = vsub.s32 %v1053, %v1055
    %v1057 = vrot.slane %v1049, %v1056
    %v1059 = vunpack.c.l.s4 1934713408
    %v1060 = vunpack.c.0.s8 %v1059
    %v1061 = vlaneseq
    %v1062 = vshrl.u32 %v1061, 7
    %v1063 = vsub.s32 %v1060, %v1062
    %v1064 = vrot.slane %v1050, %v1063
    %v1065 = vcombine.low %v1001, %v1016
    %v1066 = vcombine.high %v1001, %v1016
    %v1068 = vunpack.c.l.s4 1934713408
    %v1069 = vunpack.c.0.s8 %v1068
    %v1070 = vlaneseq
    %v1071 = vshrl.u32 %v1070, 7
    %v1072 = vsub.s32 %v1069, %v1071
    %v1073 = vrot.slane %v1065, %v1072
    %v1075 = vunpack.c.l.s4 1934713408
    %v1076 = vunpack.c.0.s8 %v1075
    %v1077 = vlaneseq
    %v1078 = vshrl.u32 %v1077, 7
    %v1079 = vsub.s32 %v1076, %v1078
    %v1080 = vrot.slane %v1066, %v1079
    %v1081 = vcombine.low %v1025, %v1057
    %v1082 = vcombine.high %v1025, %v1057
    %v1083 = vcombine.low %v1032, %v1064
    %v1084 = vcombine.high %v1032, %v1064
    %v1085 = vcombine.low %v1041, %v1073
    %v1086 = vcombine.high %v1041, %v1073
    %v1087 = vcombine.low %v1048, %v1080
    %v1088 = vcombine.high %v1048, %v1080
    %v1089 = vcombine.low %v56, %v184
    %v1090 = vcombine.high %v56, %v184
    %v1092 = vunpack.c.l.s4 1983009808
    %v1093 = vunpack.c.0.s8 %v1092
    %v1094 = vlaneseq
    %v1095 = vshrl.u32 %v1094, 7
    %v1096 = vsub.s32 %v1093, %v1095
    %v1097 = vrot.slane %v1089, %v1096
    %v1099 = vunpack.c.l.s4 1983009808
    %v1100 = vunpack.c.0.s8 %v1099
    %v1101 = vlaneseq
    %v1102 = vshrl.u32 %v1101, 7
    %v1103 = vsub.s32 %v1100, %v1102
    %v1104 = vrot.slane %v1090, %v1103
    %v1105 = vcombine.low %v120, %v248
    %v1106 = vcombine.high %v120, %v248
    %v1108 = vunpack.c.l.s4 1983009808
    %v1109 = vunpack.c.0.s8 %v1108
    %v1110 = vlaneseq
    %v1111 = vshrl.u32 %v1110, 7
    %v1112 = vsub.s32 %v1109, %v1111
    %v1113 = vrot.slane %v1105, %v1112
    %v1115 = vunpack.c.l.s4 1983009808
    %v1116 = vunpack.c.0.s8 %v1115
    %v1117 = vlaneseq
    %v1118 = vshrl.u32 %v1117, 7
    %v1119 = vsub.s32 %v1116, %v1118
    %v1120 = vrot.slane %v1106, %v1119
    %v1121 = vcombine.high %v312, 0.0
    %v1123 = vunpack.c.l.s4 1983009808
    %v1124 = vunpack.c.0.s8 %v1123
    %v1125 = vlaneseq
    %v1126 = vshrl.u32 %v1125, 7
    %v1127 = vsub.s32 %v1124, %v1126
    %v1128 = vrot.slane %v312, %v1127
    %v1130 = vunpack.c.l.s4 1983009808
    %v1131 = vunpack.c.0.s8 %v1130
    %v1132 = vlaneseq
    %v1133 = vshrl.u32 %v1132, 7
    %v1134 = vsub.s32 %v1131, %v1133
    %v1135 = vrot.slane %v1121, %v1134
    %v1136 = vcombine.high %v376, 0.0
    %v1138 = vunpack.c.l.s4 1983009808
    %v1139 = vunpack.c.0.s8 %v1138
    %v1140 = vlaneseq
    %v1141 = vshrl.u32 %v1140, 7
    %v1142 = vsub.s32 %v1139, %v1141
    %v1143 = vrot.slane %v376, %v1142
    %v1145 = vunpack.c.l.s4 1983009808
    %v1146 = vunpack.c.0.s8 %v1145
    %v1147 = vlaneseq
    %v1148 = vshrl.u32 %v1147, 7
    %v1149 = vsub.s32 %v1146, %v1148
    %v1150 = vrot.slane %v1136, %v1149
    %v1151 = vcombine.low %v1097, %v1113
    %v1152 = vcombine.high %v1097, %v1113
    %v1154 = vunpack.c.l.s4 1934713408
    %v1155 = vunpack.c.0.s8 %v1154
    %v1156 = vlaneseq
    %v1157 = vshrl.u32 %v1156, 7
    %v1158 = vsub.s32 %v1155, %v1157
    %v1159 = vrot.slane %v1151, %v1158
    %v1161 = vunpack.c.l.s4 1934713408
    %v1162 = vunpack.c.0.s8 %v1161
    %v1163 = vlaneseq
    %v1164 = vshrl.u32 %v1163, 7
    %v1165 = vsub.s32 %v1162, %v1164
    %v1166 = vrot.slane %v1152, %v1165
    %v1167 = vcombine.low %v1104, %v1120
    %v1168 = vcombine.high %v1104, %v1120
    %v1170 = vunpack.c.l.s4 1934713408
    %v1171 = vunpack.c.0.s8 %v1170
    %v1172 = vlaneseq
    %v1173 = vshrl.u32 %v1172, 7
    %v1174 = vsub.s32 %v1171, %v1173
    %v1175 = vrot.slane %v1167, %v1174
    %v1177 = vunpack.c.l.s4 1934713408
    %v1178 = vunpack.c.0.s8 %v1177
    %v1179 = vlaneseq
    %v1180 = vshrl.u32 %v1179, 7
    %v1181 = vsub.s32 %v1178, %v1180
    %v1182 = vrot.slane %v1168, %v1181
    %v1183 = vcombine.low %v1128, %v1143
    %v1184 = vcombine.high %v1128, %v1143
    %v1186 = vunpack.c.l.s4 1934713408
    %v1187 = vunpack.c.0.s8 %v1186
    %v1188 = vlaneseq
    %v1189 = vshrl.u32 %v1188, 7
    %v1190 = vsub.s32 %v1187, %v1189
    %v1191 = vrot.slane %v1183, %v1190
    %v1193 = vunpack.c.l.s4 1934713408
    %v1194 = vunpack.c.0.s8 %v1193
    %v1195 = vlaneseq
    %v1196 = vshrl.u32 %v1195, 7
    %v1197 = vsub.s32 %v1194, %v1196
    %v1198 = vrot.slane %v1184, %v1197
    %v1199 = vcombine.low %v1135, %v1150
    %v1200 = vcombine.high %v1135, %v1150
    %v1202 = vunpack.c.l.s4 1934713408
    %v1203 = vunpack.c.0.s8 %v1202
    %v1204 = vlaneseq
    %v1205 = vshrl.u32 %v1204, 7
    %v1206 = vsub.s32 %v1203, %v1205
    %v1207 = vrot.slane %v1199, %v1206
    %v1209 = vunpack.c.l.s4 1934713408
    %v1210 = vunpack.c.0.s8 %v1209
    %v1211 = vlaneseq
    %v1212 = vshrl.u32 %v1211, 7
    %v1213 = vsub.s32 %v1210, %v1212
    %v1214 = vrot.slane %v1200, %v1213
    %v1215 = vcombine.low %v1159, %v1191
    %v1216 = vcombine.high %v1159, %v1191
    %v1217 = vcombine.low %v1166, %v1198
    %v1218 = vcombine.high %v1166, %v1198
    %v1219 = vcombine.low %v1175, %v1207
    %v1220 = vcombine.high %v1175, %v1207
    %v1221 = vcombine.low %v1182, %v1214
    %v1222 = vcombine.high %v1182, %v1214
    %v1223 = vcombine.low %v57, %v185
    %v1224 = vcombine.high %v57, %v185
    %v1226 = vunpack.c.l.s4 1983009808
    %v1227 = vunpack.c.0.s8 %v1226
    %v1228 = vlaneseq
    %v1229 = vshrl.u32 %v1228, 7
    %v1230 = vsub.s32 %v1227, %v1229
    %v1231 = vrot.slane %v1223, %v1230
    %v1233 = vunpack.c.l.s4 1983009808
    %v1234 = vunpack.c.0.s8 %v1233
    %v1235 = vlaneseq
    %v1236 = vshrl.u32 %v1235, 7
    %v1237 = vsub.s32 %v1234, %v1236
    %v1238 = vrot.slane %v1224, %v1237
    %v1239 = vcombine.low %v121, %v249
    %v1240 = vcombine.high %v121, %v249
    %v1242 = vunpack.c.l.s4 1983009808
    %v1243 = vunpack.c.0.s8 %v1242
    %v1244 = vlaneseq
    %v1245 = vshrl.u32 %v1244, 7
    %v1246 = vsub.s32 %v1243, %v1245
    %v1247 = vrot.slane %v1239, %v1246
    %v1249 = vunpack.c.l.s4 1983009808
    %v1250 = vunpack.c.0.s8 %v1249
    %v1251 = vlaneseq
    %v1252 = vshrl.u32 %v1251, 7
    %v1253 = vsub.s32 %v1250, %v1252
    %v1254 = vrot.slane %v1240, %v1253
    %v1255 = vcombine.high %v313, 0.0
    %v1257 = vunpack.c.l.s4 1983009808
    %v1258 = vunpack.c.0.s8 %v1257
    %v1259 = vlaneseq
    %v1260 = vshrl.u32 %v1259, 7
    %v1261 = vsub.s32 %v1258, %v1260
    %v1262 = vrot.slane %v313, %v1261
    %v1264 = vunpack.c.l.s4 1983009808
    %v1265 = vunpack.c.0.s8 %v1264
    %v1266 = vlaneseq
    %v1267 = vshrl.u32 %v1266, 7
    %v1268 = vsub.s32 %v1265, %v1267
    %v1269 = vrot.slane %v1255, %v1268
    %v1270 = vcombine.high %v377, 0.0
    %v1272 = vunpack.c.l.s4 1983009808
    %v1273 = vunpack.c.0.s8 %v1272
    %v1274 = vlaneseq
    %v1275 = vshrl.u32 %v1274, 7
    %v1276 = vsub.s32 %v1273, %v1275
    %v1277 = vrot.slane %v377, %v1276
    %v1279 = vunpack.c.l.s4 1983009808
    %v1280 = vunpack.c.0.s8 %v1279
    %v1281 = vlaneseq
    %v1282 = vshrl.u32 %v1281, 7
    %v1283 = vsub.s32 %v1280, %v1282
    %v1284 = vrot.slane %v1270, %v1283
    %v1285 = vcombine.low %v1231, %v1247
    %v1286 = vcombine.high %v1231, %v1247
    %v1288 = vunpack.c.l.s4 1934713408
    %v1289 = vunpack.c.0.s8 %v1288
    %v1290 = vlaneseq
    %v1291 = vshrl.u32 %v1290, 7
    %v1292 = vsub.s32 %v1289, %v1291
    %v1293 = vrot.slane %v1285, %v1292
    %v1295 = vunpack.c.l.s4 1934713408
    %v1296 = vunpack.c.0.s8 %v1295
    %v1297 = vlaneseq
    %v1298 = vshrl.u32 %v1297, 7
    %v1299 = vsub.s32 %v1296, %v1298
    %v1300 = vrot.slane %v1286, %v1299
    %v1301 = vcombine.low %v1238, %v1254
    %v1302 = vcombine.high %v1238, %v1254
    %v1304 = vunpack.c.l.s4 1934713408
    %v1305 = vunpack.c.0.s8 %v1304
    %v1306 = vlaneseq
    %v1307 = vshrl.u32 %v1306, 7
    %v1308 = vsub.s32 %v1305, %v1307
    %v1309 = vrot.slane %v1301, %v1308
    %v1311 = vunpack.c.l.s4 1934713408
    %v1312 = vunpack.c.0.s8 %v1311
    %v1313 = vlaneseq
    %v1314 = vshrl.u32 %v1313, 7
    %v1315 = vsub.s32 %v1312, %v1314
    %v1316 = vrot.slane %v1302, %v1315
    %v1317 = vcombine.low %v1262, %v1277
    %v1318 = vcombine.high %v1262, %v1277
    %v1320 = vunpack.c.l.s4 1934713408
    %v1321 = vunpack.c.0.s8 %v1320
    %v1322 = vlaneseq
    %v1323 = vshrl.u32 %v1322, 7
    %v1324 = vsub.s32 %v1321, %v1323
    %v1325 = vrot.slane %v1317, %v1324
    %v1327 = vunpack.c.l.s4 1934713408
    %v1328 = vunpack.c.0.s8 %v1327
    %v1329 = vlaneseq
    %v1330 = vshrl.u32 %v1329, 7
    %v1331 = vsub.s32 %v1328, %v1330
    %v1332 = vrot.slane %v1318, %v1331
    %v1333 = vcombine.low %v1269, %v1284
    %v1334 = vcombine.high %v1269, %v1284
    %v1336 = vunpack.c.l.s4 1934713408
    %v1337 = vunpack.c.0.s8 %v1336
    %v1338 = vlaneseq
    %v1339 = vshrl.u32 %v1338, 7
    %v1340 = vsub.s32 %v1337, %v1339
    %v1341 = vrot.slane %v1333, %v1340
    %v1343 = vunpack.c.l.s4 1934713408
    %v1344 = vunpack.c.0.s8 %v1343
    %v1345 = vlaneseq
    %v1346 = vshrl.u32 %v1345, 7
    %v1347 = vsub.s32 %v1344, %v1346
    %v1348 = vrot.slane %v1334, %v1347
    %v1349 = vcombine.low %v1293, %v1325
    %v1350 = vcombine.high %v1293, %v1325
    %v1351 = vcombine.low %v1300, %v1332
    %v1352 = vcombine.high %v1300, %v1332
    %v1353 = vcombine.low %v1309, %v1341
    %v1354 = vcombine.high %v1309, %v1341
    %v1355 = vcombine.low %v1316, %v1348
    %v1356 = vcombine.high %v1316, %v1348
    %v1357 = vcombine.low %v58, %v186
    %v1358 = vcombine.high %v58, %v186
    %v1360 = vunpack.c.l.s4 1983009808
    %v1361 = vunpack.c.0.s8 %v1360
    %v1362 = vlaneseq
    %v1363 = vshrl.u32 %v1362, 7
    %v1364 = vsub.s32 %v1361, %v1363
    %v1365 = vrot.slane %v1357, %v1364
    %v1367 = vunpack.c.l.s4 1983009808
    %v1368 = vunpack.c.0.s8 %v1367
    %v1369 = vlaneseq
    %v1370 = vshrl.u32 %v1369, 7
    %v1371 = vsub.s32 %v1368, %v1370
    %v1372 = vrot.slane %v1358, %v1371
    %v1373 = vcombine.low %v122, %v250
    %v1374 = vcombine.high %v122, %v250
    %v1376 = vunpack.c.l.s4 1983009808
    %v1377 = vunpack.c.0.s8 %v1376
    %v1378 = vlaneseq
    %v1379 = vshrl.u32 %v1378, 7
    %v1380 = vsub.s32 %v1377, %v1379
    %v1381 = vrot.slane %v1373, %v1380
    %v1383 = vunpack.c.l.s4 1983009808
    %v1384 = vunpack.c.0.s8 %v1383
    %v1385 = vlaneseq
    %v1386 = vshrl.u32 %v1385, 7
    %v1387 = vsub.s32 %v1384, %v1386
    %v1388 = vrot.slane %v1374, %v1387
    %v1389 = vcombine.high %v314, 0.0
    %v1391 = vunpack.c.l.s4 1983009808
    %v1392 = vunpack.c.0.s8 %v1391
    %v1393 = vlaneseq
    %v1394 = vshrl.u32 %v1393, 7
    %v1395 = vsub.s32 %v1392, %v1394
    %v1396 = vrot.slane %v314, %v1395
    %v1398 = vunpack.c.l.s4 1983009808
    %v1399 = vunpack.c.0.s8 %v1398
    %v1400 = vlaneseq
    %v1401 = vshrl.u32 %v1400, 7
    %v1402 = vsub.s32 %v1399, %v1401
    %v1403 = vrot.slane %v1389, %v1402
    %v1404 = vcombine.high %v378, 0.0
    %v1406 = vunpack.c.l.s4 1983009808
    %v1407 = vunpack.c.0.s8 %v1406
    %v1408 = vlaneseq
    %v1409 = vshrl.u32 %v1408, 7
    %v1410 = vsub.s32 %v1407, %v1409
    %v1411 = vrot.slane %v378, %v1410
    %v1413 = vunpack.c.l.s4 1983009808
    %v1414 = vunpack.c.0.s8 %v1413
    %v1415 = vlaneseq
    %v1416 = vshrl.u32 %v1415, 7
    %v1417 = vsub.s32 %v1414, %v1416
    %v1418 = vrot.slane %v1404, %v1417
    %v1419 = vcombine.low %v1365, %v1381
    %v1420 = vcombine.high %v1365, %v1381
    %v1422 = vunpack.c.l.s4 1934713408
    %v1423 = vunpack.c.0.s8 %v1422
    %v1424 = vlaneseq
    %v1425 = vshrl.u32 %v1424, 7
    %v1426 = vsub.s32 %v1423, %v1425
    %v1427 = vrot.slane %v1419, %v1426
    %v1429 = vunpack.c.l.s4 1934713408
    %v1430 = vunpack.c.0.s8 %v1429
    %v1431 = vlaneseq
    %v1432 = vshrl.u32 %v1431, 7
    %v1433 = vsub.s32 %v1430, %v1432
    %v1434 = vrot.slane %v1420, %v1433
    %v1435 = vcombine.low %v1372, %v1388
    %v1436 = vcombine.high %v1372, %v1388
    %v1438 = vunpack.c.l.s4 1934713408
    %v1439 = vunpack.c.0.s8 %v1438
    %v1440 = vlaneseq
    %v1441 = vshrl.u32 %v1440, 7
    %v1442 = vsub.s32 %v1439, %v1441
    %v1443 = vrot.slane %v1435, %v1442
    %v1445 = vunpack.c.l.s4 1934713408
    %v1446 = vunpack.c.0.s8 %v1445
    %v1447 = vlaneseq
    %v1448 = vshrl.u32 %v1447, 7
    %v1449 = vsub.s32 %v1446, %v1448
    %v1450 = vrot.slane %v1436, %v1449
    %v1451 = vcombine.low %v1396, %v1411
    %v1452 = vcombine.high %v1396, %v1411
    %v1454 = vunpack.c.l.s4 1934713408
    %v1455 = vunpack.c.0.s8 %v1454
    %v1456 = vlaneseq
    %v1457 = vshrl.u32 %v1456, 7
    %v1458 = vsub.s32 %v1455, %v1457
    %v1459 = vrot.slane %v1451, %v1458
    %v1461 = vunpack.c.l.s4 1934713408
    %v1462 = vunpack.c.0.s8 %v1461
    %v1463 = vlaneseq
    %v1464 = vshrl.u32 %v1463, 7
    %v1465 = vsub.s32 %v1462, %v1464
    %v1466 = vrot.slane %v1452, %v1465
    %v1467 = vcombine.low %v1403, %v1418
    %v1468 = vcombine.high %v1403, %v1418
    %v1470 = vunpack.c.l.s4 1934713408
    %v1471 = vunpack.c.0.s8 %v1470
    %v1472 = vlaneseq
    %v1473 = vshrl.u32 %v1472, 7
    %v1474 = vsub.s32 %v1471, %v1473
    %v1475 = vrot.slane %v1467, %v1474
    %v1477 = vunpack.c.l.s4 1934713408
    %v1478 = vunpack.c.0.s8 %v1477
    %v1479 = vlaneseq
    %v1480 = vshrl.u32 %v1479, 7
    %v1481 = vsub.s32 %v1478, %v1480
    %v1482 = vrot.slane %v1468, %v1481
    %v1483 = vcombine.low %v1427, %v1459
    %v1484 = vcombine.high %v1427, %v1459
    %v1485 = vcombine.low %v1434, %v1466
    %v1486 = vcombine.high %v1434, %v1466
    %v1487 = vcombine.low %v1443, %v1475
    %v1488 = vcombine.high %v1443, %v1475
    %v1489 = vcombine.low %v1450, %v1482
    %v1490 = vcombine.high %v1450, %v1482
    %v1491 = vcombine.low %v59, %v187
    %v1492 = vcombine.high %v59, %v187
    %v1494 = vunpack.c.l.s4 1983009808
    %v1495 = vunpack.c.0.s8 %v1494
    %v1496 = vlaneseq
    %v1497 = vshrl.u32 %v1496, 7
    %v1498 = vsub.s32 %v1495, %v1497
    %v1499 = vrot.slane %v1491, %v1498
    %v1501 = vunpack.c.l.s4 1983009808
    %v1502 = vunpack.c.0.s8 %v1501
    %v1503 = vlaneseq
    %v1504 = vshrl.u32 %v1503, 7
    %v1505 = vsub.s32 %v1502, %v1504
    %v1506 = vrot.slane %v1492, %v1505
    %v1507 = vcombine.low %v123, %v251
    %v1508 = vcombine.high %v123, %v251
    %v1510 = vunpack.c.l.s4 1983009808
    %v1511 = vunpack.c.0.s8 %v1510
    %v1512 = vlaneseq
    %v1513 = vshrl.u32 %v1512, 7
    %v1514 = vsub.s32 %v1511, %v1513
    %v1515 = vrot.slane %v1507, %v1514
    %v1517 = vunpack.c.l.s4 1983009808
    %v1518 = vunpack.c.0.s8 %v1517
    %v1519 = vlaneseq
    %v1520 = vshrl.u32 %v1519, 7
    %v1521 = vsub.s32 %v1518, %v1520
    %v1522 = vrot.slane %v1508, %v1521
    %v1523 = vcombine.high %v315, 0.0
    %v1525 = vunpack.c.l.s4 1983009808
    %v1526 = vunpack.c.0.s8 %v1525
    %v1527 = vlaneseq
    %v1528 = vshrl.u32 %v1527, 7
    %v1529 = vsub.s32 %v1526, %v1528
    %v1530 = vrot.slane %v315, %v1529
    %v1532 = vunpack.c.l.s4 1983009808
    %v1533 = vunpack.c.0.s8 %v1532
    %v1534 = vlaneseq
    %v1535 = vshrl.u32 %v1534, 7
    %v1536 = vsub.s32 %v1533, %v1535
    %v1537 = vrot.slane %v1523, %v1536
    %v1538 = vcombine.high %v379, 0.0
    %v1540 = vunpack.c.l.s4 1983009808
    %v1541 = vunpack.c.0.s8 %v1540
    %v1542 = vlaneseq
    %v1543 = vshrl.u32 %v1542, 7
    %v1544 = vsub.s32 %v1541, %v1543
    %v1545 = vrot.slane %v379, %v1544
    %v1547 = vunpack.c.l.s4 1983009808
    %v1548 = vunpack.c.0.s8 %v1547
    %v1549 = vlaneseq
    %v1550 = vshrl.u32 %v1549, 7
    %v1551 = vsub.s32 %v1548, %v1550
    %v1552 = vrot.slane %v1538, %v1551
    %v1553 = vcombine.low %v1499, %v1515
    %v1554 = vcombine.high %v1499, %v1515
    %v1556 = vunpack.c.l.s4 1934713408
    %v1557 = vunpack.c.0.s8 %v1556
    %v1558 = vlaneseq
    %v1559 = vshrl.u32 %v1558, 7
    %v1560 = vsub.s32 %v1557, %v1559
    %v1561 = vrot.slane %v1553, %v1560
    %v1563 = vunpack.c.l.s4 1934713408
    %v1564 = vunpack.c.0.s8 %v1563
    %v1565 = vlaneseq
    %v1566 = vshrl.u32 %v1565, 7
    %v1567 = vsub.s32 %v1564, %v1566
    %v1568 = vrot.slane %v1554, %v1567
    %v1569 = vcombine.low %v1506, %v1522
    %v1570 = vcombine.high %v1506, %v1522
    %v1572 = vunpack.c.l.s4 1934713408
    %v1573 = vunpack.c.0.s8 %v1572
    %v1574 = vlaneseq
    %v1575 = vshrl.u32 %v1574, 7
    %v1576 = vsub.s32 %v1573, %v1575
    %v1577 = vrot.slane %v1569, %v1576
    %v1579 = vunpack.c.l.s4 1934713408
    %v1580 = vunpack.c.0.s8 %v1579
    %v1581 = vlaneseq
    %v1582 = vshrl.u32 %v1581, 7
    %v1583 = vsub.s32 %v1580, %v1582
    %v1584 = vrot.slane %v1570, %v1583
    %v1585 = vcombine.low %v1530, %v1545
    %v1586 = vcombine.high %v1530, %v1545
    %v1588 = vunpack.c.l.s4 1934713408
    %v1589 = vunpack.c.0.s8 %v1588
    %v1590 = vlaneseq
    %v1591 = vshrl.u32 %v1590, 7
    %v1592 = vsub.s32 %v1589, %v1591
    %v1593 = vrot.slane %v1585, %v1592
    %v1595 = vunpack.c.l.s4 1934713408
    %v1596 = vunpack.c.0.s8 %v1595
    %v1597 = vlaneseq
    %v1598 = vshrl.u32 %v1597, 7
    %v1599 = vsub.s32 %v1596, %v1598
    %v1600 = vrot.slane %v1586, %v1599
    %v1601 = vcombine.low %v1537, %v1552
    %v1602 = vcombine.high %v1537, %v1552
    %v1604 = vunpack.c.l.s4 1934713408
    %v1605 = vunpack.c.0.s8 %v1604
    %v1606 = vlaneseq
    %v1607 = vshrl.u32 %v1606, 7
    %v1608 = vsub.s32 %v1605, %v1607
    %v1609 = vrot.slane %v1601, %v1608
    %v1611 = vunpack.c.l.s4 1934713408
    %v1612 = vunpack.c.0.s8 %v1611
    %v1613 = vlaneseq
    %v1614 = vshrl.u32 %v1613, 7
    %v1615 = vsub.s32 %v1612, %v1614
    %v1616 = vrot.slane %v1602, %v1615
    %v1617 = vcombine.low %v1561, %v1593
    %v1618 = vcombine.high %v1561, %v1593
    %v1619 = vcombine.low %v1568, %v1600
    %v1620 = vcombine.high %v1568, %v1600
    %v1621 = vcombine.low %v1577, %v1609
    %v1622 = vcombine.high %v1577, %v1609
    %v1623 = vcombine.low %v1584, %v1616
    %v1624 = vcombine.high %v1584, %v1616
    %v1625 = vcombine.low %v60, %v188
    %v1626 = vcombine.high %v60, %v188
    %v1628 = vunpack.c.l.s4 1983009808
    %v1629 = vunpack.c.0.s8 %v1628
    %v1630 = vlaneseq
    %v1631 = vshrl.u32 %v1630, 7
    %v1632 = vsub.s32 %v1629, %v1631
    %v1633 = vrot.slane %v1625, %v1632
    %v1635 = vunpack.c.l.s4 1983009808
    %v1636 = vunpack.c.0.s8 %v1635
    %v1637 = vlaneseq
    %v1638 = vshrl.u32 %v1637, 7
    %v1639 = vsub.s32 %v1636, %v1638
    %v1640 = vrot.slane %v1626, %v1639
    %v1641 = vcombine.low %v124, %v252
    %v1642 = vcombine.high %v124, %v252
    %v1644 = vunpack.c.l.s4 1983009808
    %v1645 = vunpack.c.0.s8 %v1644
    %v1646 = vlaneseq
    %v1647 = vshrl.u32 %v1646, 7
    %v1648 = vsub.s32 %v1645, %v1647
    %v1649 = vrot.slane %v1641, %v1648
    %v1651 = vunpack.c.l.s4 1983009808
    %v1652 = vunpack.c.0.s8 %v1651
    %v1653 = vlaneseq
    %v1654 = vshrl.u32 %v1653, 7
    %v1655 = vsub.s32 %v1652, %v1654
    %v1656 = vrot.slane %v1642, %v1655
    %v1657 = vcombine.high %v316, 0.0
    %v1659 = vunpack.c.l.s4 1983009808
    %v1660 = vunpack.c.0.s8 %v1659
    %v1661 = vlaneseq
    %v1662 = vshrl.u32 %v1661, 7
    %v1663 = vsub.s32 %v1660, %v1662
    %v1664 = vrot.slane %v316, %v1663
    %v1666 = vunpack.c.l.s4 1983009808
    %v1667 = vunpack.c.0.s8 %v1666
    %v1668 = vlaneseq
    %v1669 = vshrl.u32 %v1668, 7
    %v1670 = vsub.s32 %v1667, %v1669
    %v1671 = vrot.slane %v1657, %v1670
    %v1672 = vcombine.high %v380, 0.0
    %v1674 = vunpack.c.l.s4 1983009808
    %v1675 = vunpack.c.0.s8 %v1674
    %v1676 = vlaneseq
    %v1677 = vshrl.u32 %v1676, 7
    %v1678 = vsub.s32 %v1675, %v1677
    %v1679 = vrot.slane %v380, %v1678
    %v1681 = vunpack.c.l.s4 1983009808
    %v1682 = vunpack.c.0.s8 %v1681
    %v1683 = vlaneseq
    %v1684 = vshrl.u32 %v1683, 7
    %v1685 = vsub.s32 %v1682, %v1684
    %v1686 = vrot.slane %v1672, %v1685
    %v1687 = vcombine.low %v1633, %v1649
    %v1688 = vcombine.high %v1633, %v1649
    %v1690 = vunpack.c.l.s4 1934713408
    %v1691 = vunpack.c.0.s8 %v1690
    %v1692 = vlaneseq
    %v1693 = vshrl.u32 %v1692, 7
    %v1694 = vsub.s32 %v1691, %v1693
    %v1695 = vrot.slane %v1687, %v1694
    %v1697 = vunpack.c.l.s4 1934713408
    %v1698 = vunpack.c.0.s8 %v1697
    %v1699 = vlaneseq
    %v1700 = vshrl.u32 %v1699, 7
    %v1701 = vsub.s32 %v1698, %v1700
    %v1702 = vrot.slane %v1688, %v1701
    %v1703 = vcombine.low %v1640, %v1656
    %v1704 = vcombine.high %v1640, %v1656
    %v1706 = vunpack.c.l.s4 1934713408
    %v1707 = vunpack.c.0.s8 %v1706
    %v1708 = vlaneseq
    %v1709 = vshrl.u32 %v1708, 7
    %v1710 = vsub.s32 %v1707, %v1709
    %v1711 = vrot.slane %v1703, %v1710
    %v1713 = vunpack.c.l.s4 1934713408
    %v1714 = vunpack.c.0.s8 %v1713
    %v1715 = vlaneseq
    %v1716 = vshrl.u32 %v1715, 7
    %v1717 = vsub.s32 %v1714, %v1716
    %v1718 = vrot.slane %v1704, %v1717
    %v1719 = vcombine.low %v1664, %v1679
    %v1720 = vcombine.high %v1664, %v1679
    %v1722 = vunpack.c.l.s4 1934713408
    %v1723 = vunpack.c.0.s8 %v1722
    %v1724 = vlaneseq
    %v1725 = vshrl.u32 %v1724, 7
    %v1726 = vsub.s32 %v1723, %v1725
    %v1727 = vrot.slane %v1719, %v1726
    %v1729 = vunpack.c.l.s4 1934713408
    %v1730 = vunpack.c.0.s8 %v1729
    %v1731 = vlaneseq
    %v1732 = vshrl.u32 %v1731, 7
    %v1733 = vsub.s32 %v1730, %v1732
    %v1734 = vrot.slane %v1720, %v1733
    %v1735 = vcombine.low %v1671, %v1686
    %v1736 = vcombine.high %v1671, %v1686
    %v1738 = vunpack.c.l.s4 1934713408
    %v1739 = vunpack.c.0.s8 %v1738
    %v1740 = vlaneseq
    %v1741 = vshrl.u32 %v1740, 7
    %v1742 = vsub.s32 %v1739, %v1741
    %v1743 = vrot.slane %v1735, %v1742
    %v1745 = vunpack.c.l.s4 1934713408
    %v1746 = vunpack.c.0.s8 %v1745
    %v1747 = vlaneseq
    %v1748 = vshrl.u32 %v1747, 7
    %v1749 = vsub.s32 %v1746, %v1748
    %v1750 = vrot.slane %v1736, %v1749
    %v1751 = vcombine.low %v1695, %v1727
    %v1752 = vcombine.high %v1695, %v1727
    %v1753 = vcombine.low %v1702, %v1734
    %v1754 = vcombine.high %v1702, %v1734
    %v1755 = vcombine.low %v1711, %v1743
    %v1756 = vcombine.high %v1711, %v1743
    %v1757 = vcombine.low %v1718, %v1750
    %v1758 = vcombine.high %v1718, %v1750
    %v1759 = vcombine.low %v61, %v189
    %v1760 = vcombine.high %v61, %v189
    %v1762 = vunpack.c.l.s4 1983009808
    %v1763 = vunpack.c.0.s8 %v1762
    %v1764 = vlaneseq
    %v1765 = vshrl.u32 %v1764, 7
    %v1766 = vsub.s32 %v1763, %v1765
    %v1767 = vrot.slane %v1759, %v1766
    %v1769 = vunpack.c.l.s4 1983009808
    %v1770 = vunpack.c.0.s8 %v1769
    %v1771 = vlaneseq
    %v1772 = vshrl.u32 %v1771, 7
    %v1773 = vsub.s32 %v1770, %v1772
    %v1774 = vrot.slane %v1760, %v1773
    %v1775 = vcombine.low %v125, %v253
    %v1776 = vcombine.high %v125, %v253
    %v1778 = vunpack.c.l.s4 1983009808
    %v1779 = vunpack.c.0.s8 %v1778
    %v1780 = vlaneseq
    %v1781 = vshrl.u32 %v1780, 7
    %v1782 = vsub.s32 %v1779, %v1781
    %v1783 = vrot.slane %v1775, %v1782
    %v1785 = vunpack.c.l.s4 1983009808
    %v1786 = vunpack.c.0.s8 %v1785
    %v1787 = vlaneseq
    %v1788 = vshrl.u32 %v1787, 7
    %v1789 = vsub.s32 %v1786, %v1788
    %v1790 = vrot.slane %v1776, %v1789
    %v1791 = vcombine.high %v317, 0.0
    %v1793 = vunpack.c.l.s4 1983009808
    %v1794 = vunpack.c.0.s8 %v1793
    %v1795 = vlaneseq
    %v1796 = vshrl.u32 %v1795, 7
    %v1797 = vsub.s32 %v1794, %v1796
    %v1798 = vrot.slane %v317, %v1797
    %v1800 = vunpack.c.l.s4 1983009808
    %v1801 = vunpack.c.0.s8 %v1800
    %v1802 = vlaneseq
    %v1803 = vshrl.u32 %v1802, 7
    %v1804 = vsub.s32 %v1801, %v1803
    %v1805 = vrot.slane %v1791, %v1804
    %v1806 = vcombine.high %v381, 0.0
    %v1808 = vunpack.c.l.s4 1983009808
    %v1809 = vunpack.c.0.s8 %v1808
    %v1810 = vlaneseq
    %v1811 = vshrl.u32 %v1810, 7
    %v1812 = vsub.s32 %v1809, %v1811
    %v1813 = vrot.slane %v381, %v1812
    %v1815 = vunpack.c.l.s4 1983009808
    %v1816 = vunpack.c.0.s8 %v1815
    %v1817 = vlaneseq
    %v1818 = vshrl.u32 %v1817, 7
    %v1819 = vsub.s32 %v1816, %v1818
    %v1820 = vrot.slane %v1806, %v1819
    %v1821 = vcombine.low %v1767, %v1783
    %v1822 = vcombine.high %v1767, %v1783
    %v1824 = vunpack.c.l.s4 1934713408
    %v1825 = vunpack.c.0.s8 %v1824
    %v1826 = vlaneseq
    %v1827 = vshrl.u32 %v1826, 7
    %v1828 = vsub.s32 %v1825, %v1827
    %v1829 = vrot.slane %v1821, %v1828
    %v1831 = vunpack.c.l.s4 1934713408
    %v1832 = vunpack.c.0.s8 %v1831
    %v1833 = vlaneseq
    %v1834 = vshrl.u32 %v1833, 7
    %v1835 = vsub.s32 %v1832, %v1834
    %v1836 = vrot.slane %v1822, %v1835
    %v1837 = vcombine.low %v1774, %v1790
    %v1838 = vcombine.high %v1774, %v1790
    %v1840 = vunpack.c.l.s4 1934713408
    %v1841 = vunpack.c.0.s8 %v1840
    %v1842 = vlaneseq
    %v1843 = vshrl.u32 %v1842, 7
    %v1844 = vsub.s32 %v1841, %v1843
    %v1845 = vrot.slane %v1837, %v1844
    %v1847 = vunpack.c.l.s4 1934713408
    %v1848 = vunpack.c.0.s8 %v1847
    %v1849 = vlaneseq
    %v1850 = vshrl.u32 %v1849, 7
    %v1851 = vsub.s32 %v1848, %v1850
    %v1852 = vrot.slane %v1838, %v1851
    %v1853 = vcombine.low %v1798, %v1813
    %v1854 = vcombine.high %v1798, %v1813
    %v1856 = vunpack.c.l.s4 1934713408
    %v1857 = vunpack.c.0.s8 %v1856
    %v1858 = vlaneseq
    %v1859 = vshrl.u32 %v1858, 7
    %v1860 = vsub.s32 %v1857, %v1859
    %v1861 = vrot.slane %v1853, %v1860
    %v1863 = vunpack.c.l.s4 1934713408
    %v1864 = vunpack.c.0.s8 %v1863
    %v1865 = vlaneseq
    %v1866 = vshrl.u32 %v1865, 7
    %v1867 = vsub.s32 %v1864, %v1866
    %v1868 = vrot.slane %v1854, %v1867
    %v1869 = vcombine.low %v1805, %v1820
    %v1870 = vcombine.high %v1805, %v1820
    %v1872 = vunpack.c.l.s4 1934713408
    %v1873 = vunpack.c.0.s8 %v1872
    %v1874 = vlaneseq
    %v1875 = vshrl.u32 %v1874, 7
    %v1876 = vsub.s32 %v1873, %v1875
    %v1877 = vrot.slane %v1869, %v1876
    %v1879 = vunpack.c.l.s4 1934713408
    %v1880 = vunpack.c.0.s8 %v1879
    %v1881 = vlaneseq
    %v1882 = vshrl.u32 %v1881, 7
    %v1883 = vsub.s32 %v1880, %v1882
    %v1884 = vrot.slane %v1870, %v1883
    %v1885 = vcombine.low %v1829, %v1861
    %v1886 = vcombine.high %v1829, %v1861
    %v1887 = vcombine.low %v1836, %v1868
    %v1888 = vcombine.high %v1836, %v1868
    %v1889 = vcombine.low %v1845, %v1877
    %v1890 = vcombine.high %v1845, %v1877
    %v1891 = vcombine.low %v1852, %v1884
    %v1892 = vcombine.high %v1852, %v1884
    %v1893 = vcombine.low %v62, %v190
    %v1894 = vcombine.high %v62, %v190
    %v1896 = vunpack.c.l.s4 1983009808
    %v1897 = vunpack.c.0.s8 %v1896
    %v1898 = vlaneseq
    %v1899 = vshrl.u32 %v1898, 7
    %v1900 = vsub.s32 %v1897, %v1899
    %v1901 = vrot.slane %v1893, %v1900
    %v1903 = vunpack.c.l.s4 1983009808
    %v1904 = vunpack.c.0.s8 %v1903
    %v1905 = vlaneseq
    %v1906 = vshrl.u32 %v1905, 7
    %v1907 = vsub.s32 %v1904, %v1906
    %v1908 = vrot.slane %v1894, %v1907
    %v1909 = vcombine.low %v126, %v254
    %v1910 = vcombine.high %v126, %v254
    %v1912 = vunpack.c.l.s4 1983009808
    %v1913 = vunpack.c.0.s8 %v1912
    %v1914 = vlaneseq
    %v1915 = vshrl.u32 %v1914, 7
    %v1916 = vsub.s32 %v1913, %v1915
    %v1917 = vrot.slane %v1909, %v1916
    %v1919 = vunpack.c.l.s4 1983009808
    %v1920 = vunpack.c.0.s8 %v1919
    %v1921 = vlaneseq
    %v1922 = vshrl.u32 %v1921, 7
    %v1923 = vsub.s32 %v1920, %v1922
    %v1924 = vrot.slane %v1910, %v1923
    %v1925 = vcombine.high %v318, 0.0
    %v1927 = vunpack.c.l.s4 1983009808
    %v1928 = vunpack.c.0.s8 %v1927
    %v1929 = vlaneseq
    %v1930 = vshrl.u32 %v1929, 7
    %v1931 = vsub.s32 %v1928, %v1930
    %v1932 = vrot.slane %v318, %v1931
    %v1934 = vunpack.c.l.s4 1983009808
    %v1935 = vunpack.c.0.s8 %v1934
    %v1936 = vlaneseq
    %v1937 = vshrl.u32 %v1936, 7
    %v1938 = vsub.s32 %v1935, %v1937
    %v1939 = vrot.slane %v1925, %v1938
    %v1940 = vcombine.high %v382, 0.0
    %v1942 = vunpack.c.l.s4 1983009808
    %v1943 = vunpack.c.0.s8 %v1942
    %v1944 = vlaneseq
    %v1945 = vshrl.u32 %v1944, 7
    %v1946 = vsub.s32 %v1943, %v1945
    %v1947 = vrot.slane %v382, %v1946
    %v1949 = vunpack.c.l.s4 1983009808
    %v1950 = vunpack.c.0.s8 %v1949
    %v1951 = vlaneseq
    %v1952 = vshrl.u32 %v1951, 7
    %v1953 = vsub.s32 %v1950, %v1952
    %v1954 = vrot.slane %v1940, %v1953
    %v1955 = vcombine.low %v1901, %v1917
    %v1956 = vcombine.high %v1901, %v1917
    %v1958 = vunpack.c.l.s4 1934713408
    %v1959 = vunpack.c.0.s8 %v1958
    %v1960 = vlaneseq
    %v1961 = vshrl.u32 %v1960, 7
    %v1962 = vsub.s32 %v1959, %v1961
    %v1963 = vrot.slane %v1955, %v1962
    %v1965 = vunpack.c.l.s4 1934713408
    %v1966 = vunpack.c.0.s8 %v1965
    %v1967 = vlaneseq
    %v1968 = vshrl.u32 %v1967, 7
    %v1969 = vsub.s32 %v1966, %v1968
    %v1970 = vrot.slane %v1956, %v1969
    %v1971 = vcombine.low %v1908, %v1924
    %v1972 = vcombine.high %v1908, %v1924
    %v1974 = vunpack.c.l.s4 1934713408
    %v1975 = vunpack.c.0.s8 %v1974
    %v1976 = vlaneseq
    %v1977 = vshrl.u32 %v1976, 7
    %v1978 = vsub.s32 %v1975, %v1977
    %v1979 = vrot.slane %v1971, %v1978
    %v1981 = vunpack.c.l.s4 1934713408
    %v1982 = vunpack.c.0.s8 %v1981
    %v1983 = vlaneseq
    %v1984 = vshrl.u32 %v1983, 7
    %v1985 = vsub.s32 %v1982, %v1984
    %v1986 = vrot.slane %v1972, %v1985
    %v1987 = vcombine.low %v1932, %v1947
    %v1988 = vcombine.high %v1932, %v1947
    %v1990 = vunpack.c.l.s4 1934713408
    %v1991 = vunpack.c.0.s8 %v1990
    %v1992 = vlaneseq
    %v1993 = vshrl.u32 %v1992, 7
    %v1994 = vsub.s32 %v1991, %v1993
    %v1995 = vrot.slane %v1987, %v1994
    %v1997 = vunpack.c.l.s4 1934713408
    %v1998 = vunpack.c.0.s8 %v1997
    %v1999 = vlaneseq
    %v2000 = vshrl.u32 %v1999, 7
    %v2001 = vsub.s32 %v1998, %v2000
    %v2002 = vrot.slane %v1988, %v2001
    %v2003 = vcombine.low %v1939, %v1954
    %v2004 = vcombine.high %v1939, %v1954
    %v2006 = vunpack.c.l.s4 1934713408
    %v2007 = vunpack.c.0.s8 %v2006
    %v2008 = vlaneseq
    %v2009 = vshrl.u32 %v2008, 7
    %v2010 = vsub.s32 %v2007, %v2009
    %v2011 = vrot.slane %v2003, %v2010
    %v2013 = vunpack.c.l.s4 1934713408
    %v2014 = vunpack.c.0.s8 %v2013
    %v2015 = vlaneseq
    %v2016 = vshrl.u32 %v2015, 7
    %v2017 = vsub.s32 %v2014, %v2016
    %v2018 = vrot.slane %v2004, %v2017
    %v2019 = vcombine.low %v1963, %v1995
    %v2020 = vcombine.high %v1963, %v1995
    %v2021 = vcombine.low %v1970, %v2002
    %v2022 = vcombine.high %v1970, %v2002
    %v2023 = vcombine.low %v1979, %v2011
    %v2024 = vcombine.high %v1979, %v2011
    %v2025 = vcombine.low %v1986, %v2018
    %v2026 = vcombine.high %v1986, %v2018
    %v2027 = vcombine.low %v63, %v191
    %v2028 = vcombine.high %v63, %v191
    %v2030 = vunpack.c.l.s4 1983009808
    %v2031 = vunpack.c.0.s8 %v2030
    %v2032 = vlaneseq
    %v2033 = vshrl.u32 %v2032, 7
    %v2034 = vsub.s32 %v2031, %v2033
    %v2035 = vrot.slane %v2027, %v2034
    %v2037 = vunpack.c.l.s4 1983009808
    %v2038 = vunpack.c.0.s8 %v2037
    %v2039 = vlaneseq
    %v2040 = vshrl.u32 %v2039, 7
    %v2041 = vsub.s32 %v2038, %v2040
    %v2042 = vrot.slane %v2028, %v2041
    %v2043 = vcombine.low %v127, %v255
    %v2044 = vcombine.high %v127, %v255
    %v2046 = vunpack.c.l.s4 1983009808
    %v2047 = vunpack.c.0.s8 %v2046
    %v2048 = vlaneseq
    %v2049 = vshrl.u32 %v2048, 7
    %v2050 = vsub.s32 %v2047, %v2049
    %v2051 = vrot.slane %v2043, %v2050
    %v2053 = vunpack.c.l.s4 1983009808
    %v2054 = vunpack.c.0.s8 %v2053
    %v2055 = vlaneseq
    %v2056 = vshrl.u32 %v2055, 7
    %v2057 = vsub.s32 %v2054, %v2056
    %v2058 = vrot.slane %v2044, %v2057
    %v2059 = vcombine.high %v319, 0.0
    %v2061 = vunpack.c.l.s4 1983009808
    %v2062 = vunpack.c.0.s8 %v2061
    %v2063 = vlaneseq
    %v2064 = vshrl.u32 %v2063, 7
    %v2065 = vsub.s32 %v2062, %v2064
    %v2066 = vrot.slane %v319, %v2065
    %v2068 = vunpack.c.l.s4 1983009808
    %v2069 = vunpack.c.0.s8 %v2068
    %v2070 = vlaneseq
    %v2071 = vshrl.u32 %v2070, 7
    %v2072 = vsub.s32 %v2069, %v2071
    %v2073 = vrot.slane %v2059, %v2072
    %v2074 = vcombine.high %v383, 0.0
    %v2076 = vunpack.c.l.s4 1983009808
    %v2077 = vunpack.c.0.s8 %v2076
    %v2078 = vlaneseq
    %v2079 = vshrl.u32 %v2078, 7
    %v2080 = vsub.s32 %v2077, %v2079
    %v2081 = vrot.slane %v383, %v2080
    %v2083 = vunpack.c.l.s4 1983009808
    %v2084 = vunpack.c.0.s8 %v2083
    %v2085 = vlaneseq
    %v2086 = vshrl.u32 %v2085, 7
    %v2087 = vsub.s32 %v2084, %v2086
    %v2088 = vrot.slane %v2074, %v2087
    %v2089 = vcombine.low %v2035, %v2051
    %v2090 = vcombine.high %v2035, %v2051
    %v2092 = vunpack.c.l.s4 1934713408
    %v2093 = vunpack.c.0.s8 %v2092
    %v2094 = vlaneseq
    %v2095 = vshrl.u32 %v2094, 7
    %v2096 = vsub.s32 %v2093, %v2095
    %v2097 = vrot.slane %v2089, %v2096
    %v2099 = vunpack.c.l.s4 1934713408
    %v2100 = vunpack.c.0.s8 %v2099
    %v2101 = vlaneseq
    %v2102 = vshrl.u32 %v2101, 7
    %v2103 = vsub.s32 %v2100, %v2102
    %v2104 = vrot.slane %v2090, %v2103
    %v2105 = vcombine.low %v2042, %v2058
    %v2106 = vcombine.high %v2042, %v2058
    %v2108 = vunpack.c.l.s4 1934713408
    %v2109 = vunpack.c.0.s8 %v2108
    %v2110 = vlaneseq
    %v2111 = vshrl.u32 %v2110, 7
    %v2112 = vsub.s32 %v2109, %v2111
    %v2113 = vrot.slane %v2105, %v2112
    %v2115 = vunpack.c.l.s4 1934713408
    %v2116 = vunpack.c.0.s8 %v2115
    %v2117 = vlaneseq
    %v2118 = vshrl.u32 %v2117, 7
    %v2119 = vsub.s32 %v2116, %v2118
    %v2120 = vrot.slane %v2106, %v2119
    %v2121 = vcombine.low %v2066, %v2081
    %v2122 = vcombine.high %v2066, %v2081
    %v2124 = vunpack.c.l.s4 1934713408
    %v2125 = vunpack.c.0.s8 %v2124
    %v2126 = vlaneseq
    %v2127 = vshrl.u32 %v2126, 7
    %v2128 = vsub.s32 %v2125, %v2127
    %v2129 = vrot.slane %v2121, %v2128
    %v2131 = vunpack.c.l.s4 1934713408
    %v2132 = vunpack.c.0.s8 %v2131
    %v2133 = vlaneseq
    %v2134 = vshrl.u32 %v2133, 7
    %v2135 = vsub.s32 %v2132, %v2134
    %v2136 = vrot.slane %v2122, %v2135
    %v2137 = vcombine.low %v2073, %v2088
    %v2138 = vcombine.high %v2073, %v2088
    %v2140 = vunpack.c.l.s4 1934713408
    %v2141 = vunpack.c.0.s8 %v2140
    %v2142 = vlaneseq
    %v2143 = vshrl.u32 %v2142, 7
    %v2144 = vsub.s32 %v2141, %v2143
    %v2145 = vrot.slane %v2137, %v2144
    %v2147 = vunpack.c.l.s4 1934713408
    %v2148 = vunpack.c.0.s8 %v2147
    %v2149 = vlaneseq
    %v2150 = vshrl.u32 %v2149, 7
    %v2151 = vsub.s32 %v2148, %v2150
    %v2152 = vrot.slane %v2138, %v2151
    %v2153 = vcombine.low %v2097, %v2129
    %v2154 = vcombine.high %v2097, %v2129
    %v2155 = vcombine.low %v2104, %v2136
    %v2156 = vcombine.high %v2104, %v2136
    %v2157 = vcombine.low %v2113, %v2145
    %v2158 = vcombine.high %v2113, %v2145
    %v2159 = vcombine.low %v2120, %v2152
    %v2160 = vcombine.high %v2120, %v2152
    %v2161 = vcombine.low %v64, %v192
    %v2162 = vcombine.high %v64, %v192
    %v2164 = vunpack.c.l.s4 1983009808
    %v2165 = vunpack.c.0.s8 %v2164
    %v2166 = vlaneseq
    %v2167 = vshrl.u32 %v2166, 7
    %v2168 = vsub.s32 %v2165, %v2167
    %v2169 = vrot.slane %v2161, %v2168
    %v2171 = vunpack.c.l.s4 1983009808
    %v2172 = vunpack.c.0.s8 %v2171
    %v2173 = vlaneseq
    %v2174 = vshrl.u32 %v2173, 7
    %v2175 = vsub.s32 %v2172, %v2174
    %v2176 = vrot.slane %v2162, %v2175
    %v2177 = vcombine.low %v128, %v256
    %v2178 = vcombine.high %v128, %v256
    %v2180 = vunpack.c.l.s4 1983009808
    %v2181 = vunpack.c.0.s8 %v2180
    %v2182 = vlaneseq
    %v2183 = vshrl.u32 %v2182, 7
    %v2184 = vsub.s32 %v2181, %v2183
    %v2185 = vrot.slane %v2177, %v2184
    %v2187 = vunpack.c.l.s4 1983009808
    %v2188 = vunpack.c.0.s8 %v2187
    %v2189 = vlaneseq
    %v2190 = vshrl.u32 %v2189, 7
    %v2191 = vsub.s32 %v2188, %v2190
    %v2192 = vrot.slane %v2178, %v2191
    %v2193 = vcombine.high %v320, 0.0
    %v2195 = vunpack.c.l.s4 1983009808
    %v2196 = vunpack.c.0.s8 %v2195
    %v2197 = vlaneseq
    %v2198 = vshrl.u32 %v2197, 7
    %v2199 = vsub.s32 %v2196, %v2198
    %v2200 = vrot.slane %v320, %v2199
    %v2202 = vunpack.c.l.s4 1983009808
    %v2203 = vunpack.c.0.s8 %v2202
    %v2204 = vlaneseq
    %v2205 = vshrl.u32 %v2204, 7
    %v2206 = vsub.s32 %v2203, %v2205
    %v2207 = vrot.slane %v2193, %v2206
    %v2208 = vcombine.high %v384, 0.0
    %v2210 = vunpack.c.l.s4 1983009808
    %v2211 = vunpack.c.0.s8 %v2210
    %v2212 = vlaneseq
    %v2213 = vshrl.u32 %v2212, 7
    %v2214 = vsub.s32 %v2211, %v2213
    %v2215 = vrot.slane %v384, %v2214
    %v2217 = vunpack.c.l.s4 1983009808
    %v2218 = vunpack.c.0.s8 %v2217
    %v2219 = vlaneseq
    %v2220 = vshrl.u32 %v2219, 7
    %v2221 = vsub.s32 %v2218, %v2220
    %v2222 = vrot.slane %v2208, %v2221
    %v2223 = vcombine.low %v2169, %v2185
    %v2224 = vcombine.high %v2169, %v2185
    %v2226 = vunpack.c.l.s4 1934713408
    %v2227 = vunpack.c.0.s8 %v2226
    %v2228 = vlaneseq
    %v2229 = vshrl.u32 %v2228, 7
    %v2230 = vsub.s32 %v2227, %v2229
    %v2231 = vrot.slane %v2223, %v2230
    %v2233 = vunpack.c.l.s4 1934713408
    %v2234 = vunpack.c.0.s8 %v2233
    %v2235 = vlaneseq
    %v2236 = vshrl.u32 %v2235, 7
    %v2237 = vsub.s32 %v2234, %v2236
    %v2238 = vrot.slane %v2224, %v2237
    %v2239 = vcombine.low %v2176, %v2192
    %v2240 = vcombine.high %v2176, %v2192
    %v2242 = vunpack.c.l.s4 1934713408
    %v2243 = vunpack.c.0.s8 %v2242
    %v2244 = vlaneseq
    %v2245 = vshrl.u32 %v2244, 7
    %v2246 = vsub.s32 %v2243, %v2245
    %v2247 = vrot.slane %v2239, %v2246
    %v2249 = vunpack.c.l.s4 1934713408
    %v2250 = vunpack.c.0.s8 %v2249
    %v2251 = vlaneseq
    %v2252 = vshrl.u32 %v2251, 7
    %v2253 = vsub.s32 %v2250, %v2252
    %v2254 = vrot.slane %v2240, %v2253
    %v2255 = vcombine.low %v2200, %v2215
    %v2256 = vcombine.high %v2200, %v2215
    %v2258 = vunpack.c.l.s4 1934713408
    %v2259 = vunpack.c.0.s8 %v2258
    %v2260 = vlaneseq
    %v2261 = vshrl.u32 %v2260, 7
    %v2262 = vsub.s32 %v2259, %v2261
    %v2263 = vrot.slane %v2255, %v2262
    %v2265 = vunpack.c.l.s4 1934713408
    %v2266 = vunpack.c.0.s8 %v2265
    %v2267 = vlaneseq
    %v2268 = vshrl.u32 %v2267, 7
    %v2269 = vsub.s32 %v2266, %v2268
    %v2270 = vrot.slane %v2256, %v2269
    %v2271 = vcombine.low %v2207, %v2222
    %v2272 = vcombine.high %v2207, %v2222
    %v2274 = vunpack.c.l.s4 1934713408
    %v2275 = vunpack.c.0.s8 %v2274
    %v2276 = vlaneseq
    %v2277 = vshrl.u32 %v2276, 7
    %v2278 = vsub.s32 %v2275, %v2277
    %v2279 = vrot.slane %v2271, %v2278
    %v2281 = vunpack.c.l.s4 1934713408
    %v2282 = vunpack.c.0.s8 %v2281
    %v2283 = vlaneseq
    %v2284 = vshrl.u32 %v2283, 7
    %v2285 = vsub.s32 %v2282, %v2284
    %v2286 = vrot.slane %v2272, %v2285
    %v2287 = vcombine.low %v2231, %v2263
    %v2288 = vcombine.high %v2231, %v2263
    %v2289 = vcombine.low %v2238, %v2270
    %v2290 = vcombine.high %v2238, %v2270
    %v2291 = vcombine.low %v2247, %v2279
    %v2292 = vcombine.high %v2247, %v2279
    %v2293 = vcombine.low %v2254, %v2286
    %v2294 = vcombine.high %v2254, %v2286
    %v2295 = vcombine.low %v65, %v193
    %v2296 = vcombine.high %v65, %v193
    %v2298 = vunpack.c.l.s4 1983009808
    %v2299 = vunpack.c.0.s8 %v2298
    %v2300 = vlaneseq
    %v2301 = vshrl.u32 %v2300, 7
    %v2302 = vsub.s32 %v2299, %v2301
    %v2303 = vrot.slane %v2295, %v2302
    %v2305 = vunpack.c.l.s4 1983009808
    %v2306 = vunpack.c.0.s8 %v2305
    %v2307 = vlaneseq
    %v2308 = vshrl.u32 %v2307, 7
    %v2309 = vsub.s32 %v2306, %v2308
    %v2310 = vrot.slane %v2296, %v2309
    %v2311 = vcombine.low %v129, %v257
    %v2312 = vcombine.high %v129, %v257
    %v2314 = vunpack.c.l.s4 1983009808
    %v2315 = vunpack.c.0.s8 %v2314
    %v2316 = vlaneseq
    %v2317 = vshrl.u32 %v2316, 7
    %v2318 = vsub.s32 %v2315, %v2317
    %v2319 = vrot.slane %v2311, %v2318
    %v2321 = vunpack.c.l.s4 1983009808
    %v2322 = vunpack.c.0.s8 %v2321
    %v2323 = vlaneseq
    %v2324 = vshrl.u32 %v2323, 7
    %v2325 = vsub.s32 %v2322, %v2324
    %v2326 = vrot.slane %v2312, %v2325
    %v2327 = vcombine.high %v321, 0.0
    %v2329 = vunpack.c.l.s4 1983009808
    %v2330 = vunpack.c.0.s8 %v2329
    %v2331 = vlaneseq
    %v2332 = vshrl.u32 %v2331, 7
    %v2333 = vsub.s32 %v2330, %v2332
    %v2334 = vrot.slane %v321, %v2333
    %v2336 = vunpack.c.l.s4 1983009808
    %v2337 = vunpack.c.0.s8 %v2336
    %v2338 = vlaneseq
    %v2339 = vshrl.u32 %v2338, 7
    %v2340 = vsub.s32 %v2337, %v2339
    %v2341 = vrot.slane %v2327, %v2340
    %v2342 = vcombine.high %v385, 0.0
    %v2344 = vunpack.c.l.s4 1983009808
    %v2345 = vunpack.c.0.s8 %v2344
    %v2346 = vlaneseq
    %v2347 = vshrl.u32 %v2346, 7
    %v2348 = vsub.s32 %v2345, %v2347
    %v2349 = vrot.slane %v385, %v2348
    %v2351 = vunpack.c.l.s4 1983009808
    %v2352 = vunpack.c.0.s8 %v2351
    %v2353 = vlaneseq
    %v2354 = vshrl.u32 %v2353, 7
    %v2355 = vsub.s32 %v2352, %v2354
    %v2356 = vrot.slane %v2342, %v2355
    %v2357 = vcombine.low %v2303, %v2319
    %v2358 = vcombine.high %v2303, %v2319
    %v2360 = vunpack.c.l.s4 1934713408
    %v2361 = vunpack.c.0.s8 %v2360
    %v2362 = vlaneseq
    %v2363 = vshrl.u32 %v2362, 7
    %v2364 = vsub.s32 %v2361, %v2363
    %v2365 = vrot.slane %v2357, %v2364
    %v2367 = vunpack.c.l.s4 1934713408
    %v2368 = vunpack.c.0.s8 %v2367
    %v2369 = vlaneseq
    %v2370 = vshrl.u32 %v2369, 7
    %v2371 = vsub.s32 %v2368, %v2370
    %v2372 = vrot.slane %v2358, %v2371
    %v2373 = vcombine.low %v2310, %v2326
    %v2374 = vcombine.high %v2310, %v2326
    %v2376 = vunpack.c.l.s4 1934713408
    %v2377 = vunpack.c.0.s8 %v2376
    %v2378 = vlaneseq
    %v2379 = vshrl.u32 %v2378, 7
    %v2380 = vsub.s32 %v2377, %v2379
    %v2381 = vrot.slane %v2373, %v2380
    %v2383 = vunpack.c.l.s4 1934713408
    %v2384 = vunpack.c.0.s8 %v2383
    %v2385 = vlaneseq
    %v2386 = vshrl.u32 %v2385, 7
    %v2387 = vsub.s32 %v2384, %v2386
    %v2388 = vrot.slane %v2374, %v2387
    %v2389 = vcombine.low %v2334, %v2349
    %v2390 = vcombine.high %v2334, %v2349
    %v2392 = vunpack.c.l.s4 1934713408
    %v2393 = vunpack.c.0.s8 %v2392
    %v2394 = vlaneseq
    %v2395 = vshrl.u32 %v2394, 7
    %v2396 = vsub.s32 %v2393, %v2395
    %v2397 = vrot.slane %v2389, %v2396
    %v2399 = vunpack.c.l.s4 1934713408
    %v2400 = vunpack.c.0.s8 %v2399
    %v2401 = vlaneseq
    %v2402 = vshrl.u32 %v2401, 7
    %v2403 = vsub.s32 %v2400, %v2402
    %v2404 = vrot.slane %v2390, %v2403
    %v2405 = vcombine.low %v2341, %v2356
    %v2406 = vcombine.high %v2341, %v2356
    %v2408 = vunpack.c.l.s4 1934713408
    %v2409 = vunpack.c.0.s8 %v2408
    %v2410 = vlaneseq
    %v2411 = vshrl.u32 %v2410, 7
    %v2412 = vsub.s32 %v2409, %v2411
    %v2413 = vrot.slane %v2405, %v2412
    %v2415 = vunpack.c.l.s4 1934713408
    %v2416 = vunpack.c.0.s8 %v2415
    %v2417 = vlaneseq
    %v2418 = vshrl.u32 %v2417, 7
    %v2419 = vsub.s32 %v2416, %v2418
    %v2420 = vrot.slane %v2406, %v2419
    %v2421 = vcombine.low %v2365, %v2397
    %v2422 = vcombine.high %v2365, %v2397
    %v2423 = vcombine.low %v2372, %v2404
    %v2424 = vcombine.high %v2372, %v2404
    %v2425 = vcombine.low %v2381, %v2413
    %v2426 = vcombine.high %v2381, %v2413
    %v2427 = vcombine.low %v2388, %v2420
    %v2428 = vcombine.high %v2388, %v2420
    %v2429 = vcombine.low %v66, %v194
    %v2430 = vcombine.high %v66, %v194
    %v2432 = vunpack.c.l.s4 1983009808
    %v2433 = vunpack.c.0.s8 %v2432
    %v2434 = vlaneseq
    %v2435 = vshrl.u32 %v2434, 7
    %v2436 = vsub.s32 %v2433, %v2435
    %v2437 = vrot.slane %v2429, %v2436
    %v2439 = vunpack.c.l.s4 1983009808
    %v2440 = vunpack.c.0.s8 %v2439
    %v2441 = vlaneseq
    %v2442 = vshrl.u32 %v2441, 7
    %v2443 = vsub.s32 %v2440, %v2442
    %v2444 = vrot.slane %v2430, %v2443
    %v2445 = vcombine.low %v130, %v258
    %v2446 = vcombine.high %v130, %v258
    %v2448 = vunpack.c.l.s4 1983009808
    %v2449 = vunpack.c.0.s8 %v2448
    %v2450 = vlaneseq
    %v2451 = vshrl.u32 %v2450, 7
    %v2452 = vsub.s32 %v2449, %v2451
    %v2453 = vrot.slane %v2445, %v2452
    %v2455 = vunpack.c.l.s4 1983009808
    %v2456 = vunpack.c.0.s8 %v2455
    %v2457 = vlaneseq
    %v2458 = vshrl.u32 %v2457, 7
    %v2459 = vsub.s32 %v2456, %v2458
    %v2460 = vrot.slane %v2446, %v2459
    %v2461 = vcombine.high %v322, 0.0
    %v2463 = vunpack.c.l.s4 1983009808
    %v2464 = vunpack.c.0.s8 %v2463
    %v2465 = vlaneseq
    %v2466 = vshrl.u32 %v2465, 7
    %v2467 = vsub.s32 %v2464, %v2466
    %v2468 = vrot.slane %v322, %v2467
    %v2470 = vunpack.c.l.s4 1983009808
    %v2471 = vunpack.c.0.s8 %v2470
    %v2472 = vlaneseq
    %v2473 = vshrl.u32 %v2472, 7
    %v2474 = vsub.s32 %v2471, %v2473
    %v2475 = vrot.slane %v2461, %v2474
    %v2476 = vcombine.high %v386, 0.0
    %v2478 = vunpack.c.l.s4 1983009808
    %v2479 = vunpack.c.0.s8 %v2478
    %v2480 = vlaneseq
    %v2481 = vshrl.u32 %v2480, 7
    %v2482 = vsub.s32 %v2479, %v2481
    %v2483 = vrot.slane %v386, %v2482
    %v2485 = vunpack.c.l.s4 1983009808
    %v2486 = vunpack.c.0.s8 %v2485
    %v2487 = vlaneseq
    %v2488 = vshrl.u32 %v2487, 7
    %v2489 = vsub.s32 %v2486, %v2488
    %v2490 = vrot.slane %v2476, %v2489
    %v2491 = vcombine.low %v2437, %v2453
    %v2492 = vcombine.high %v2437, %v2453
    %v2494 = vunpack.c.l.s4 1934713408
    %v2495 = vunpack.c.0.s8 %v2494
    %v2496 = vlaneseq
    %v2497 = vshrl.u32 %v2496, 7
    %v2498 = vsub.s32 %v2495, %v2497
    %v2499 = vrot.slane %v2491, %v2498
    %v2501 = vunpack.c.l.s4 1934713408
    %v2502 = vunpack.c.0.s8 %v2501
    %v2503 = vlaneseq
    %v2504 = vshrl.u32 %v2503, 7
    %v2505 = vsub.s32 %v2502, %v2504
    %v2506 = vrot.slane %v2492, %v2505
    %v2507 = vcombine.low %v2444, %v2460
    %v2508 = vcombine.high %v2444, %v2460
    %v2510 = vunpack.c.l.s4 1934713408
    %v2511 = vunpack.c.0.s8 %v2510
    %v2512 = vlaneseq
    %v2513 = vshrl.u32 %v2512, 7
    %v2514 = vsub.s32 %v2511, %v2513
    %v2515 = vrot.slane %v2507, %v2514
    %v2517 = vunpack.c.l.s4 1934713408
    %v2518 = vunpack.c.0.s8 %v2517
    %v2519 = vlaneseq
    %v2520 = vshrl.u32 %v2519, 7
    %v2521 = vsub.s32 %v2518, %v2520
    %v2522 = vrot.slane %v2508, %v2521
    %v2523 = vcombine.low %v2468, %v2483
    %v2524 = vcombine.high %v2468, %v2483
    %v2526 = vunpack.c.l.s4 1934713408
    %v2527 = vunpack.c.0.s8 %v2526
    %v2528 = vlaneseq
    %v2529 = vshrl.u32 %v2528, 7
    %v2530 = vsub.s32 %v2527, %v2529
    %v2531 = vrot.slane %v2523, %v2530
    %v2533 = vunpack.c.l.s4 1934713408
    %v2534 = vunpack.c.0.s8 %v2533
    %v2535 = vlaneseq
    %v2536 = vshrl.u32 %v2535, 7
    %v2537 = vsub.s32 %v2534, %v2536
    %v2538 = vrot.slane %v2524, %v2537
    %v2539 = vcombine.low %v2475, %v2490
    %v2540 = vcombine.high %v2475, %v2490
    %v2542 = vunpack.c.l.s4 1934713408
    %v2543 = vunpack.c.0.s8 %v2542
    %v2544 = vlaneseq
    %v2545 = vshrl.u32 %v2544, 7
    %v2546 = vsub.s32 %v2543, %v2545
    %v2547 = vrot.slane %v2539, %v2546
    %v2549 = vunpack.c.l.s4 1934713408
    %v2550 = vunpack.c.0.s8 %v2549
    %v2551 = vlaneseq
    %v2552 = vshrl.u32 %v2551, 7
    %v2553 = vsub.s32 %v2550, %v2552
    %v2554 = vrot.slane %v2540, %v2553
    %v2555 = vcombine.low %v2499, %v2531
    %v2556 = vcombine.high %v2499, %v2531
    %v2557 = vcombine.low %v2506, %v2538
    %v2558 = vcombine.high %v2506, %v2538
    %v2559 = vcombine.low %v2515, %v2547
    %v2560 = vcombine.high %v2515, %v2547
    %v2561 = vcombine.low %v2522, %v2554
    %v2562 = vcombine.high %v2522, %v2554
    %v2563 = vcombine.low %v83, %v211
    %v2564 = vcombine.high %v83, %v211
    %v2566 = vunpack.c.l.s4 1983009808
    %v2567 = vunpack.c.0.s8 %v2566
    %v2568 = vlaneseq
    %v2569 = vshrl.u32 %v2568, 7
    %v2570 = vsub.s32 %v2567, %v2569
    %v2571 = vrot.slane %v2563, %v2570
    %v2573 = vunpack.c.l.s4 1983009808
    %v2574 = vunpack.c.0.s8 %v2573
    %v2575 = vlaneseq
    %v2576 = vshrl.u32 %v2575, 7
    %v2577 = vsub.s32 %v2574, %v2576
    %v2578 = vrot.slane %v2564, %v2577
    %v2579 = vcombine.low %v147, %v275
    %v2580 = vcombine.high %v147, %v275
    %v2582 = vunpack.c.l.s4 1983009808
    %v2583 = vunpack.c.0.s8 %v2582
    %v2584 = vlaneseq
    %v2585 = vshrl.u32 %v2584, 7
    %v2586 = vsub.s32 %v2583, %v2585
    %v2587 = vrot.slane %v2579, %v2586
    %v2589 = vunpack.c.l.s4 1983009808
    %v2590 = vunpack.c.0.s8 %v2589
    %v2591 = vlaneseq
    %v2592 = vshrl.u32 %v2591, 7
    %v2593 = vsub.s32 %v2590, %v2592
    %v2594 = vrot.slane %v2580, %v2593
    %v2595 = vcombine.high %v339, 0.0
    %v2597 = vunpack.c.l.s4 1983009808
    %v2598 = vunpack.c.0.s8 %v2597
    %v2599 = vlaneseq
    %v2600 = vshrl.u32 %v2599, 7
    %v2601 = vsub.s32 %v2598, %v2600
    %v2602 = vrot.slane %v339, %v2601
    %v2604 = vunpack.c.l.s4 1983009808
    %v2605 = vunpack.c.0.s8 %v2604
    %v2606 = vlaneseq
    %v2607 = vshrl.u32 %v2606, 7
    %v2608 = vsub.s32 %v2605, %v2607
    %v2609 = vrot.slane %v2595, %v2608
    %v2610 = vcombine.high %v403, 0.0
    %v2612 = vunpack.c.l.s4 1983009808
    %v2613 = vunpack.c.0.s8 %v2612
    %v2614 = vlaneseq
    %v2615 = vshrl.u32 %v2614, 7
    %v2616 = vsub.s32 %v2613, %v2615
    %v2617 = vrot.slane %v403, %v2616
    %v2619 = vunpack.c.l.s4 1983009808
    %v2620 = vunpack.c.0.s8 %v2619
    %v2621 = vlaneseq
    %v2622 = vshrl.u32 %v2621, 7
    %v2623 = vsub.s32 %v2620, %v2622
    %v2624 = vrot.slane %v2610, %v2623
    %v2625 = vcombine.low %v2571, %v2587
    %v2626 = vcombine.high %v2571, %v2587
    %v2628 = vunpack.c.l.s4 1934713408
    %v2629 = vunpack.c.0.s8 %v2628
    %v2630 = vlaneseq
    %v2631 = vshrl.u32 %v2630, 7
    %v2632 = vsub.s32 %v2629, %v2631
    %v2633 = vrot.slane %v2625, %v2632
    %v2635 = vunpack.c.l.s4 1934713408
    %v2636 = vunpack.c.0.s8 %v2635
    %v2637 = vlaneseq
    %v2638 = vshrl.u32 %v2637, 7
    %v2639 = vsub.s32 %v2636, %v2638
    %v2640 = vrot.slane %v2626, %v2639
    %v2641 = vcombine.low %v2578, %v2594
    %v2642 = vcombine.high %v2578, %v2594
    %v2644 = vunpack.c.l.s4 1934713408
    %v2645 = vunpack.c.0.s8 %v2644
    %v2646 = vlaneseq
    %v2647 = vshrl.u32 %v2646, 7
    %v2648 = vsub.s32 %v2645, %v2647
    %v2649 = vrot.slane %v2641, %v2648
    %v2651 = vunpack.c.l.s4 1934713408
    %v2652 = vunpack.c.0.s8 %v2651
    %v2653 = vlaneseq
    %v2654 = vshrl.u32 %v2653, 7
    %v2655 = vsub.s32 %v2652, %v2654
    %v2656 = vrot.slane %v2642, %v2655
    %v2657 = vcombine.low %v2602, %v2617
    %v2658 = vcombine.high %v2602, %v2617
    %v2660 = vunpack.c.l.s4 1934713408
    %v2661 = vunpack.c.0.s8 %v2660
    %v2662 = vlaneseq
    %v2663 = vshrl.u32 %v2662, 7
    %v2664 = vsub.s32 %v2661, %v2663
    %v2665 = vrot.slane %v2657, %v2664
    %v2667 = vunpack.c.l.s4 1934713408
    %v2668 = vunpack.c.0.s8 %v2667
    %v2669 = vlaneseq
    %v2670 = vshrl.u32 %v2669, 7
    %v2671 = vsub.s32 %v2668, %v2670
    %v2672 = vrot.slane %v2658, %v2671
    %v2673 = vcombine.low %v2609, %v2624
    %v2674 = vcombine.high %v2609, %v2624
    %v2676 = vunpack.c.l.s4 1934713408
    %v2677 = vunpack.c.0.s8 %v2676
    %v2678 = vlaneseq
    %v2679 = vshrl.u32 %v2678, 7
    %v2680 = vsub.s32 %v2677, %v2679
    %v2681 = vrot.slane %v2673, %v2680
    %v2683 = vunpack.c.l.s4 1934713408
    %v2684 = vunpack.c.0.s8 %v2683
    %v2685 = vlaneseq
    %v2686 = vshrl.u32 %v2685, 7
    %v2687 = vsub.s32 %v2684, %v2686
    %v2688 = vrot.slane %v2674, %v2687
    %v2689 = vcombine.low %v2633, %v2665
    %v2690 = vcombine.high %v2633, %v2665
    %v2691 = vcombine.low %v2640, %v2672
    %v2692 = vcombine.high %v2640, %v2672
    %v2693 = vcombine.low %v2649, %v2681
    %v2694 = vcombine.high %v2649, %v2681
    %v2695 = vcombine.low %v2656, %v2688
    %v2696 = vcombine.high %v2656, %v2688
    %v2697 = vcombine.low %v84, %v212
    %v2698 = vcombine.high %v84, %v212
    %v2700 = vunpack.c.l.s4 1983009808
    %v2701 = vunpack.c.0.s8 %v2700
    %v2702 = vlaneseq
    %v2703 = vshrl.u32 %v2702, 7
    %v2704 = vsub.s32 %v2701, %v2703
    %v2705 = vrot.slane %v2697, %v2704
    %v2707 = vunpack.c.l.s4 1983009808
    %v2708 = vunpack.c.0.s8 %v2707
    %v2709 = vlaneseq
    %v2710 = vshrl.u32 %v2709, 7
    %v2711 = vsub.s32 %v2708, %v2710
    %v2712 = vrot.slane %v2698, %v2711
    %v2713 = vcombine.low %v148, %v276
    %v2714 = vcombine.high %v148, %v276
    %v2716 = vunpack.c.l.s4 1983009808
    %v2717 = vunpack.c.0.s8 %v2716
    %v2718 = vlaneseq
    %v2719 = vshrl.u32 %v2718, 7
    %v2720 = vsub.s32 %v2717, %v2719
    %v2721 = vrot.slane %v2713, %v2720
    %v2723 = vunpack.c.l.s4 1983009808
    %v2724 = vunpack.c.0.s8 %v2723
    %v2725 = vlaneseq
    %v2726 = vshrl.u32 %v2725, 7
    %v2727 = vsub.s32 %v2724, %v2726
    %v2728 = vrot.slane %v2714, %v2727
    %v2729 = vcombine.high %v340, 0.0
    %v2731 = vunpack.c.l.s4 1983009808
    %v2732 = vunpack.c.0.s8 %v2731
    %v2733 = vlaneseq
    %v2734 = vshrl.u32 %v2733, 7
    %v2735 = vsub.s32 %v2732, %v2734
    %v2736 = vrot.slane %v340, %v2735
    %v2738 = vunpack.c.l.s4 1983009808
    %v2739 = vunpack.c.0.s8 %v2738
    %v2740 = vlaneseq
    %v2741 = vshrl.u32 %v2740, 7
    %v2742 = vsub.s32 %v2739, %v2741
    %v2743 = vrot.slane %v2729, %v2742
    %v2744 = vcombine.high %v404, 0.0
    %v2746 = vunpack.c.l.s4 1983009808
    %v2747 = vunpack.c.0.s8 %v2746
    %v2748 = vlaneseq
    %v2749 = vshrl.u32 %v2748, 7
    %v2750 = vsub.s32 %v2747, %v2749
    %v2751 = vrot.slane %v404, %v2750
    %v2753 = vunpack.c.l.s4 1983009808
    %v2754 = vunpack.c.0.s8 %v2753
    %v2755 = vlaneseq
    %v2756 = vshrl.u32 %v2755, 7
    %v2757 = vsub.s32 %v2754, %v2756
    %v2758 = vrot.slane %v2744, %v2757
    %v2759 = vcombine.low %v2705, %v2721
    %v2760 = vcombine.high %v2705, %v2721
    %v2762 = vunpack.c.l.s4 1934713408
    %v2763 = vunpack.c.0.s8 %v2762
    %v2764 = vlaneseq
    %v2765 = vshrl.u32 %v2764, 7
    %v2766 = vsub.s32 %v2763, %v2765
    %v2767 = vrot.slane %v2759, %v2766
    %v2769 = vunpack.c.l.s4 1934713408
    %v2770 = vunpack.c.0.s8 %v2769
    %v2771 = vlaneseq
    %v2772 = vshrl.u32 %v2771, 7
    %v2773 = vsub.s32 %v2770, %v2772
    %v2774 = vrot.slane %v2760, %v2773
    %v2775 = vcombine.low %v2712, %v2728
    %v2776 = vcombine.high %v2712, %v2728
    %v2778 = vunpack.c.l.s4 1934713408
    %v2779 = vunpack.c.0.s8 %v2778
    %v2780 = vlaneseq
    %v2781 = vshrl.u32 %v2780, 7
    %v2782 = vsub.s32 %v2779, %v2781
    %v2783 = vrot.slane %v2775, %v2782
    %v2785 = vunpack.c.l.s4 1934713408
    %v2786 = vunpack.c.0.s8 %v2785
    %v2787 = vlaneseq
    %v2788 = vshrl.u32 %v2787, 7
    %v2789 = vsub.s32 %v2786, %v2788
    %v2790 = vrot.slane %v2776, %v2789
    %v2791 = vcombine.low %v2736, %v2751
    %v2792 = vcombine.high %v2736, %v2751
    %v2794 = vunpack.c.l.s4 1934713408
    %v2795 = vunpack.c.0.s8 %v2794
    %v2796 = vlaneseq
    %v2797 = vshrl.u32 %v2796, 7
    %v2798 = vsub.s32 %v2795, %v2797
    %v2799 = vrot.slane %v2791, %v2798
    %v2801 = vunpack.c.l.s4 1934713408
    %v2802 = vunpack.c.0.s8 %v2801
    %v2803 = vlaneseq
    %v2804 = vshrl.u32 %v2803, 7
    %v2805 = vsub.s32 %v2802, %v2804
    %v2806 = vrot.slane %v2792, %v2805
    %v2807 = vcombine.low %v2743, %v2758
    %v2808 = vcombine.high %v2743, %v2758
    %v2810 = vunpack.c.l.s4 1934713408
    %v2811 = vunpack.c.0.s8 %v2810
    %v2812 = vlaneseq
    %v2813 = vshrl.u32 %v2812, 7
    %v2814 = vsub.s32 %v2811, %v2813
    %v2815 = vrot.slane %v2807, %v2814
    %v2817 = vunpack.c.l.s4 1934713408
    %v2818 = vunpack.c.0.s8 %v2817
    %v2819 = vlaneseq
    %v2820 = vshrl.u32 %v2819, 7
    %v2821 = vsub.s32 %v2818, %v2820
    %v2822 = vrot.slane %v2808, %v2821
    %v2823 = vcombine.low %v2767, %v2799
    %v2824 = vcombine.high %v2767, %v2799
    %v2825 = vcombine.low %v2774, %v2806
    %v2826 = vcombine.high %v2774, %v2806
    %v2827 = vcombine.low %v2783, %v2815
    %v2828 = vcombine.high %v2783, %v2815
    %v2829 = vcombine.low %v2790, %v2822
    %v2830 = vcombine.high %v2790, %v2822
    %v2831 = vcombine.low %v85, %v213
    %v2832 = vcombine.high %v85, %v213
    %v2834 = vunpack.c.l.s4 1983009808
    %v2835 = vunpack.c.0.s8 %v2834
    %v2836 = vlaneseq
    %v2837 = vshrl.u32 %v2836, 7
    %v2838 = vsub.s32 %v2835, %v2837
    %v2839 = vrot.slane %v2831, %v2838
    %v2841 = vunpack.c.l.s4 1983009808
    %v2842 = vunpack.c.0.s8 %v2841
    %v2843 = vlaneseq
    %v2844 = vshrl.u32 %v2843, 7
    %v2845 = vsub.s32 %v2842, %v2844
    %v2846 = vrot.slane %v2832, %v2845
    %v2847 = vcombine.low %v149, %v277
    %v2848 = vcombine.high %v149, %v277
    %v2850 = vunpack.c.l.s4 1983009808
    %v2851 = vunpack.c.0.s8 %v2850
    %v2852 = vlaneseq
    %v2853 = vshrl.u32 %v2852, 7
    %v2854 = vsub.s32 %v2851, %v2853
    %v2855 = vrot.slane %v2847, %v2854
    %v2857 = vunpack.c.l.s4 1983009808
    %v2858 = vunpack.c.0.s8 %v2857
    %v2859 = vlaneseq
    %v2860 = vshrl.u32 %v2859, 7
    %v2861 = vsub.s32 %v2858, %v2860
    %v2862 = vrot.slane %v2848, %v2861
    %v2863 = vcombine.high %v341, 0.0
    %v2865 = vunpack.c.l.s4 1983009808
    %v2866 = vunpack.c.0.s8 %v2865
    %v2867 = vlaneseq
    %v2868 = vshrl.u32 %v2867, 7
    %v2869 = vsub.s32 %v2866, %v2868
    %v2870 = vrot.slane %v341, %v2869
    %v2872 = vunpack.c.l.s4 1983009808
    %v2873 = vunpack.c.0.s8 %v2872
    %v2874 = vlaneseq
    %v2875 = vshrl.u32 %v2874, 7
    %v2876 = vsub.s32 %v2873, %v2875
    %v2877 = vrot.slane %v2863, %v2876
    %v2878 = vcombine.high %v405, 0.0
    %v2880 = vunpack.c.l.s4 1983009808
    %v2881 = vunpack.c.0.s8 %v2880
    %v2882 = vlaneseq
    %v2883 = vshrl.u32 %v2882, 7
    %v2884 = vsub.s32 %v2881, %v2883
    %v2885 = vrot.slane %v405, %v2884
    %v2887 = vunpack.c.l.s4 1983009808
    %v2888 = vunpack.c.0.s8 %v2887
    %v2889 = vlaneseq
    %v2890 = vshrl.u32 %v2889, 7
    %v2891 = vsub.s32 %v2888, %v2890
    %v2892 = vrot.slane %v2878, %v2891
    %v2893 = vcombine.low %v2839, %v2855
    %v2894 = vcombine.high %v2839, %v2855
    %v2896 = vunpack.c.l.s4 1934713408
    %v2897 = vunpack.c.0.s8 %v2896
    %v2898 = vlaneseq
    %v2899 = vshrl.u32 %v2898, 7
    %v2900 = vsub.s32 %v2897, %v2899
    %v2901 = vrot.slane %v2893, %v2900
    %v2903 = vunpack.c.l.s4 1934713408
    %v2904 = vunpack.c.0.s8 %v2903
    %v2905 = vlaneseq
    %v2906 = vshrl.u32 %v2905, 7
    %v2907 = vsub.s32 %v2904, %v2906
    %v2908 = vrot.slane %v2894, %v2907
    %v2909 = vcombine.low %v2846, %v2862
    %v2910 = vcombine.high %v2846, %v2862
    %v2912 = vunpack.c.l.s4 1934713408
    %v2913 = vunpack.c.0.s8 %v2912
    %v2914 = vlaneseq
    %v2915 = vshrl.u32 %v2914, 7
    %v2916 = vsub.s32 %v2913, %v2915
    %v2917 = vrot.slane %v2909, %v2916
    %v2919 = vunpack.c.l.s4 1934713408
    %v2920 = vunpack.c.0.s8 %v2919
    %v2921 = vlaneseq
    %v2922 = vshrl.u32 %v2921, 7
    %v2923 = vsub.s32 %v2920, %v2922
    %v2924 = vrot.slane %v2910, %v2923
    %v2925 = vcombine.low %v2870, %v2885
    %v2926 = vcombine.high %v2870, %v2885
    %v2928 = vunpack.c.l.s4 1934713408
    %v2929 = vunpack.c.0.s8 %v2928
    %v2930 = vlaneseq
    %v2931 = vshrl.u32 %v2930, 7
    %v2932 = vsub.s32 %v2929, %v2931
    %v2933 = vrot.slane %v2925, %v2932
    %v2935 = vunpack.c.l.s4 1934713408
    %v2936 = vunpack.c.0.s8 %v2935
    %v2937 = vlaneseq
    %v2938 = vshrl.u32 %v2937, 7
    %v2939 = vsub.s32 %v2936, %v2938
    %v2940 = vrot.slane %v2926, %v2939
    %v2941 = vcombine.low %v2877, %v2892
    %v2942 = vcombine.high %v2877, %v2892
    %v2944 = vunpack.c.l.s4 1934713408
    %v2945 = vunpack.c.0.s8 %v2944
    %v2946 = vlaneseq
    %v2947 = vshrl.u32 %v2946, 7
    %v2948 = vsub.s32 %v2945, %v2947
    %v2949 = vrot.slane %v2941, %v2948
    %v2951 = vunpack.c.l.s4 1934713408
    %v2952 = vunpack.c.0.s8 %v2951
    %v2953 = vlaneseq
    %v2954 = vshrl.u32 %v2953, 7
    %v2955 = vsub.s32 %v2952, %v2954
    %v2956 = vrot.slane %v2942, %v2955
    %v2957 = vcombine.low %v2901, %v2933
    %v2958 = vcombine.high %v2901, %v2933
    %v2959 = vcombine.low %v2908, %v2940
    %v2960 = vcombine.high %v2908, %v2940
    %v2961 = vcombine.low %v2917, %v2949
    %v2962 = vcombine.high %v2917, %v2949
    %v2963 = vcombine.low %v2924, %v2956
    %v2964 = vcombine.high %v2924, %v2956
    %v2965 = vcombine.low %v86, %v214
    %v2966 = vcombine.high %v86, %v214
    %v2968 = vunpack.c.l.s4 1983009808
    %v2969 = vunpack.c.0.s8 %v2968
    %v2970 = vlaneseq
    %v2971 = vshrl.u32 %v2970, 7
    %v2972 = vsub.s32 %v2969, %v2971
    %v2973 = vrot.slane %v2965, %v2972
    %v2975 = vunpack.c.l.s4 1983009808
    %v2976 = vunpack.c.0.s8 %v2975
    %v2977 = vlaneseq
    %v2978 = vshrl.u32 %v2977, 7
    %v2979 = vsub.s32 %v2976, %v2978
    %v2980 = vrot.slane %v2966, %v2979
    %v2981 = vcombine.low %v150, %v278
    %v2982 = vcombine.high %v150, %v278
    %v2984 = vunpack.c.l.s4 1983009808
    %v2985 = vunpack.c.0.s8 %v2984
    %v2986 = vlaneseq
    %v2987 = vshrl.u32 %v2986, 7
    %v2988 = vsub.s32 %v2985, %v2987
    %v2989 = vrot.slane %v2981, %v2988
    %v2991 = vunpack.c.l.s4 1983009808
    %v2992 = vunpack.c.0.s8 %v2991
    %v2993 = vlaneseq
    %v2994 = vshrl.u32 %v2993, 7
    %v2995 = vsub.s32 %v2992, %v2994
    %v2996 = vrot.slane %v2982, %v2995
    %v2997 = vcombine.high %v342, 0.0
    %v2999 = vunpack.c.l.s4 1983009808
    %v3000 = vunpack.c.0.s8 %v2999
    %v3001 = vlaneseq
    %v3002 = vshrl.u32 %v3001, 7
    %v3003 = vsub.s32 %v3000, %v3002
    %v3004 = vrot.slane %v342, %v3003
    %v3006 = vunpack.c.l.s4 1983009808
    %v3007 = vunpack.c.0.s8 %v3006
    %v3008 = vlaneseq
    %v3009 = vshrl.u32 %v3008, 7
    %v3010 = vsub.s32 %v3007, %v3009
    %v3011 = vrot.slane %v2997, %v3010
    %v3012 = vcombine.high %v406, 0.0
    %v3014 = vunpack.c.l.s4 1983009808
    %v3015 = vunpack.c.0.s8 %v3014
    %v3016 = vlaneseq
    %v3017 = vshrl.u32 %v3016, 7
    %v3018 = vsub.s32 %v3015, %v3017
    %v3019 = vrot.slane %v406, %v3018
    %v3021 = vunpack.c.l.s4 1983009808
    %v3022 = vunpack.c.0.s8 %v3021
    %v3023 = vlaneseq
    %v3024 = vshrl.u32 %v3023, 7
    %v3025 = vsub.s32 %v3022, %v3024
    %v3026 = vrot.slane %v3012, %v3025
    %v3027 = vcombine.low %v2973, %v2989
    %v3028 = vcombine.high %v2973, %v2989
    %v3030 = vunpack.c.l.s4 1934713408
    %v3031 = vunpack.c.0.s8 %v3030
    %v3032 = vlaneseq
    %v3033 = vshrl.u32 %v3032, 7
    %v3034 = vsub.s32 %v3031, %v3033
    %v3035 = vrot.slane %v3027, %v3034
    %v3037 = vunpack.c.l.s4 1934713408
    %v3038 = vunpack.c.0.s8 %v3037
    %v3039 = vlaneseq
    %v3040 = vshrl.u32 %v3039, 7
    %v3041 = vsub.s32 %v3038, %v3040
    %v3042 = vrot.slane %v3028, %v3041
    %v3043 = vcombine.low %v2980, %v2996
    %v3044 = vcombine.high %v2980, %v2996
    %v3046 = vunpack.c.l.s4 1934713408
    %v3047 = vunpack.c.0.s8 %v3046
    %v3048 = vlaneseq
    %v3049 = vshrl.u32 %v3048, 7
    %v3050 = vsub.s32 %v3047, %v3049
    %v3051 = vrot.slane %v3043, %v3050
    %v3053 = vunpack.c.l.s4 1934713408
    %v3054 = vunpack.c.0.s8 %v3053
    %v3055 = vlaneseq
    %v3056 = vshrl.u32 %v3055, 7
    %v3057 = vsub.s32 %v3054, %v3056
    %v3058 = vrot.slane %v3044, %v3057
    %v3059 = vcombine.low %v3004, %v3019
    %v3060 = vcombine.high %v3004, %v3019
    %v3062 = vunpack.c.l.s4 1934713408
    %v3063 = vunpack.c.0.s8 %v3062
    %v3064 = vlaneseq
    %v3065 = vshrl.u32 %v3064, 7
    %v3066 = vsub.s32 %v3063, %v3065
    %v3067 = vrot.slane %v3059, %v3066
    %v3069 = vunpack.c.l.s4 1934713408
    %v3070 = vunpack.c.0.s8 %v3069
    %v3071 = vlaneseq
    %v3072 = vshrl.u32 %v3071, 7
    %v3073 = vsub.s32 %v3070, %v3072
    %v3074 = vrot.slane %v3060, %v3073
    %v3075 = vcombine.low %v3011, %v3026
    %v3076 = vcombine.high %v3011, %v3026
    %v3078 = vunpack.c.l.s4 1934713408
    %v3079 = vunpack.c.0.s8 %v3078
    %v3080 = vlaneseq
    %v3081 = vshrl.u32 %v3080, 7
    %v3082 = vsub.s32 %v3079, %v3081
    %v3083 = vrot.slane %v3075, %v3082
    %v3085 = vunpack.c.l.s4 1934713408
    %v3086 = vunpack.c.0.s8 %v3085
    %v3087 = vlaneseq
    %v3088 = vshrl.u32 %v3087, 7
    %v3089 = vsub.s32 %v3086, %v3088
    %v3090 = vrot.slane %v3076, %v3089
    %v3091 = vcombine.low %v3035, %v3067
    %v3092 = vcombine.high %v3035, %v3067
    %v3093 = vcombine.low %v3042, %v3074
    %v3094 = vcombine.high %v3042, %v3074
    %v3095 = vcombine.low %v3051, %v3083
    %v3096 = vcombine.high %v3051, %v3083
    %v3097 = vcombine.low %v3058, %v3090
    %v3098 = vcombine.high %v3058, %v3090
    %v3099 = vcombine.low %v87, %v215
    %v3100 = vcombine.high %v87, %v215
    %v3102 = vunpack.c.l.s4 1983009808
    %v3103 = vunpack.c.0.s8 %v3102
    %v3104 = vlaneseq
    %v3105 = vshrl.u32 %v3104, 7
    %v3106 = vsub.s32 %v3103, %v3105
    %v3107 = vrot.slane %v3099, %v3106
    %v3109 = vunpack.c.l.s4 1983009808
    %v3110 = vunpack.c.0.s8 %v3109
    %v3111 = vlaneseq
    %v3112 = vshrl.u32 %v3111, 7
    %v3113 = vsub.s32 %v3110, %v3112
    %v3114 = vrot.slane %v3100, %v3113
    %v3115 = vcombine.low %v151, %v279
    %v3116 = vcombine.high %v151, %v279
    %v3118 = vunpack.c.l.s4 1983009808
    %v3119 = vunpack.c.0.s8 %v3118
    %v3120 = vlaneseq
    %v3121 = vshrl.u32 %v3120, 7
    %v3122 = vsub.s32 %v3119, %v3121
    %v3123 = vrot.slane %v3115, %v3122
    %v3125 = vunpack.c.l.s4 1983009808
    %v3126 = vunpack.c.0.s8 %v3125
    %v3127 = vlaneseq
    %v3128 = vshrl.u32 %v3127, 7
    %v3129 = vsub.s32 %v3126, %v3128
    %v3130 = vrot.slane %v3116, %v3129
    %v3131 = vcombine.high %v343, 0.0
    %v3133 = vunpack.c.l.s4 1983009808
    %v3134 = vunpack.c.0.s8 %v3133
    %v3135 = vlaneseq
    %v3136 = vshrl.u32 %v3135, 7
    %v3137 = vsub.s32 %v3134, %v3136
    %v3138 = vrot.slane %v343, %v3137
    %v3140 = vunpack.c.l.s4 1983009808
    %v3141 = vunpack.c.0.s8 %v3140
    %v3142 = vlaneseq
    %v3143 = vshrl.u32 %v3142, 7
    %v3144 = vsub.s32 %v3141, %v3143
    %v3145 = vrot.slane %v3131, %v3144
    %v3146 = vcombine.high %v407, 0.0
    %v3148 = vunpack.c.l.s4 1983009808
    %v3149 = vunpack.c.0.s8 %v3148
    %v3150 = vlaneseq
    %v3151 = vshrl.u32 %v3150, 7
    %v3152 = vsub.s32 %v3149, %v3151
    %v3153 = vrot.slane %v407, %v3152
    %v3155 = vunpack.c.l.s4 1983009808
    %v3156 = vunpack.c.0.s8 %v3155
    %v3157 = vlaneseq
    %v3158 = vshrl.u32 %v3157, 7
    %v3159 = vsub.s32 %v3156, %v3158
    %v3160 = vrot.slane %v3146, %v3159
    %v3161 = vcombine.low %v3107, %v3123
    %v3162 = vcombine.high %v3107, %v3123
    %v3164 = vunpack.c.l.s4 1934713408
    %v3165 = vunpack.c.0.s8 %v3164
    %v3166 = vlaneseq
    %v3167 = vshrl.u32 %v3166, 7
    %v3168 = vsub.s32 %v3165, %v3167
    %v3169 = vrot.slane %v3161, %v3168
    %v3171 = vunpack.c.l.s4 1934713408
    %v3172 = vunpack.c.0.s8 %v3171
    %v3173 = vlaneseq
    %v3174 = vshrl.u32 %v3173, 7
    %v3175 = vsub.s32 %v3172, %v3174
    %v3176 = vrot.slane %v3162, %v3175
    %v3177 = vcombine.low %v3114, %v3130
    %v3178 = vcombine.high %v3114, %v3130
    %v3180 = vunpack.c.l.s4 1934713408
    %v3181 = vunpack.c.0.s8 %v3180
    %v3182 = vlaneseq
    %v3183 = vshrl.u32 %v3182, 7
    %v3184 = vsub.s32 %v3181, %v3183
    %v3185 = vrot.slane %v3177, %v3184
    %v3187 = vunpack.c.l.s4 1934713408
    %v3188 = vunpack.c.0.s8 %v3187
    %v3189 = vlaneseq
    %v3190 = vshrl.u32 %v3189, 7
    %v3191 = vsub.s32 %v3188, %v3190
    %v3192 = vrot.slane %v3178, %v3191
    %v3193 = vcombine.low %v3138, %v3153
    %v3194 = vcombine.high %v3138, %v3153
    %v3196 = vunpack.c.l.s4 1934713408
    %v3197 = vunpack.c.0.s8 %v3196
    %v3198 = vlaneseq
    %v3199 = vshrl.u32 %v3198, 7
    %v3200 = vsub.s32 %v3197, %v3199
    %v3201 = vrot.slane %v3193, %v3200
    %v3203 = vunpack.c.l.s4 1934713408
    %v3204 = vunpack.c.0.s8 %v3203
    %v3205 = vlaneseq
    %v3206 = vshrl.u32 %v3205, 7
    %v3207 = vsub.s32 %v3204, %v3206
    %v3208 = vrot.slane %v3194, %v3207
    %v3209 = vcombine.low %v3145, %v3160
    %v3210 = vcombine.high %v3145, %v3160
    %v3212 = vunpack.c.l.s4 1934713408
    %v3213 = vunpack.c.0.s8 %v3212
    %v3214 = vlaneseq
    %v3215 = vshrl.u32 %v3214, 7
    %v3216 = vsub.s32 %v3213, %v3215
    %v3217 = vrot.slane %v3209, %v3216
    %v3219 = vunpack.c.l.s4 1934713408
    %v3220 = vunpack.c.0.s8 %v3219
    %v3221 = vlaneseq
    %v3222 = vshrl.u32 %v3221, 7
    %v3223 = vsub.s32 %v3220, %v3222
    %v3224 = vrot.slane %v3210, %v3223
    %v3225 = vcombine.low %v3169, %v3201
    %v3226 = vcombine.high %v3169, %v3201
    %v3227 = vcombine.low %v3176, %v3208
    %v3228 = vcombine.high %v3176, %v3208
    %v3229 = vcombine.low %v3185, %v3217
    %v3230 = vcombine.high %v3185, %v3217
    %v3231 = vcombine.low %v3192, %v3224
    %v3232 = vcombine.high %v3192, %v3224
    %v3233 = vcombine.low %v88, %v216
    %v3234 = vcombine.high %v88, %v216
    %v3236 = vunpack.c.l.s4 1983009808
    %v3237 = vunpack.c.0.s8 %v3236
    %v3238 = vlaneseq
    %v3239 = vshrl.u32 %v3238, 7
    %v3240 = vsub.s32 %v3237, %v3239
    %v3241 = vrot.slane %v3233, %v3240
    %v3243 = vunpack.c.l.s4 1983009808
    %v3244 = vunpack.c.0.s8 %v3243
    %v3245 = vlaneseq
    %v3246 = vshrl.u32 %v3245, 7
    %v3247 = vsub.s32 %v3244, %v3246
    %v3248 = vrot.slane %v3234, %v3247
    %v3249 = vcombine.low %v152, %v280
    %v3250 = vcombine.high %v152, %v280
    %v3252 = vunpack.c.l.s4 1983009808
    %v3253 = vunpack.c.0.s8 %v3252
    %v3254 = vlaneseq
    %v3255 = vshrl.u32 %v3254, 7
    %v3256 = vsub.s32 %v3253, %v3255
    %v3257 = vrot.slane %v3249, %v3256
    %v3259 = vunpack.c.l.s4 1983009808
    %v3260 = vunpack.c.0.s8 %v3259
    %v3261 = vlaneseq
    %v3262 = vshrl.u32 %v3261, 7
    %v3263 = vsub.s32 %v3260, %v3262
    %v3264 = vrot.slane %v3250, %v3263
    %v3265 = vcombine.high %v344, 0.0
    %v3267 = vunpack.c.l.s4 1983009808
    %v3268 = vunpack.c.0.s8 %v3267
    %v3269 = vlaneseq
    %v3270 = vshrl.u32 %v3269, 7
    %v3271 = vsub.s32 %v3268, %v3270
    %v3272 = vrot.slane %v344, %v3271
    %v3274 = vunpack.c.l.s4 1983009808
    %v3275 = vunpack.c.0.s8 %v3274
    %v3276 = vlaneseq
    %v3277 = vshrl.u32 %v3276, 7
    %v3278 = vsub.s32 %v3275, %v3277
    %v3279 = vrot.slane %v3265, %v3278
    %v3280 = vcombine.high %v408, 0.0
    %v3282 = vunpack.c.l.s4 1983009808
    %v3283 = vunpack.c.0.s8 %v3282
    %v3284 = vlaneseq
    %v3285 = vshrl.u32 %v3284, 7
    %v3286 = vsub.s32 %v3283, %v3285
    %v3287 = vrot.slane %v408, %v3286
    %v3289 = vunpack.c.l.s4 1983009808
    %v3290 = vunpack.c.0.s8 %v3289
    %v3291 = vlaneseq
    %v3292 = vshrl.u32 %v3291, 7
    %v3293 = vsub.s32 %v3290, %v3292
    %v3294 = vrot.slane %v3280, %v3293
    %v3295 = vcombine.low %v3241, %v3257
    %v3296 = vcombine.high %v3241, %v3257
    %v3298 = vunpack.c.l.s4 1934713408
    %v3299 = vunpack.c.0.s8 %v3298
    %v3300 = vlaneseq
    %v3301 = vshrl.u32 %v3300, 7
    %v3302 = vsub.s32 %v3299, %v3301
    %v3303 = vrot.slane %v3295, %v3302
    %v3305 = vunpack.c.l.s4 1934713408
    %v3306 = vunpack.c.0.s8 %v3305
    %v3307 = vlaneseq
    %v3308 = vshrl.u32 %v3307, 7
    %v3309 = vsub.s32 %v3306, %v3308
    %v3310 = vrot.slane %v3296, %v3309
    %v3311 = vcombine.low %v3248, %v3264
    %v3312 = vcombine.high %v3248, %v3264
    %v3314 = vunpack.c.l.s4 1934713408
    %v3315 = vunpack.c.0.s8 %v3314
    %v3316 = vlaneseq
    %v3317 = vshrl.u32 %v3316, 7
    %v3318 = vsub.s32 %v3315, %v3317
    %v3319 = vrot.slane %v3311, %v3318
    %v3321 = vunpack.c.l.s4 1934713408
    %v3322 = vunpack.c.0.s8 %v3321
    %v3323 = vlaneseq
    %v3324 = vshrl.u32 %v3323, 7
    %v3325 = vsub.s32 %v3322, %v3324
    %v3326 = vrot.slane %v3312, %v3325
    %v3327 = vcombine.low %v3272, %v3287
    %v3328 = vcombine.high %v3272, %v3287
    %v3330 = vunpack.c.l.s4 1934713408
    %v3331 = vunpack.c.0.s8 %v3330
    %v3332 = vlaneseq
    %v3333 = vshrl.u32 %v3332, 7
    %v3334 = vsub.s32 %v3331, %v3333
    %v3335 = vrot.slane %v3327, %v3334
    %v3337 = vunpack.c.l.s4 1934713408
    %v3338 = vunpack.c.0.s8 %v3337
    %v3339 = vlaneseq
    %v3340 = vshrl.u32 %v3339, 7
    %v3341 = vsub.s32 %v3338, %v3340
    %v3342 = vrot.slane %v3328, %v3341
    %v3343 = vcombine.low %v3279, %v3294
    %v3344 = vcombine.high %v3279, %v3294
    %v3346 = vunpack.c.l.s4 1934713408
    %v3347 = vunpack.c.0.s8 %v3346
    %v3348 = vlaneseq
    %v3349 = vshrl.u32 %v3348, 7
    %v3350 = vsub.s32 %v3347, %v3349
    %v3351 = vrot.slane %v3343, %v3350
    %v3353 = vunpack.c.l.s4 1934713408
    %v3354 = vunpack.c.0.s8 %v3353
    %v3355 = vlaneseq
    %v3356 = vshrl.u32 %v3355, 7
    %v3357 = vsub.s32 %v3354, %v3356
    %v3358 = vrot.slane %v3344, %v3357
    %v3359 = vcombine.low %v3303, %v3335
    %v3360 = vcombine.high %v3303, %v3335
    %v3361 = vcombine.low %v3310, %v3342
    %v3362 = vcombine.high %v3310, %v3342
    %v3363 = vcombine.low %v3319, %v3351
    %v3364 = vcombine.high %v3319, %v3351
    %v3365 = vcombine.low %v3326, %v3358
    %v3366 = vcombine.high %v3326, %v3358
    %v3367 = vcombine.low %v89, %v217
    %v3368 = vcombine.high %v89, %v217
    %v3370 = vunpack.c.l.s4 1983009808
    %v3371 = vunpack.c.0.s8 %v3370
    %v3372 = vlaneseq
    %v3373 = vshrl.u32 %v3372, 7
    %v3374 = vsub.s32 %v3371, %v3373
    %v3375 = vrot.slane %v3367, %v3374
    %v3377 = vunpack.c.l.s4 1983009808
    %v3378 = vunpack.c.0.s8 %v3377
    %v3379 = vlaneseq
    %v3380 = vshrl.u32 %v3379, 7
    %v3381 = vsub.s32 %v3378, %v3380
    %v3382 = vrot.slane %v3368, %v3381
    %v3383 = vcombine.low %v153, %v281
    %v3384 = vcombine.high %v153, %v281
    %v3386 = vunpack.c.l.s4 1983009808
    %v3387 = vunpack.c.0.s8 %v3386
    %v3388 = vlaneseq
    %v3389 = vshrl.u32 %v3388, 7
    %v3390 = vsub.s32 %v3387, %v3389
    %v3391 = vrot.slane %v3383, %v3390
    %v3393 = vunpack.c.l.s4 1983009808
    %v3394 = vunpack.c.0.s8 %v3393
    %v3395 = vlaneseq
    %v3396 = vshrl.u32 %v3395, 7
    %v3397 = vsub.s32 %v3394, %v3396
    %v3398 = vrot.slane %v3384, %v3397
    %v3399 = vcombine.high %v345, 0.0
    %v3401 = vunpack.c.l.s4 1983009808
    %v3402 = vunpack.c.0.s8 %v3401
    %v3403 = vlaneseq
    %v3404 = vshrl.u32 %v3403, 7
    %v3405 = vsub.s32 %v3402, %v3404
    %v3406 = vrot.slane %v345, %v3405
    %v3408 = vunpack.c.l.s4 1983009808
    %v3409 = vunpack.c.0.s8 %v3408
    %v3410 = vlaneseq
    %v3411 = vshrl.u32 %v3410, 7
    %v3412 = vsub.s32 %v3409, %v3411
    %v3413 = vrot.slane %v3399, %v3412
    %v3414 = vcombine.high %v409, 0.0
    %v3416 = vunpack.c.l.s4 1983009808
    %v3417 = vunpack.c.0.s8 %v3416
    %v3418 = vlaneseq
    %v3419 = vshrl.u32 %v3418, 7
    %v3420 = vsub.s32 %v3417, %v3419
    %v3421 = vrot.slane %v409, %v3420
    %v3423 = vunpack.c.l.s4 1983009808
    %v3424 = vunpack.c.0.s8 %v3423
    %v3425 = vlaneseq
    %v3426 = vshrl.u32 %v3425, 7
    %v3427 = vsub.s32 %v3424, %v3426
    %v3428 = vrot.slane %v3414, %v3427
    %v3429 = vcombine.low %v3375, %v3391
    %v3430 = vcombine.high %v3375, %v3391
    %v3432 = vunpack.c.l.s4 1934713408
    %v3433 = vunpack.c.0.s8 %v3432
    %v3434 = vlaneseq
    %v3435 = vshrl.u32 %v3434, 7
    %v3436 = vsub.s32 %v3433, %v3435
    %v3437 = vrot.slane %v3429, %v3436
    %v3439 = vunpack.c.l.s4 1934713408
    %v3440 = vunpack.c.0.s8 %v3439
    %v3441 = vlaneseq
    %v3442 = vshrl.u32 %v3441, 7
    %v3443 = vsub.s32 %v3440, %v3442
    %v3444 = vrot.slane %v3430, %v3443
    %v3445 = vcombine.low %v3382, %v3398
    %v3446 = vcombine.high %v3382, %v3398
    %v3448 = vunpack.c.l.s4 1934713408
    %v3449 = vunpack.c.0.s8 %v3448
    %v3450 = vlaneseq
    %v3451 = vshrl.u32 %v3450, 7
    %v3452 = vsub.s32 %v3449, %v3451
    %v3453 = vrot.slane %v3445, %v3452
    %v3455 = vunpack.c.l.s4 1934713408
    %v3456 = vunpack.c.0.s8 %v3455
    %v3457 = vlaneseq
    %v3458 = vshrl.u32 %v3457, 7
    %v3459 = vsub.s32 %v3456, %v3458
    %v3460 = vrot.slane %v3446, %v3459
    %v3461 = vcombine.low %v3406, %v3421
    %v3462 = vcombine.high %v3406, %v3421
    %v3464 = vunpack.c.l.s4 1934713408
    %v3465 = vunpack.c.0.s8 %v3464
    %v3466 = vlaneseq
    %v3467 = vshrl.u32 %v3466, 7
    %v3468 = vsub.s32 %v3465, %v3467
    %v3469 = vrot.slane %v3461, %v3468
    %v3471 = vunpack.c.l.s4 1934713408
    %v3472 = vunpack.c.0.s8 %v3471
    %v3473 = vlaneseq
    %v3474 = vshrl.u32 %v3473, 7
    %v3475 = vsub.s32 %v3472, %v3474
    %v3476 = vrot.slane %v3462, %v3475
    %v3477 = vcombine.low %v3413, %v3428
    %v3478 = vcombine.high %v3413, %v3428
    %v3480 = vunpack.c.l.s4 1934713408
    %v3481 = vunpack.c.0.s8 %v3480
    %v3482 = vlaneseq
    %v3483 = vshrl.u32 %v3482, 7
    %v3484 = vsub.s32 %v3481, %v3483
    %v3485 = vrot.slane %v3477, %v3484
    %v3487 = vunpack.c.l.s4 1934713408
    %v3488 = vunpack.c.0.s8 %v3487
    %v3489 = vlaneseq
    %v3490 = vshrl.u32 %v3489, 7
    %v3491 = vsub.s32 %v3488, %v3490
    %v3492 = vrot.slane %v3478, %v3491
    %v3493 = vcombine.low %v3437, %v3469
    %v3494 = vcombine.high %v3437, %v3469
    %v3495 = vcombine.low %v3444, %v3476
    %v3496 = vcombine.high %v3444, %v3476
    %v3497 = vcombine.low %v3453, %v3485
    %v3498 = vcombine.high %v3453, %v3485
    %v3499 = vcombine.low %v3460, %v3492
    %v3500 = vcombine.high %v3460, %v3492
    %v3501 = vcombine.low %v90, %v218
    %v3502 = vcombine.high %v90, %v218
    %v3504 = vunpack.c.l.s4 1983009808
    %v3505 = vunpack.c.0.s8 %v3504
    %v3506 = vlaneseq
    %v3507 = vshrl.u32 %v3506, 7
    %v3508 = vsub.s32 %v3505, %v3507
    %v3509 = vrot.slane %v3501, %v3508
    %v3511 = vunpack.c.l.s4 1983009808
    %v3512 = vunpack.c.0.s8 %v3511
    %v3513 = vlaneseq
    %v3514 = vshrl.u32 %v3513, 7
    %v3515 = vsub.s32 %v3512, %v3514
    %v3516 = vrot.slane %v3502, %v3515
    %v3517 = vcombine.low %v154, %v282
    %v3518 = vcombine.high %v154, %v282
    %v3520 = vunpack.c.l.s4 1983009808
    %v3521 = vunpack.c.0.s8 %v3520
    %v3522 = vlaneseq
    %v3523 = vshrl.u32 %v3522, 7
    %v3524 = vsub.s32 %v3521, %v3523
    %v3525 = vrot.slane %v3517, %v3524
    %v3527 = vunpack.c.l.s4 1983009808
    %v3528 = vunpack.c.0.s8 %v3527
    %v3529 = vlaneseq
    %v3530 = vshrl.u32 %v3529, 7
    %v3531 = vsub.s32 %v3528, %v3530
    %v3532 = vrot.slane %v3518, %v3531
    %v3533 = vcombine.high %v346, 0.0
    %v3535 = vunpack.c.l.s4 1983009808
    %v3536 = vunpack.c.0.s8 %v3535
    %v3537 = vlaneseq
    %v3538 = vshrl.u32 %v3537, 7
    %v3539 = vsub.s32 %v3536, %v3538
    %v3540 = vrot.slane %v346, %v3539
    %v3542 = vunpack.c.l.s4 1983009808
    %v3543 = vunpack.c.0.s8 %v3542
    %v3544 = vlaneseq
    %v3545 = vshrl.u32 %v3544, 7
    %v3546 = vsub.s32 %v3543, %v3545
    %v3547 = vrot.slane %v3533, %v3546
    %v3548 = vcombine.high %v410, 0.0
    %v3550 = vunpack.c.l.s4 1983009808
    %v3551 = vunpack.c.0.s8 %v3550
    %v3552 = vlaneseq
    %v3553 = vshrl.u32 %v3552, 7
    %v3554 = vsub.s32 %v3551, %v3553
    %v3555 = vrot.slane %v410, %v3554
    %v3557 = vunpack.c.l.s4 1983009808
    %v3558 = vunpack.c.0.s8 %v3557
    %v3559 = vlaneseq
    %v3560 = vshrl.u32 %v3559, 7
    %v3561 = vsub.s32 %v3558, %v3560
    %v3562 = vrot.slane %v3548, %v3561
    %v3563 = vcombine.low %v3509, %v3525
    %v3564 = vcombine.high %v3509, %v3525
    %v3566 = vunpack.c.l.s4 1934713408
    %v3567 = vunpack.c.0.s8 %v3566
    %v3568 = vlaneseq
    %v3569 = vshrl.u32 %v3568, 7
    %v3570 = vsub.s32 %v3567, %v3569
    %v3571 = vrot.slane %v3563, %v3570
    %v3573 = vunpack.c.l.s4 1934713408
    %v3574 = vunpack.c.0.s8 %v3573
    %v3575 = vlaneseq
    %v3576 = vshrl.u32 %v3575, 7
    %v3577 = vsub.s32 %v3574, %v3576
    %v3578 = vrot.slane %v3564, %v3577
    %v3579 = vcombine.low %v3516, %v3532
    %v3580 = vcombine.high %v3516, %v3532
    %v3582 = vunpack.c.l.s4 1934713408
    %v3583 = vunpack.c.0.s8 %v3582
    %v3584 = vlaneseq
    %v3585 = vshrl.u32 %v3584, 7
    %v3586 = vsub.s32 %v3583, %v3585
    %v3587 = vrot.slane %v3579, %v3586
    %v3589 = vunpack.c.l.s4 1934713408
    %v3590 = vunpack.c.0.s8 %v3589
    %v3591 = vlaneseq
    %v3592 = vshrl.u32 %v3591, 7
    %v3593 = vsub.s32 %v3590, %v3592
    %v3594 = vrot.slane %v3580, %v3593
    %v3595 = vcombine.low %v3540, %v3555
    %v3596 = vcombine.high %v3540, %v3555
    %v3598 = vunpack.c.l.s4 1934713408
    %v3599 = vunpack.c.0.s8 %v3598
    %v3600 = vlaneseq
    %v3601 = vshrl.u32 %v3600, 7
    %v3602 = vsub.s32 %v3599, %v3601
    %v3603 = vrot.slane %v3595, %v3602
    %v3605 = vunpack.c.l.s4 1934713408
    %v3606 = vunpack.c.0.s8 %v3605
    %v3607 = vlaneseq
    %v3608 = vshrl.u32 %v3607, 7
    %v3609 = vsub.s32 %v3606, %v3608
    %v3610 = vrot.slane %v3596, %v3609
    %v3611 = vcombine.low %v3547, %v3562
    %v3612 = vcombine.high %v3547, %v3562
    %v3614 = vunpack.c.l.s4 1934713408
    %v3615 = vunpack.c.0.s8 %v3614
    %v3616 = vlaneseq
    %v3617 = vshrl.u32 %v3616, 7
    %v3618 = vsub.s32 %v3615, %v3617
    %v3619 = vrot.slane %v3611, %v3618
    %v3621 = vunpack.c.l.s4 1934713408
    %v3622 = vunpack.c.0.s8 %v3621
    %v3623 = vlaneseq
    %v3624 = vshrl.u32 %v3623, 7
    %v3625 = vsub.s32 %v3622, %v3624
    %v3626 = vrot.slane %v3612, %v3625
    %v3627 = vcombine.low %v3571, %v3603
    %v3628 = vcombine.high %v3571, %v3603
    %v3629 = vcombine.low %v3578, %v3610
    %v3630 = vcombine.high %v3578, %v3610
    %v3631 = vcombine.low %v3587, %v3619
    %v3632 = vcombine.high %v3587, %v3619
    %v3633 = vcombine.low %v3594, %v3626
    %v3634 = vcombine.high %v3594, %v3626
    %v3635 = vcombine.low %v91, %v219
    %v3636 = vcombine.high %v91, %v219
    %v3638 = vunpack.c.l.s4 1983009808
    %v3639 = vunpack.c.0.s8 %v3638
    %v3640 = vlaneseq
    %v3641 = vshrl.u32 %v3640, 7
    %v3642 = vsub.s32 %v3639, %v3641
    %v3643 = vrot.slane %v3635, %v3642
    %v3645 = vunpack.c.l.s4 1983009808
    %v3646 = vunpack.c.0.s8 %v3645
    %v3647 = vlaneseq
    %v3648 = vshrl.u32 %v3647, 7
    %v3649 = vsub.s32 %v3646, %v3648
    %v3650 = vrot.slane %v3636, %v3649
    %v3651 = vcombine.low %v155, %v283
    %v3652 = vcombine.high %v155, %v283
    %v3654 = vunpack.c.l.s4 1983009808
    %v3655 = vunpack.c.0.s8 %v3654
    %v3656 = vlaneseq
    %v3657 = vshrl.u32 %v3656, 7
    %v3658 = vsub.s32 %v3655, %v3657
    %v3659 = vrot.slane %v3651, %v3658
    %v3661 = vunpack.c.l.s4 1983009808
    %v3662 = vunpack.c.0.s8 %v3661
    %v3663 = vlaneseq
    %v3664 = vshrl.u32 %v3663, 7
    %v3665 = vsub.s32 %v3662, %v3664
    %v3666 = vrot.slane %v3652, %v3665
    %v3667 = vcombine.high %v347, 0.0
    %v3669 = vunpack.c.l.s4 1983009808
    %v3670 = vunpack.c.0.s8 %v3669
    %v3671 = vlaneseq
    %v3672 = vshrl.u32 %v3671, 7
    %v3673 = vsub.s32 %v3670, %v3672
    %v3674 = vrot.slane %v347, %v3673
    %v3676 = vunpack.c.l.s4 1983009808
    %v3677 = vunpack.c.0.s8 %v3676
    %v3678 = vlaneseq
    %v3679 = vshrl.u32 %v3678, 7
    %v3680 = vsub.s32 %v3677, %v3679
    %v3681 = vrot.slane %v3667, %v3680
    %v3682 = vcombine.high %v411, 0.0
    %v3684 = vunpack.c.l.s4 1983009808
    %v3685 = vunpack.c.0.s8 %v3684
    %v3686 = vlaneseq
    %v3687 = vshrl.u32 %v3686, 7
    %v3688 = vsub.s32 %v3685, %v3687
    %v3689 = vrot.slane %v411, %v3688
    %v3691 = vunpack.c.l.s4 1983009808
    %v3692 = vunpack.c.0.s8 %v3691
    %v3693 = vlaneseq
    %v3694 = vshrl.u32 %v3693, 7
    %v3695 = vsub.s32 %v3692, %v3694
    %v3696 = vrot.slane %v3682, %v3695
    %v3697 = vcombine.low %v3643, %v3659
    %v3698 = vcombine.high %v3643, %v3659
    %v3700 = vunpack.c.l.s4 1934713408
    %v3701 = vunpack.c.0.s8 %v3700
    %v3702 = vlaneseq
    %v3703 = vshrl.u32 %v3702, 7
    %v3704 = vsub.s32 %v3701, %v3703
    %v3705 = vrot.slane %v3697, %v3704
    %v3707 = vunpack.c.l.s4 1934713408
    %v3708 = vunpack.c.0.s8 %v3707
    %v3709 = vlaneseq
    %v3710 = vshrl.u32 %v3709, 7
    %v3711 = vsub.s32 %v3708, %v3710
    %v3712 = vrot.slane %v3698, %v3711
    %v3713 = vcombine.low %v3650, %v3666
    %v3714 = vcombine.high %v3650, %v3666
    %v3716 = vunpack.c.l.s4 1934713408
    %v3717 = vunpack.c.0.s8 %v3716
    %v3718 = vlaneseq
    %v3719 = vshrl.u32 %v3718, 7
    %v3720 = vsub.s32 %v3717, %v3719
    %v3721 = vrot.slane %v3713, %v3720
    %v3723 = vunpack.c.l.s4 1934713408
    %v3724 = vunpack.c.0.s8 %v3723
    %v3725 = vlaneseq
    %v3726 = vshrl.u32 %v3725, 7
    %v3727 = vsub.s32 %v3724, %v3726
    %v3728 = vrot.slane %v3714, %v3727
    %v3729 = vcombine.low %v3674, %v3689
    %v3730 = vcombine.high %v3674, %v3689
    %v3732 = vunpack.c.l.s4 1934713408
    %v3733 = vunpack.c.0.s8 %v3732
    %v3734 = vlaneseq
    %v3735 = vshrl.u32 %v3734, 7
    %v3736 = vsub.s32 %v3733, %v3735
    %v3737 = vrot.slane %v3729, %v3736
    %v3739 = vunpack.c.l.s4 1934713408
    %v3740 = vunpack.c.0.s8 %v3739
    %v3741 = vlaneseq
    %v3742 = vshrl.u32 %v3741, 7
    %v3743 = vsub.s32 %v3740, %v3742
    %v3744 = vrot.slane %v3730, %v3743
    %v3745 = vcombine.low %v3681, %v3696
    %v3746 = vcombine.high %v3681, %v3696
    %v3748 = vunpack.c.l.s4 1934713408
    %v3749 = vunpack.c.0.s8 %v3748
    %v3750 = vlaneseq
    %v3751 = vshrl.u32 %v3750, 7
    %v3752 = vsub.s32 %v3749, %v3751
    %v3753 = vrot.slane %v3745, %v3752
    %v3755 = vunpack.c.l.s4 1934713408
    %v3756 = vunpack.c.0.s8 %v3755
    %v3757 = vlaneseq
    %v3758 = vshrl.u32 %v3757, 7
    %v3759 = vsub.s32 %v3756, %v3758
    %v3760 = vrot.slane %v3746, %v3759
    %v3761 = vcombine.low %v3705, %v3737
    %v3762 = vcombine.high %v3705, %v3737
    %v3763 = vcombine.low %v3712, %v3744
    %v3764 = vcombine.high %v3712, %v3744
    %v3765 = vcombine.low %v3721, %v3753
    %v3766 = vcombine.high %v3721, %v3753
    %v3767 = vcombine.low %v3728, %v3760
    %v3768 = vcombine.high %v3728, %v3760
    %v3769 = vcombine.low %v92, %v220
    %v3770 = vcombine.high %v92, %v220
    %v3772 = vunpack.c.l.s4 1983009808
    %v3773 = vunpack.c.0.s8 %v3772
    %v3774 = vlaneseq
    %v3775 = vshrl.u32 %v3774, 7
    %v3776 = vsub.s32 %v3773, %v3775
    %v3777 = vrot.slane %v3769, %v3776
    %v3779 = vunpack.c.l.s4 1983009808
    %v3780 = vunpack.c.0.s8 %v3779
    %v3781 = vlaneseq
    %v3782 = vshrl.u32 %v3781, 7
    %v3783 = vsub.s32 %v3780, %v3782
    %v3784 = vrot.slane %v3770, %v3783
    %v3785 = vcombine.low %v156, %v284
    %v3786 = vcombine.high %v156, %v284
    %v3788 = vunpack.c.l.s4 1983009808
    %v3789 = vunpack.c.0.s8 %v3788
    %v3790 = vlaneseq
    %v3791 = vshrl.u32 %v3790, 7
    %v3792 = vsub.s32 %v3789, %v3791
    %v3793 = vrot.slane %v3785, %v3792
    %v3795 = vunpack.c.l.s4 1983009808
    %v3796 = vunpack.c.0.s8 %v3795
    %v3797 = vlaneseq
    %v3798 = vshrl.u32 %v3797, 7
    %v3799 = vsub.s32 %v3796, %v3798
    %v3800 = vrot.slane %v3786, %v3799
    %v3801 = vcombine.high %v348, 0.0
    %v3803 = vunpack.c.l.s4 1983009808
    %v3804 = vunpack.c.0.s8 %v3803
    %v3805 = vlaneseq
    %v3806 = vshrl.u32 %v3805, 7
    %v3807 = vsub.s32 %v3804, %v3806
    %v3808 = vrot.slane %v348, %v3807
    %v3810 = vunpack.c.l.s4 1983009808
    %v3811 = vunpack.c.0.s8 %v3810
    %v3812 = vlaneseq
    %v3813 = vshrl.u32 %v3812, 7
    %v3814 = vsub.s32 %v3811, %v3813
    %v3815 = vrot.slane %v3801, %v3814
    %v3816 = vcombine.high %v412, 0.0
    %v3818 = vunpack.c.l.s4 1983009808
    %v3819 = vunpack.c.0.s8 %v3818
    %v3820 = vlaneseq
    %v3821 = vshrl.u32 %v3820, 7
    %v3822 = vsub.s32 %v3819, %v3821
    %v3823 = vrot.slane %v412, %v3822
    %v3825 = vunpack.c.l.s4 1983009808
    %v3826 = vunpack.c.0.s8 %v3825
    %v3827 = vlaneseq
    %v3828 = vshrl.u32 %v3827, 7
    %v3829 = vsub.s32 %v3826, %v3828
    %v3830 = vrot.slane %v3816, %v3829
    %v3831 = vcombine.low %v3777, %v3793
    %v3832 = vcombine.high %v3777, %v3793
    %v3834 = vunpack.c.l.s4 1934713408
    %v3835 = vunpack.c.0.s8 %v3834
    %v3836 = vlaneseq
    %v3837 = vshrl.u32 %v3836, 7
    %v3838 = vsub.s32 %v3835, %v3837
    %v3839 = vrot.slane %v3831, %v3838
    %v3841 = vunpack.c.l.s4 1934713408
    %v3842 = vunpack.c.0.s8 %v3841
    %v3843 = vlaneseq
    %v3844 = vshrl.u32 %v3843, 7
    %v3845 = vsub.s32 %v3842, %v3844
    %v3846 = vrot.slane %v3832, %v3845
    %v3847 = vcombine.low %v3784, %v3800
    %v3848 = vcombine.high %v3784, %v3800
    %v3850 = vunpack.c.l.s4 1934713408
    %v3851 = vunpack.c.0.s8 %v3850
    %v3852 = vlaneseq
    %v3853 = vshrl.u32 %v3852, 7
    %v3854 = vsub.s32 %v3851, %v3853
    %v3855 = vrot.slane %v3847, %v3854
    %v3857 = vunpack.c.l.s4 1934713408
    %v3858 = vunpack.c.0.s8 %v3857
    %v3859 = vlaneseq
    %v3860 = vshrl.u32 %v3859, 7
    %v3861 = vsub.s32 %v3858, %v3860
    %v3862 = vrot.slane %v3848, %v3861
    %v3863 = vcombine.low %v3808, %v3823
    %v3864 = vcombine.high %v3808, %v3823
    %v3866 = vunpack.c.l.s4 1934713408
    %v3867 = vunpack.c.0.s8 %v3866
    %v3868 = vlaneseq
    %v3869 = vshrl.u32 %v3868, 7
    %v3870 = vsub.s32 %v3867, %v3869
    %v3871 = vrot.slane %v3863, %v3870
    %v3873 = vunpack.c.l.s4 1934713408
    %v3874 = vunpack.c.0.s8 %v3873
    %v3875 = vlaneseq
    %v3876 = vshrl.u32 %v3875, 7
    %v3877 = vsub.s32 %v3874, %v3876
    %v3878 = vrot.slane %v3864, %v3877
    %v3879 = vcombine.low %v3815, %v3830
    %v3880 = vcombine.high %v3815, %v3830
    %v3882 = vunpack.c.l.s4 1934713408
    %v3883 = vunpack.c.0.s8 %v3882
    %v3884 = vlaneseq
    %v3885 = vshrl.u32 %v3884, 7
    %v3886 = vsub.s32 %v3883, %v3885
    %v3887 = vrot.slane %v3879, %v3886
    %v3889 = vunpack.c.l.s4 1934713408
    %v3890 = vunpack.c.0.s8 %v3889
    %v3891 = vlaneseq
    %v3892 = vshrl.u32 %v3891, 7
    %v3893 = vsub.s32 %v3890, %v3892
    %v3894 = vrot.slane %v3880, %v3893
    %v3895 = vcombine.low %v3839, %v3871
    %v3896 = vcombine.high %v3839, %v3871
    %v3897 = vcombine.low %v3846, %v3878
    %v3898 = vcombine.high %v3846, %v3878
    %v3899 = vcombine.low %v3855, %v3887
    %v3900 = vcombine.high %v3855, %v3887
    %v3901 = vcombine.low %v3862, %v3894
    %v3902 = vcombine.high %v3862, %v3894
    %v3903 = vcombine.low %v93, %v221
    %v3904 = vcombine.high %v93, %v221
    %v3906 = vunpack.c.l.s4 1983009808
    %v3907 = vunpack.c.0.s8 %v3906
    %v3908 = vlaneseq
    %v3909 = vshrl.u32 %v3908, 7
    %v3910 = vsub.s32 %v3907, %v3909
    %v3911 = vrot.slane %v3903, %v3910
    %v3913 = vunpack.c.l.s4 1983009808
    %v3914 = vunpack.c.0.s8 %v3913
    %v3915 = vlaneseq
    %v3916 = vshrl.u32 %v3915, 7
    %v3917 = vsub.s32 %v3914, %v3916
    %v3918 = vrot.slane %v3904, %v3917
    %v3919 = vcombine.low %v157, %v285
    %v3920 = vcombine.high %v157, %v285
    %v3922 = vunpack.c.l.s4 1983009808
    %v3923 = vunpack.c.0.s8 %v3922
    %v3924 = vlaneseq
    %v3925 = vshrl.u32 %v3924, 7
    %v3926 = vsub.s32 %v3923, %v3925
    %v3927 = vrot.slane %v3919, %v3926
    %v3929 = vunpack.c.l.s4 1983009808
    %v3930 = vunpack.c.0.s8 %v3929
    %v3931 = vlaneseq
    %v3932 = vshrl.u32 %v3931, 7
    %v3933 = vsub.s32 %v3930, %v3932
    %v3934 = vrot.slane %v3920, %v3933
    %v3935 = vcombine.high %v349, 0.0
    %v3937 = vunpack.c.l.s4 1983009808
    %v3938 = vunpack.c.0.s8 %v3937
    %v3939 = vlaneseq
    %v3940 = vshrl.u32 %v3939, 7
    %v3941 = vsub.s32 %v3938, %v3940
    %v3942 = vrot.slane %v349, %v3941
    %v3944 = vunpack.c.l.s4 1983009808
    %v3945 = vunpack.c.0.s8 %v3944
    %v3946 = vlaneseq
    %v3947 = vshrl.u32 %v3946, 7
    %v3948 = vsub.s32 %v3945, %v3947
    %v3949 = vrot.slane %v3935, %v3948
    %v3950 = vcombine.high %v413, 0.0
    %v3952 = vunpack.c.l.s4 1983009808
    %v3953 = vunpack.c.0.s8 %v3952
    %v3954 = vlaneseq
    %v3955 = vshrl.u32 %v3954, 7
    %v3956 = vsub.s32 %v3953, %v3955
    %v3957 = vrot.slane %v413, %v3956
    %v3959 = vunpack.c.l.s4 1983009808
    %v3960 = vunpack.c.0.s8 %v3959
    %v3961 = vlaneseq
    %v3962 = vshrl.u32 %v3961, 7
    %v3963 = vsub.s32 %v3960, %v3962
    %v3964 = vrot.slane %v3950, %v3963
    %v3965 = vcombine.low %v3911, %v3927
    %v3966 = vcombine.high %v3911, %v3927
    %v3968 = vunpack.c.l.s4 1934713408
    %v3969 = vunpack.c.0.s8 %v3968
    %v3970 = vlaneseq
    %v3971 = vshrl.u32 %v3970, 7
    %v3972 = vsub.s32 %v3969, %v3971
    %v3973 = vrot.slane %v3965, %v3972
    %v3975 = vunpack.c.l.s4 1934713408
    %v3976 = vunpack.c.0.s8 %v3975
    %v3977 = vlaneseq
    %v3978 = vshrl.u32 %v3977, 7
    %v3979 = vsub.s32 %v3976, %v3978
    %v3980 = vrot.slane %v3966, %v3979
    %v3981 = vcombine.low %v3918, %v3934
    %v3982 = vcombine.high %v3918, %v3934
    %v3984 = vunpack.c.l.s4 1934713408
    %v3985 = vunpack.c.0.s8 %v3984
    %v3986 = vlaneseq
    %v3987 = vshrl.u32 %v3986, 7
    %v3988 = vsub.s32 %v3985, %v3987
    %v3989 = vrot.slane %v3981, %v3988
    %v3991 = vunpack.c.l.s4 1934713408
    %v3992 = vunpack.c.0.s8 %v3991
    %v3993 = vlaneseq
    %v3994 = vshrl.u32 %v3993, 7
    %v3995 = vsub.s32 %v3992, %v3994
    %v3996 = vrot.slane %v3982, %v3995
    %v3997 = vcombine.low %v3942, %v3957
    %v3998 = vcombine.high %v3942, %v3957
    %v4000 = vunpack.c.l.s4 1934713408
    %v4001 = vunpack.c.0.s8 %v4000
    %v4002 = vlaneseq
    %v4003 = vshrl.u32 %v4002, 7
    %v4004 = vsub.s32 %v4001, %v4003
    %v4005 = vrot.slane %v3997, %v4004
    %v4007 = vunpack.c.l.s4 1934713408
    %v4008 = vunpack.c.0.s8 %v4007
    %v4009 = vlaneseq
    %v4010 = vshrl.u32 %v4009, 7
    %v4011 = vsub.s32 %v4008, %v4010
    %v4012 = vrot.slane %v3998, %v4011
    %v4013 = vcombine.low %v3949, %v3964
    %v4014 = vcombine.high %v3949, %v3964
    %v4016 = vunpack.c.l.s4 1934713408
    %v4017 = vunpack.c.0.s8 %v4016
    %v4018 = vlaneseq
    %v4019 = vshrl.u32 %v4018, 7
    %v4020 = vsub.s32 %v4017, %v4019
    %v4021 = vrot.slane %v4013, %v4020
    %v4023 = vunpack.c.l.s4 1934713408
    %v4024 = vunpack.c.0.s8 %v4023
    %v4025 = vlaneseq
    %v4026 = vshrl.u32 %v4025, 7
    %v4027 = vsub.s32 %v4024, %v4026
    %v4028 = vrot.slane %v4014, %v4027
    %v4029 = vcombine.low %v3973, %v4005
    %v4030 = vcombine.high %v3973, %v4005
    %v4031 = vcombine.low %v3980, %v4012
    %v4032 = vcombine.high %v3980, %v4012
    %v4033 = vcombine.low %v3989, %v4021
    %v4034 = vcombine.high %v3989, %v4021
    %v4035 = vcombine.low %v3996, %v4028
    %v4036 = vcombine.high %v3996, %v4028
    %v4037 = vcombine.low %v94, %v222
    %v4038 = vcombine.high %v94, %v222
    %v4040 = vunpack.c.l.s4 1983009808
    %v4041 = vunpack.c.0.s8 %v4040
    %v4042 = vlaneseq
    %v4043 = vshrl.u32 %v4042, 7
    %v4044 = vsub.s32 %v4041, %v4043
    %v4045 = vrot.slane %v4037, %v4044
    %v4047 = vunpack.c.l.s4 1983009808
    %v4048 = vunpack.c.0.s8 %v4047
    %v4049 = vlaneseq
    %v4050 = vshrl.u32 %v4049, 7
    %v4051 = vsub.s32 %v4048, %v4050
    %v4052 = vrot.slane %v4038, %v4051
    %v4053 = vcombine.low %v158, %v286
    %v4054 = vcombine.high %v158, %v286
    %v4056 = vunpack.c.l.s4 1983009808
    %v4057 = vunpack.c.0.s8 %v4056
    %v4058 = vlaneseq
    %v4059 = vshrl.u32 %v4058, 7
    %v4060 = vsub.s32 %v4057, %v4059
    %v4061 = vrot.slane %v4053, %v4060
    %v4063 = vunpack.c.l.s4 1983009808
    %v4064 = vunpack.c.0.s8 %v4063
    %v4065 = vlaneseq
    %v4066 = vshrl.u32 %v4065, 7
    %v4067 = vsub.s32 %v4064, %v4066
    %v4068 = vrot.slane %v4054, %v4067
    %v4069 = vcombine.high %v350, 0.0
    %v4071 = vunpack.c.l.s4 1983009808
    %v4072 = vunpack.c.0.s8 %v4071
    %v4073 = vlaneseq
    %v4074 = vshrl.u32 %v4073, 7
    %v4075 = vsub.s32 %v4072, %v4074
    %v4076 = vrot.slane %v350, %v4075
    %v4078 = vunpack.c.l.s4 1983009808
    %v4079 = vunpack.c.0.s8 %v4078
    %v4080 = vlaneseq
    %v4081 = vshrl.u32 %v4080, 7
    %v4082 = vsub.s32 %v4079, %v4081
    %v4083 = vrot.slane %v4069, %v4082
    %v4084 = vcombine.high %v414, 0.0
    %v4086 = vunpack.c.l.s4 1983009808
    %v4087 = vunpack.c.0.s8 %v4086
    %v4088 = vlaneseq
    %v4089 = vshrl.u32 %v4088, 7
    %v4090 = vsub.s32 %v4087, %v4089
    %v4091 = vrot.slane %v414, %v4090
    %v4093 = vunpack.c.l.s4 1983009808
    %v4094 = vunpack.c.0.s8 %v4093
    %v4095 = vlaneseq
    %v4096 = vshrl.u32 %v4095, 7
    %v4097 = vsub.s32 %v4094, %v4096
    %v4098 = vrot.slane %v4084, %v4097
    %v4099 = vcombine.low %v4045, %v4061
    %v4100 = vcombine.high %v4045, %v4061
    %v4102 = vunpack.c.l.s4 1934713408
    %v4103 = vunpack.c.0.s8 %v4102
    %v4104 = vlaneseq
    %v4105 = vshrl.u32 %v4104, 7
    %v4106 = vsub.s32 %v4103, %v4105
    %v4107 = vrot.slane %v4099, %v4106
    %v4109 = vunpack.c.l.s4 1934713408
    %v4110 = vunpack.c.0.s8 %v4109
    %v4111 = vlaneseq
    %v4112 = vshrl.u32 %v4111, 7
    %v4113 = vsub.s32 %v4110, %v4112
    %v4114 = vrot.slane %v4100, %v4113
    %v4115 = vcombine.low %v4052, %v4068
    %v4116 = vcombine.high %v4052, %v4068
    %v4118 = vunpack.c.l.s4 1934713408
    %v4119 = vunpack.c.0.s8 %v4118
    %v4120 = vlaneseq
    %v4121 = vshrl.u32 %v4120, 7
    %v4122 = vsub.s32 %v4119, %v4121
    %v4123 = vrot.slane %v4115, %v4122
    %v4125 = vunpack.c.l.s4 1934713408
    %v4126 = vunpack.c.0.s8 %v4125
    %v4127 = vlaneseq
    %v4128 = vshrl.u32 %v4127, 7
    %v4129 = vsub.s32 %v4126, %v4128
    %v4130 = vrot.slane %v4116, %v4129
    %v4131 = vcombine.low %v4076, %v4091
    %v4132 = vcombine.high %v4076, %v4091
    %v4134 = vunpack.c.l.s4 1934713408
    %v4135 = vunpack.c.0.s8 %v4134
    %v4136 = vlaneseq
    %v4137 = vshrl.u32 %v4136, 7
    %v4138 = vsub.s32 %v4135, %v4137
    %v4139 = vrot.slane %v4131, %v4138
    %v4141 = vunpack.c.l.s4 1934713408
    %v4142 = vunpack.c.0.s8 %v4141
    %v4143 = vlaneseq
    %v4144 = vshrl.u32 %v4143, 7
    %v4145 = vsub.s32 %v4142, %v4144
    %v4146 = vrot.slane %v4132, %v4145
    %v4147 = vcombine.low %v4083, %v4098
    %v4148 = vcombine.high %v4083, %v4098
    %v4150 = vunpack.c.l.s4 1934713408
    %v4151 = vunpack.c.0.s8 %v4150
    %v4152 = vlaneseq
    %v4153 = vshrl.u32 %v4152, 7
    %v4154 = vsub.s32 %v4151, %v4153
    %v4155 = vrot.slane %v4147, %v4154
    %v4157 = vunpack.c.l.s4 1934713408
    %v4158 = vunpack.c.0.s8 %v4157
    %v4159 = vlaneseq
    %v4160 = vshrl.u32 %v4159, 7
    %v4161 = vsub.s32 %v4158, %v4160
    %v4162 = vrot.slane %v4148, %v4161
    %v4163 = vcombine.low %v4107, %v4139
    %v4164 = vcombine.high %v4107, %v4139
    %v4165 = vcombine.low %v4114, %v4146
    %v4166 = vcombine.high %v4114, %v4146
    %v4167 = vcombine.low %v4123, %v4155
    %v4168 = vcombine.high %v4123, %v4155
    %v4169 = vcombine.low %v4130, %v4162
    %v4170 = vcombine.high %v4130, %v4162
    %v4171 = vcombine.low %v95, %v223
    %v4172 = vcombine.high %v95, %v223
    %v4174 = vunpack.c.l.s4 1983009808
    %v4175 = vunpack.c.0.s8 %v4174
    %v4176 = vlaneseq
    %v4177 = vshrl.u32 %v4176, 7
    %v4178 = vsub.s32 %v4175, %v4177
    %v4179 = vrot.slane %v4171, %v4178
    %v4181 = vunpack.c.l.s4 1983009808
    %v4182 = vunpack.c.0.s8 %v4181
    %v4183 = vlaneseq
    %v4184 = vshrl.u32 %v4183, 7
    %v4185 = vsub.s32 %v4182, %v4184
    %v4186 = vrot.slane %v4172, %v4185
    %v4187 = vcombine.low %v159, %v287
    %v4188 = vcombine.high %v159, %v287
    %v4190 = vunpack.c.l.s4 1983009808
    %v4191 = vunpack.c.0.s8 %v4190
    %v4192 = vlaneseq
    %v4193 = vshrl.u32 %v4192, 7
    %v4194 = vsub.s32 %v4191, %v4193
    %v4195 = vrot.slane %v4187, %v4194
    %v4197 = vunpack.c.l.s4 1983009808
    %v4198 = vunpack.c.0.s8 %v4197
    %v4199 = vlaneseq
    %v4200 = vshrl.u32 %v4199, 7
    %v4201 = vsub.s32 %v4198, %v4200
    %v4202 = vrot.slane %v4188, %v4201
    %v4203 = vcombine.high %v351, 0.0
    %v4205 = vunpack.c.l.s4 1983009808
    %v4206 = vunpack.c.0.s8 %v4205
    %v4207 = vlaneseq
    %v4208 = vshrl.u32 %v4207, 7
    %v4209 = vsub.s32 %v4206, %v4208
    %v4210 = vrot.slane %v351, %v4209
    %v4212 = vunpack.c.l.s4 1983009808
    %v4213 = vunpack.c.0.s8 %v4212
    %v4214 = vlaneseq
    %v4215 = vshrl.u32 %v4214, 7
    %v4216 = vsub.s32 %v4213, %v4215
    %v4217 = vrot.slane %v4203, %v4216
    %v4218 = vcombine.high %v415, 0.0
    %v4220 = vunpack.c.l.s4 1983009808
    %v4221 = vunpack.c.0.s8 %v4220
    %v4222 = vlaneseq
    %v4223 = vshrl.u32 %v4222, 7
    %v4224 = vsub.s32 %v4221, %v4223
    %v4225 = vrot.slane %v415, %v4224
    %v4227 = vunpack.c.l.s4 1983009808
    %v4228 = vunpack.c.0.s8 %v4227
    %v4229 = vlaneseq
    %v4230 = vshrl.u32 %v4229, 7
    %v4231 = vsub.s32 %v4228, %v4230
    %v4232 = vrot.slane %v4218, %v4231
    %v4233 = vcombine.low %v4179, %v4195
    %v4234 = vcombine.high %v4179, %v4195
    %v4236 = vunpack.c.l.s4 1934713408
    %v4237 = vunpack.c.0.s8 %v4236
    %v4238 = vlaneseq
    %v4239 = vshrl.u32 %v4238, 7
    %v4240 = vsub.s32 %v4237, %v4239
    %v4241 = vrot.slane %v4233, %v4240
    %v4243 = vunpack.c.l.s4 1934713408
    %v4244 = vunpack.c.0.s8 %v4243
    %v4245 = vlaneseq
    %v4246 = vshrl.u32 %v4245, 7
    %v4247 = vsub.s32 %v4244, %v4246
    %v4248 = vrot.slane %v4234, %v4247
    %v4249 = vcombine.low %v4186, %v4202
    %v4250 = vcombine.high %v4186, %v4202
    %v4252 = vunpack.c.l.s4 1934713408
    %v4253 = vunpack.c.0.s8 %v4252
    %v4254 = vlaneseq
    %v4255 = vshrl.u32 %v4254, 7
    %v4256 = vsub.s32 %v4253, %v4255
    %v4257 = vrot.slane %v4249, %v4256
    %v4259 = vunpack.c.l.s4 1934713408
    %v4260 = vunpack.c.0.s8 %v4259
    %v4261 = vlaneseq
    %v4262 = vshrl.u32 %v4261, 7
    %v4263 = vsub.s32 %v4260, %v4262
    %v4264 = vrot.slane %v4250, %v4263
    %v4265 = vcombine.low %v4210, %v4225
    %v4266 = vcombine.high %v4210, %v4225
    %v4268 = vunpack.c.l.s4 1934713408
    %v4269 = vunpack.c.0.s8 %v4268
    %v4270 = vlaneseq
    %v4271 = vshrl.u32 %v4270, 7
    %v4272 = vsub.s32 %v4269, %v4271
    %v4273 = vrot.slane %v4265, %v4272
    %v4275 = vunpack.c.l.s4 1934713408
    %v4276 = vunpack.c.0.s8 %v4275
    %v4277 = vlaneseq
    %v4278 = vshrl.u32 %v4277, 7
    %v4279 = vsub.s32 %v4276, %v4278
    %v4280 = vrot.slane %v4266, %v4279
    %v4281 = vcombine.low %v4217, %v4232
    %v4282 = vcombine.high %v4217, %v4232
    %v4284 = vunpack.c.l.s4 1934713408
    %v4285 = vunpack.c.0.s8 %v4284
    %v4286 = vlaneseq
    %v4287 = vshrl.u32 %v4286, 7
    %v4288 = vsub.s32 %v4285, %v4287
    %v4289 = vrot.slane %v4281, %v4288
    %v4291 = vunpack.c.l.s4 1934713408
    %v4292 = vunpack.c.0.s8 %v4291
    %v4293 = vlaneseq
    %v4294 = vshrl.u32 %v4293, 7
    %v4295 = vsub.s32 %v4292, %v4294
    %v4296 = vrot.slane %v4282, %v4295
    %v4297 = vcombine.low %v4241, %v4273
    %v4298 = vcombine.high %v4241, %v4273
    %v4299 = vcombine.low %v4248, %v4280
    %v4300 = vcombine.high %v4248, %v4280
    %v4301 = vcombine.low %v4257, %v4289
    %v4302 = vcombine.high %v4257, %v4289
    %v4303 = vcombine.low %v4264, %v4296
    %v4304 = vcombine.high %v4264, %v4296
    %v4305 = vcombine.low %v96, %v224
    %v4306 = vcombine.high %v96, %v224
    %v4308 = vunpack.c.l.s4 1983009808
    %v4309 = vunpack.c.0.s8 %v4308
    %v4310 = vlaneseq
    %v4311 = vshrl.u32 %v4310, 7
    %v4312 = vsub.s32 %v4309, %v4311
    %v4313 = vrot.slane %v4305, %v4312
    %v4315 = vunpack.c.l.s4 1983009808
    %v4316 = vunpack.c.0.s8 %v4315
    %v4317 = vlaneseq
    %v4318 = vshrl.u32 %v4317, 7
    %v4319 = vsub.s32 %v4316, %v4318
    %v4320 = vrot.slane %v4306, %v4319
    %v4321 = vcombine.low %v160, %v288
    %v4322 = vcombine.high %v160, %v288
    %v4324 = vunpack.c.l.s4 1983009808
    %v4325 = vunpack.c.0.s8 %v4324
    %v4326 = vlaneseq
    %v4327 = vshrl.u32 %v4326, 7
    %v4328 = vsub.s32 %v4325, %v4327
    %v4329 = vrot.slane %v4321, %v4328
    %v4331 = vunpack.c.l.s4 1983009808
    %v4332 = vunpack.c.0.s8 %v4331
    %v4333 = vlaneseq
    %v4334 = vshrl.u32 %v4333, 7
    %v4335 = vsub.s32 %v4332, %v4334
    %v4336 = vrot.slane %v4322, %v4335
    %v4337 = vcombine.high %v352, 0.0
    %v4339 = vunpack.c.l.s4 1983009808
    %v4340 = vunpack.c.0.s8 %v4339
    %v4341 = vlaneseq
    %v4342 = vshrl.u32 %v4341, 7
    %v4343 = vsub.s32 %v4340, %v4342
    %v4344 = vrot.slane %v352, %v4343
    %v4346 = vunpack.c.l.s4 1983009808
    %v4347 = vunpack.c.0.s8 %v4346
    %v4348 = vlaneseq
    %v4349 = vshrl.u32 %v4348, 7
    %v4350 = vsub.s32 %v4347, %v4349
    %v4351 = vrot.slane %v4337, %v4350
    %v4352 = vcombine.high %v416, 0.0
    %v4354 = vunpack.c.l.s4 1983009808
    %v4355 = vunpack.c.0.s8 %v4354
    %v4356 = vlaneseq
    %v4357 = vshrl.u32 %v4356, 7
    %v4358 = vsub.s32 %v4355, %v4357
    %v4359 = vrot.slane %v416, %v4358
    %v4361 = vunpack.c.l.s4 1983009808
    %v4362 = vunpack.c.0.s8 %v4361
    %v4363 = vlaneseq
    %v4364 = vshrl.u32 %v4363, 7
    %v4365 = vsub.s32 %v4362, %v4364
    %v4366 = vrot.slane %v4352, %v4365
    %v4367 = vcombine.low %v4313, %v4329
    %v4368 = vcombine.high %v4313, %v4329
    %v4370 = vunpack.c.l.s4 1934713408
    %v4371 = vunpack.c.0.s8 %v4370
    %v4372 = vlaneseq
    %v4373 = vshrl.u32 %v4372, 7
    %v4374 = vsub.s32 %v4371, %v4373
    %v4375 = vrot.slane %v4367, %v4374
    %v4377 = vunpack.c.l.s4 1934713408
    %v4378 = vunpack.c.0.s8 %v4377
    %v4379 = vlaneseq
    %v4380 = vshrl.u32 %v4379, 7
    %v4381 = vsub.s32 %v4378, %v4380
    %v4382 = vrot.slane %v4368, %v4381
    %v4383 = vcombine.low %v4320, %v4336
    %v4384 = vcombine.high %v4320, %v4336
    %v4386 = vunpack.c.l.s4 1934713408
    %v4387 = vunpack.c.0.s8 %v4386
    %v4388 = vlaneseq
    %v4389 = vshrl.u32 %v4388, 7
    %v4390 = vsub.s32 %v4387, %v4389
    %v4391 = vrot.slane %v4383, %v4390
    %v4393 = vunpack.c.l.s4 1934713408
    %v4394 = vunpack.c.0.s8 %v4393
    %v4395 = vlaneseq
    %v4396 = vshrl.u32 %v4395, 7
    %v4397 = vsub.s32 %v4394, %v4396
    %v4398 = vrot.slane %v4384, %v4397
    %v4399 = vcombine.low %v4344, %v4359
    %v4400 = vcombine.high %v4344, %v4359
    %v4402 = vunpack.c.l.s4 1934713408
    %v4403 = vunpack.c.0.s8 %v4402
    %v4404 = vlaneseq
    %v4405 = vshrl.u32 %v4404, 7
    %v4406 = vsub.s32 %v4403, %v4405
    %v4407 = vrot.slane %v4399, %v4406
    %v4409 = vunpack.c.l.s4 1934713408
    %v4410 = vunpack.c.0.s8 %v4409
    %v4411 = vlaneseq
    %v4412 = vshrl.u32 %v4411, 7
    %v4413 = vsub.s32 %v4410, %v4412
    %v4414 = vrot.slane %v4400, %v4413
    %v4415 = vcombine.low %v4351, %v4366
    %v4416 = vcombine.high %v4351, %v4366
    %v4418 = vunpack.c.l.s4 1934713408
    %v4419 = vunpack.c.0.s8 %v4418
    %v4420 = vlaneseq
    %v4421 = vshrl.u32 %v4420, 7
    %v4422 = vsub.s32 %v4419, %v4421
    %v4423 = vrot.slane %v4415, %v4422
    %v4425 = vunpack.c.l.s4 1934713408
    %v4426 = vunpack.c.0.s8 %v4425
    %v4427 = vlaneseq
    %v4428 = vshrl.u32 %v4427, 7
    %v4429 = vsub.s32 %v4426, %v4428
    %v4430 = vrot.slane %v4416, %v4429
    %v4431 = vcombine.low %v4375, %v4407
    %v4432 = vcombine.high %v4375, %v4407
    %v4433 = vcombine.low %v4382, %v4414
    %v4434 = vcombine.high %v4382, %v4414
    %v4435 = vcombine.low %v4391, %v4423
    %v4436 = vcombine.high %v4391, %v4423
    %v4437 = vcombine.low %v4398, %v4430
    %v4438 = vcombine.high %v4398, %v4430
    %v4439 = vcombine.low %v97, %v225
    %v4440 = vcombine.high %v97, %v225
    %v4442 = vunpack.c.l.s4 1983009808
    %v4443 = vunpack.c.0.s8 %v4442
    %v4444 = vlaneseq
    %v4445 = vshrl.u32 %v4444, 7
    %v4446 = vsub.s32 %v4443, %v4445
    %v4447 = vrot.slane %v4439, %v4446
    %v4449 = vunpack.c.l.s4 1983009808
    %v4450 = vunpack.c.0.s8 %v4449
    %v4451 = vlaneseq
    %v4452 = vshrl.u32 %v4451, 7
    %v4453 = vsub.s32 %v4450, %v4452
    %v4454 = vrot.slane %v4440, %v4453
    %v4455 = vcombine.low %v161, %v289
    %v4456 = vcombine.high %v161, %v289
    %v4458 = vunpack.c.l.s4 1983009808
    %v4459 = vunpack.c.0.s8 %v4458
    %v4460 = vlaneseq
    %v4461 = vshrl.u32 %v4460, 7
    %v4462 = vsub.s32 %v4459, %v4461
    %v4463 = vrot.slane %v4455, %v4462
    %v4465 = vunpack.c.l.s4 1983009808
    %v4466 = vunpack.c.0.s8 %v4465
    %v4467 = vlaneseq
    %v4468 = vshrl.u32 %v4467, 7
    %v4469 = vsub.s32 %v4466, %v4468
    %v4470 = vrot.slane %v4456, %v4469
    %v4471 = vcombine.high %v353, 0.0
    %v4473 = vunpack.c.l.s4 1983009808
    %v4474 = vunpack.c.0.s8 %v4473
    %v4475 = vlaneseq
    %v4476 = vshrl.u32 %v4475, 7
    %v4477 = vsub.s32 %v4474, %v4476
    %v4478 = vrot.slane %v353, %v4477
    %v4480 = vunpack.c.l.s4 1983009808
    %v4481 = vunpack.c.0.s8 %v4480
    %v4482 = vlaneseq
    %v4483 = vshrl.u32 %v4482, 7
    %v4484 = vsub.s32 %v4481, %v4483
    %v4485 = vrot.slane %v4471, %v4484
    %v4486 = vcombine.high %v417, 0.0
    %v4488 = vunpack.c.l.s4 1983009808
    %v4489 = vunpack.c.0.s8 %v4488
    %v4490 = vlaneseq
    %v4491 = vshrl.u32 %v4490, 7
    %v4492 = vsub.s32 %v4489, %v4491
    %v4493 = vrot.slane %v417, %v4492
    %v4495 = vunpack.c.l.s4 1983009808
    %v4496 = vunpack.c.0.s8 %v4495
    %v4497 = vlaneseq
    %v4498 = vshrl.u32 %v4497, 7
    %v4499 = vsub.s32 %v4496, %v4498
    %v4500 = vrot.slane %v4486, %v4499
    %v4501 = vcombine.low %v4447, %v4463
    %v4502 = vcombine.high %v4447, %v4463
    %v4504 = vunpack.c.l.s4 1934713408
    %v4505 = vunpack.c.0.s8 %v4504
    %v4506 = vlaneseq
    %v4507 = vshrl.u32 %v4506, 7
    %v4508 = vsub.s32 %v4505, %v4507
    %v4509 = vrot.slane %v4501, %v4508
    %v4511 = vunpack.c.l.s4 1934713408
    %v4512 = vunpack.c.0.s8 %v4511
    %v4513 = vlaneseq
    %v4514 = vshrl.u32 %v4513, 7
    %v4515 = vsub.s32 %v4512, %v4514
    %v4516 = vrot.slane %v4502, %v4515
    %v4517 = vcombine.low %v4454, %v4470
    %v4518 = vcombine.high %v4454, %v4470
    %v4520 = vunpack.c.l.s4 1934713408
    %v4521 = vunpack.c.0.s8 %v4520
    %v4522 = vlaneseq
    %v4523 = vshrl.u32 %v4522, 7
    %v4524 = vsub.s32 %v4521, %v4523
    %v4525 = vrot.slane %v4517, %v4524
    %v4527 = vunpack.c.l.s4 1934713408
    %v4528 = vunpack.c.0.s8 %v4527
    %v4529 = vlaneseq
    %v4530 = vshrl.u32 %v4529, 7
    %v4531 = vsub.s32 %v4528, %v4530
    %v4532 = vrot.slane %v4518, %v4531
    %v4533 = vcombine.low %v4478, %v4493
    %v4534 = vcombine.high %v4478, %v4493
    %v4536 = vunpack.c.l.s4 1934713408
    %v4537 = vunpack.c.0.s8 %v4536
    %v4538 = vlaneseq
    %v4539 = vshrl.u32 %v4538, 7
    %v4540 = vsub.s32 %v4537, %v4539
    %v4541 = vrot.slane %v4533, %v4540
    %v4543 = vunpack.c.l.s4 1934713408
    %v4544 = vunpack.c.0.s8 %v4543
    %v4545 = vlaneseq
    %v4546 = vshrl.u32 %v4545, 7
    %v4547 = vsub.s32 %v4544, %v4546
    %v4548 = vrot.slane %v4534, %v4547
    %v4549 = vcombine.low %v4485, %v4500
    %v4550 = vcombine.high %v4485, %v4500
    %v4552 = vunpack.c.l.s4 1934713408
    %v4553 = vunpack.c.0.s8 %v4552
    %v4554 = vlaneseq
    %v4555 = vshrl.u32 %v4554, 7
    %v4556 = vsub.s32 %v4553, %v4555
    %v4557 = vrot.slane %v4549, %v4556
    %v4559 = vunpack.c.l.s4 1934713408
    %v4560 = vunpack.c.0.s8 %v4559
    %v4561 = vlaneseq
    %v4562 = vshrl.u32 %v4561, 7
    %v4563 = vsub.s32 %v4560, %v4562
    %v4564 = vrot.slane %v4550, %v4563
    %v4565 = vcombine.low %v4509, %v4541
    %v4566 = vcombine.high %v4509, %v4541
    %v4567 = vcombine.low %v4516, %v4548
    %v4568 = vcombine.high %v4516, %v4548
    %v4569 = vcombine.low %v4525, %v4557
    %v4570 = vcombine.high %v4525, %v4557
    %v4571 = vcombine.low %v4532, %v4564
    %v4572 = vcombine.high %v4532, %v4564
    %v4573 = vcombine.low %v98, %v226
    %v4574 = vcombine.high %v98, %v226
    %v4576 = vunpack.c.l.s4 1983009808
    %v4577 = vunpack.c.0.s8 %v4576
    %v4578 = vlaneseq
    %v4579 = vshrl.u32 %v4578, 7
    %v4580 = vsub.s32 %v4577, %v4579
    %v4581 = vrot.slane %v4573, %v4580
    %v4583 = vunpack.c.l.s4 1983009808
    %v4584 = vunpack.c.0.s8 %v4583
    %v4585 = vlaneseq
    %v4586 = vshrl.u32 %v4585, 7
    %v4587 = vsub.s32 %v4584, %v4586
    %v4588 = vrot.slane %v4574, %v4587
    %v4589 = vcombine.low %v162, %v290
    %v4590 = vcombine.high %v162, %v290
    %v4592 = vunpack.c.l.s4 1983009808
    %v4593 = vunpack.c.0.s8 %v4592
    %v4594 = vlaneseq
    %v4595 = vshrl.u32 %v4594, 7
    %v4596 = vsub.s32 %v4593, %v4595
    %v4597 = vrot.slane %v4589, %v4596
    %v4599 = vunpack.c.l.s4 1983009808
    %v4600 = vunpack.c.0.s8 %v4599
    %v4601 = vlaneseq
    %v4602 = vshrl.u32 %v4601, 7
    %v4603 = vsub.s32 %v4600, %v4602
    %v4604 = vrot.slane %v4590, %v4603
    %v4605 = vcombine.high %v354, 0.0
    %v4607 = vunpack.c.l.s4 1983009808
    %v4608 = vunpack.c.0.s8 %v4607
    %v4609 = vlaneseq
    %v4610 = vshrl.u32 %v4609, 7
    %v4611 = vsub.s32 %v4608, %v4610
    %v4612 = vrot.slane %v354, %v4611
    %v4614 = vunpack.c.l.s4 1983009808
    %v4615 = vunpack.c.0.s8 %v4614
    %v4616 = vlaneseq
    %v4617 = vshrl.u32 %v4616, 7
    %v4618 = vsub.s32 %v4615, %v4617
    %v4619 = vrot.slane %v4605, %v4618
    %v4620 = vcombine.high %v418, 0.0
    %v4622 = vunpack.c.l.s4 1983009808
    %v4623 = vunpack.c.0.s8 %v4622
    %v4624 = vlaneseq
    %v4625 = vshrl.u32 %v4624, 7
    %v4626 = vsub.s32 %v4623, %v4625
    %v4627 = vrot.slane %v418, %v4626
    %v4629 = vunpack.c.l.s4 1983009808
    %v4630 = vunpack.c.0.s8 %v4629
    %v4631 = vlaneseq
    %v4632 = vshrl.u32 %v4631, 7
    %v4633 = vsub.s32 %v4630, %v4632
    %v4634 = vrot.slane %v4620, %v4633
    %v4635 = vcombine.low %v4581, %v4597
    %v4636 = vcombine.high %v4581, %v4597
    %v4638 = vunpack.c.l.s4 1934713408
    %v4639 = vunpack.c.0.s8 %v4638
    %v4640 = vlaneseq
    %v4641 = vshrl.u32 %v4640, 7
    %v4642 = vsub.s32 %v4639, %v4641
    %v4643 = vrot.slane %v4635, %v4642
    %v4645 = vunpack.c.l.s4 1934713408
    %v4646 = vunpack.c.0.s8 %v4645
    %v4647 = vlaneseq
    %v4648 = vshrl.u32 %v4647, 7
    %v4649 = vsub.s32 %v4646, %v4648
    %v4650 = vrot.slane %v4636, %v4649
    %v4651 = vcombine.low %v4588, %v4604
    %v4652 = vcombine.high %v4588, %v4604
    %v4654 = vunpack.c.l.s4 1934713408
    %v4655 = vunpack.c.0.s8 %v4654
    %v4656 = vlaneseq
    %v4657 = vshrl.u32 %v4656, 7
    %v4658 = vsub.s32 %v4655, %v4657
    %v4659 = vrot.slane %v4651, %v4658
    %v4661 = vunpack.c.l.s4 1934713408
    %v4662 = vunpack.c.0.s8 %v4661
    %v4663 = vlaneseq
    %v4664 = vshrl.u32 %v4663, 7
    %v4665 = vsub.s32 %v4662, %v4664
    %v4666 = vrot.slane %v4652, %v4665
    %v4667 = vcombine.low %v4612, %v4627
    %v4668 = vcombine.high %v4612, %v4627
    %v4670 = vunpack.c.l.s4 1934713408
    %v4671 = vunpack.c.0.s8 %v4670
    %v4672 = vlaneseq
    %v4673 = vshrl.u32 %v4672, 7
    %v4674 = vsub.s32 %v4671, %v4673
    %v4675 = vrot.slane %v4667, %v4674
    %v4677 = vunpack.c.l.s4 1934713408
    %v4678 = vunpack.c.0.s8 %v4677
    %v4679 = vlaneseq
    %v4680 = vshrl.u32 %v4679, 7
    %v4681 = vsub.s32 %v4678, %v4680
    %v4682 = vrot.slane %v4668, %v4681
    %v4683 = vcombine.low %v4619, %v4634
    %v4684 = vcombine.high %v4619, %v4634
    %v4686 = vunpack.c.l.s4 1934713408
    %v4687 = vunpack.c.0.s8 %v4686
    %v4688 = vlaneseq
    %v4689 = vshrl.u32 %v4688, 7
    %v4690 = vsub.s32 %v4687, %v4689
    %v4691 = vrot.slane %v4683, %v4690
    %v4693 = vunpack.c.l.s4 1934713408
    %v4694 = vunpack.c.0.s8 %v4693
    %v4695 = vlaneseq
    %v4696 = vshrl.u32 %v4695, 7
    %v4697 = vsub.s32 %v4694, %v4696
    %v4698 = vrot.slane %v4684, %v4697
    %v4699 = vcombine.low %v4643, %v4675
    %v4700 = vcombine.high %v4643, %v4675
    %v4701 = vcombine.low %v4650, %v4682
    %v4702 = vcombine.high %v4650, %v4682
    %v4703 = vcombine.low %v4659, %v4691
    %v4704 = vcombine.high %v4659, %v4691
    %v4705 = vcombine.low %v4666, %v4698
    %v4706 = vcombine.high %v4666, %v4698
    %4708 = vrot.lane.b32.xlu0 %v546, 8
    %v4709 = vpop.permute.xlu0 %4708
    %4712 = vrot.lane.b32.xlu0 %v547, 16
    %v4713 = vpop.permute.xlu0 %4712
    %4716 = vrot.lane.b32.xlu0 %v548, 24
    %v4717 = vpop.permute.xlu0 %4716
    %4720 = vrot.lane.b32.xlu0 %v549, 32
    %v4721 = vpop.permute.xlu0 %4720
    %4724 = vrot.lane.b32.xlu0 %v550, 40
    %v4725 = vpop.permute.xlu0 %4724
    %4728 = vrot.lane.b32.xlu0 %v551, 48
    %v4729 = vpop.permute.xlu0 %4728
    %4732 = vrot.lane.b32.xlu0 %v552, 56
    %v4733 = vpop.permute.xlu0 %4732
    %4736 = vrot.lane.b32.xlu0 %v679, 64
    %v4737 = vpop.permute.xlu0 %4736
    %4740 = vrot.lane.b32.xlu0 %v680, 72
    %v4741 = vpop.permute.xlu0 %4740
    %4744 = vrot.lane.b32.xlu0 %v681, 80
    %v4745 = vpop.permute.xlu0 %4744
    %4748 = vrot.lane.b32.xlu0 %v682, 88
    %v4749 = vpop.permute.xlu0 %4748
    %4752 = vrot.lane.b32.xlu0 %v683, 96
    %v4753 = vpop.permute.xlu0 %4752
    %4756 = vrot.lane.b32.xlu0 %v684, 104
    %v4757 = vpop.permute.xlu0 %4756
    %4760 = vrot.lane.b32.xlu0 %v685, 112
    %v4761 = vpop.permute.xlu0 %4760
    %4764 = vrot.lane.b32.xlu0 %v686, 120
    %v4765 = vpop.permute.xlu0 %4764
    %4768 = vrot.lane.b32.xlu0 %v814, 8
    %v4769 = vpop.permute.xlu0 %4768
    %4772 = vrot.lane.b32.xlu0 %v815, 16
    %v4773 = vpop.permute.xlu0 %4772
    %4776 = vrot.lane.b32.xlu0 %v816, 24
    %v4777 = vpop.permute.xlu0 %4776
    %4780 = vrot.lane.b32.xlu0 %v817, 32
    %v4781 = vpop.permute.xlu0 %4780
    %4784 = vrot.lane.b32.xlu0 %v818, 40
    %v4785 = vpop.permute.xlu0 %4784
    %4788 = vrot.lane.b32.xlu0 %v819, 48
    %v4789 = vpop.permute.xlu0 %4788
    %4792 = vrot.lane.b32.xlu0 %v820, 56
    %v4793 = vpop.permute.xlu0 %4792
    %4796 = vrot.lane.b32.xlu0 %v947, 64
    %v4797 = vpop.permute.xlu0 %4796
    %4800 = vrot.lane.b32.xlu0 %v948, 72
    %v4801 = vpop.permute.xlu0 %4800
    %4804 = vrot.lane.b32.xlu0 %v949, 80
    %v4805 = vpop.permute.xlu0 %4804
    %4808 = vrot.lane.b32.xlu0 %v950, 88
    %v4809 = vpop.permute.xlu0 %4808
    %4812 = vrot.lane.b32.xlu0 %v951, 96
    %v4813 = vpop.permute.xlu0 %4812
    %4816 = vrot.lane.b32.xlu0 %v952, 104
    %v4817 = vpop.permute.xlu0 %4816
    %4820 = vrot.lane.b32.xlu0 %v953, 112
    %v4821 = vpop.permute.xlu0 %4820
    %4824 = vrot.lane.b32.xlu0 %v954, 120
    %v4825 = vpop.permute.xlu0 %4824
    %4828 = vrot.lane.b32.xlu0 %v1082, 8
    %v4829 = vpop.permute.xlu0 %4828
    %4832 = vrot.lane.b32.xlu0 %v1083, 16
    %v4833 = vpop.permute.xlu0 %4832
    %4836 = vrot.lane.b32.xlu0 %v1084, 24
    %v4837 = vpop.permute.xlu0 %4836
    %4840 = vrot.lane.b32.xlu0 %v1085, 32
    %v4841 = vpop.permute.xlu0 %4840
    %4844 = vrot.lane.b32.xlu0 %v1086, 40
    %v4845 = vpop.permute.xlu0 %4844
    %4848 = vrot.lane.b32.xlu0 %v1087, 48
    %v4849 = vpop.permute.xlu0 %4848
    %4852 = vrot.lane.b32.xlu0 %v1088, 56
    %v4853 = vpop.permute.xlu0 %4852
    %4856 = vrot.lane.b32.xlu0 %v1215, 64
    %v4857 = vpop.permute.xlu0 %4856
    %4860 = vrot.lane.b32.xlu0 %v1216, 72
    %v4861 = vpop.permute.xlu0 %4860
    %4864 = vrot.lane.b32.xlu0 %v1217, 80
    %v4865 = vpop.permute.xlu0 %4864
    %4868 = vrot.lane.b32.xlu0 %v1218, 88
    %v4869 = vpop.permute.xlu0 %4868
    %4872 = vrot.lane.b32.xlu0 %v1219, 96
    %v4873 = vpop.permute.xlu0 %4872
    %4876 = vrot.lane.b32.xlu0 %v1220, 104
    %v4877 = vpop.permute.xlu0 %4876
    %4880 = vrot.lane.b32.xlu0 %v1221, 112
    %v4881 = vpop.permute.xlu0 %4880
    %4884 = vrot.lane.b32.xlu0 %v1222, 120
    %v4885 = vpop.permute.xlu0 %4884
    %4888 = vrot.lane.b32.xlu0 %v1350, 8
    %v4889 = vpop.permute.xlu0 %4888
    %4892 = vrot.lane.b32.xlu0 %v1351, 16
    %v4893 = vpop.permute.xlu0 %4892
    %4896 = vrot.lane.b32.xlu0 %v1352, 24
    %v4897 = vpop.permute.xlu0 %4896
    %4900 = vrot.lane.b32.xlu0 %v1353, 32
    %v4901 = vpop.permute.xlu0 %4900
    %4904 = vrot.lane.b32.xlu0 %v1354, 40
    %v4905 = vpop.permute.xlu0 %4904
    %4908 = vrot.lane.b32.xlu0 %v1355, 48
    %v4909 = vpop.permute.xlu0 %4908
    %4912 = vrot.lane.b32.xlu0 %v1356, 56
    %v4913 = vpop.permute.xlu0 %4912
    %4916 = vrot.lane.b32.xlu0 %v1483, 64
    %v4917 = vpop.permute.xlu0 %4916
    %4920 = vrot.lane.b32.xlu0 %v1484, 72
    %v4921 = vpop.permute.xlu0 %4920
    %4924 = vrot.lane.b32.xlu0 %v1485, 80
    %v4925 = vpop.permute.xlu0 %4924
    %4928 = vrot.lane.b32.xlu0 %v1486, 88
    %v4929 = vpop.permute.xlu0 %4928
    %4932 = vrot.lane.b32.xlu0 %v1487, 96
    %v4933 = vpop.permute.xlu0 %4932
    %4936 = vrot.lane.b32.xlu0 %v1488, 104
    %v4937 = vpop.permute.xlu0 %4936
    %4940 = vrot.lane.b32.xlu0 %v1489, 112
    %v4941 = vpop.permute.xlu0 %4940
    %4944 = vrot.lane.b32.xlu0 %v1490, 120
    %v4945 = vpop.permute.xlu0 %4944
    %4948 = vrot.lane.b32.xlu0 %v1618, 8
    %v4949 = vpop.permute.xlu0 %4948
    %4952 = vrot.lane.b32.xlu0 %v1619, 16
    %v4953 = vpop.permute.xlu0 %4952
    %4956 = vrot.lane.b32.xlu0 %v1620, 24
    %v4957 = vpop.permute.xlu0 %4956
    %4960 = vrot.lane.b32.xlu0 %v1621, 32
    %v4961 = vpop.permute.xlu0 %4960
    %4964 = vrot.lane.b32.xlu0 %v1622, 40
    %v4965 = vpop.permute.xlu0 %4964
    %4968 = vrot.lane.b32.xlu0 %v1623, 48
    %v4969 = vpop.permute.xlu0 %4968
    %4972 = vrot.lane.b32.xlu0 %v1624, 56
    %v4973 = vpop.permute.xlu0 %4972
    %4976 = vrot.lane.b32.xlu0 %v1751, 64
    %v4977 = vpop.permute.xlu0 %4976
    %4980 = vrot.lane.b32.xlu0 %v1752, 72
    %v4981 = vpop.permute.xlu0 %4980
    %4984 = vrot.lane.b32.xlu0 %v1753, 80
    %v4985 = vpop.permute.xlu0 %4984
    %4988 = vrot.lane.b32.xlu0 %v1754, 88
    %v4989 = vpop.permute.xlu0 %4988
    %4992 = vrot.lane.b32.xlu0 %v1755, 96
    %v4993 = vpop.permute.xlu0 %4992
    %4996 = vrot.lane.b32.xlu0 %v1756, 104
    %v4997 = vpop.permute.xlu0 %4996
    %5000 = vrot.lane.b32.xlu0 %v1757, 112
    %v5001 = vpop.permute.xlu0 %5000
    %5004 = vrot.lane.b32.xlu0 %v1758, 120
    %v5005 = vpop.permute.xlu0 %5004
    %5008 = vrot.lane.b32.xlu0 %v1886, 8
    %v5009 = vpop.permute.xlu0 %5008
    %5012 = vrot.lane.b32.xlu0 %v1887, 16
    %v5013 = vpop.permute.xlu0 %5012
    %5016 = vrot.lane.b32.xlu0 %v1888, 24
    %v5017 = vpop.permute.xlu0 %5016
    %5020 = vrot.lane.b32.xlu0 %v1889, 32
    %v5021 = vpop.permute.xlu0 %5020
    %5024 = vrot.lane.b32.xlu0 %v1890, 40
    %v5025 = vpop.permute.xlu0 %5024
    %5028 = vrot.lane.b32.xlu0 %v1891, 48
    %v5029 = vpop.permute.xlu0 %5028
    %5032 = vrot.lane.b32.xlu0 %v1892, 56
    %v5033 = vpop.permute.xlu0 %5032
    %5036 = vrot.lane.b32.xlu0 %v2019, 64
    %v5037 = vpop.permute.xlu0 %5036
    %5040 = vrot.lane.b32.xlu0 %v2020, 72
    %v5041 = vpop.permute.xlu0 %5040
    %5044 = vrot.lane.b32.xlu0 %v2021, 80
    %v5045 = vpop.permute.xlu0 %5044
    %5048 = vrot.lane.b32.xlu0 %v2022, 88
    %v5049 = vpop.permute.xlu0 %5048
    %5052 = vrot.lane.b32.xlu0 %v2023, 96
    %v5053 = vpop.permute.xlu0 %5052
    %5056 = vrot.lane.b32.xlu0 %v2024, 104
    %v5057 = vpop.permute.xlu0 %5056
    %5060 = vrot.lane.b32.xlu0 %v2025, 112
    %v5061 = vpop.permute.xlu0 %5060
    %5064 = vrot.lane.b32.xlu0 %v2026, 120
    %v5065 = vpop.permute.xlu0 %5064
    %5068 = vrot.lane.b32.xlu0 %v2154, 8
    %v5069 = vpop.permute.xlu0 %5068
    %5072 = vrot.lane.b32.xlu0 %v2155, 16
    %v5073 = vpop.permute.xlu0 %5072
    %5076 = vrot.lane.b32.xlu0 %v2156, 24
    %v5077 = vpop.permute.xlu0 %5076
    %5080 = vrot.lane.b32.xlu0 %v2157, 32
    %v5081 = vpop.permute.xlu0 %5080
    %5084 = vrot.lane.b32.xlu0 %v2158, 40
    %v5085 = vpop.permute.xlu0 %5084
    %5088 = vrot.lane.b32.xlu0 %v2159, 48
    %v5089 = vpop.permute.xlu0 %5088
    %5092 = vrot.lane.b32.xlu0 %v2160, 56
    %v5093 = vpop.permute.xlu0 %5092
    %5096 = vrot.lane.b32.xlu0 %v2287, 64
    %v5097 = vpop.permute.xlu0 %5096
    %5100 = vrot.lane.b32.xlu0 %v2288, 72
    %v5101 = vpop.permute.xlu0 %5100
    %5104 = vrot.lane.b32.xlu0 %v2289, 80
    %v5105 = vpop.permute.xlu0 %5104
    %5108 = vrot.lane.b32.xlu0 %v2290, 88
    %v5109 = vpop.permute.xlu0 %5108
    %5112 = vrot.lane.b32.xlu0 %v2291, 96
    %v5113 = vpop.permute.xlu0 %5112
    %5116 = vrot.lane.b32.xlu0 %v2292, 104
    %v5117 = vpop.permute.xlu0 %5116
    %5120 = vrot.lane.b32.xlu0 %v2293, 112
    %v5121 = vpop.permute.xlu0 %5120
    %5124 = vrot.lane.b32.xlu0 %v2294, 120
    %v5125 = vpop.permute.xlu0 %5124
    %5128 = vrot.lane.b32.xlu0 %v2422, 8
    %v5129 = vpop.permute.xlu0 %5128
    %5132 = vrot.lane.b32.xlu0 %v2423, 16
    %v5133 = vpop.permute.xlu0 %5132
    %5136 = vrot.lane.b32.xlu0 %v2424, 24
    %v5137 = vpop.permute.xlu0 %5136
    %5140 = vrot.lane.b32.xlu0 %v2425, 32
    %v5141 = vpop.permute.xlu0 %5140
    %5144 = vrot.lane.b32.xlu0 %v2426, 40
    %v5145 = vpop.permute.xlu0 %5144
    %5148 = vrot.lane.b32.xlu0 %v2427, 48
    %v5149 = vpop.permute.xlu0 %5148
    %5152 = vrot.lane.b32.xlu0 %v2428, 56
    %v5153 = vpop.permute.xlu0 %5152
    %5156 = vrot.lane.b32.xlu0 %v2555, 64
    %v5157 = vpop.permute.xlu0 %5156
    %5160 = vrot.lane.b32.xlu0 %v2556, 72
    %v5161 = vpop.permute.xlu0 %5160
    %5164 = vrot.lane.b32.xlu0 %v2557, 80
    %v5165 = vpop.permute.xlu0 %5164
    %5168 = vrot.lane.b32.xlu0 %v2558, 88
    %v5169 = vpop.permute.xlu0 %5168
    %5172 = vrot.lane.b32.xlu0 %v2559, 96
    %v5173 = vpop.permute.xlu0 %5172
    %5176 = vrot.lane.b32.xlu0 %v2560, 104
    %v5177 = vpop.permute.xlu0 %5176
    %5180 = vrot.lane.b32.xlu0 %v2561, 112
    %v5181 = vpop.permute.xlu0 %5180
    %5184 = vrot.lane.b32.xlu0 %v2562, 120
    %v5185 = vpop.permute.xlu0 %5184
    %5188 = vrot.lane.b32.xlu0 %v2690, 8
    %v5189 = vpop.permute.xlu0 %5188
    %5192 = vrot.lane.b32.xlu0 %v2691, 16
    %v5193 = vpop.permute.xlu0 %5192
    %5196 = vrot.lane.b32.xlu0 %v2692, 24
    %v5197 = vpop.permute.xlu0 %5196
    %5200 = vrot.lane.b32.xlu0 %v2693, 32
    %v5201 = vpop.permute.xlu0 %5200
    %5204 = vrot.lane.b32.xlu0 %v2694, 40
    %v5205 = vpop.permute.xlu0 %5204
    %5208 = vrot.lane.b32.xlu0 %v2695, 48
    %v5209 = vpop.permute.xlu0 %5208
    %5212 = vrot.lane.b32.xlu0 %v2696, 56
    %v5213 = vpop.permute.xlu0 %5212
    %5216 = vrot.lane.b32.xlu0 %v2823, 64
    %v5217 = vpop.permute.xlu0 %5216
    %5220 = vrot.lane.b32.xlu0 %v2824, 72
    %v5221 = vpop.permute.xlu0 %5220
    %5224 = vrot.lane.b32.xlu0 %v2825, 80
    %v5225 = vpop.permute.xlu0 %5224
    %5228 = vrot.lane.b32.xlu0 %v2826, 88
    %v5229 = vpop.permute.xlu0 %5228
    %5232 = vrot.lane.b32.xlu0 %v2827, 96
    %v5233 = vpop.permute.xlu0 %5232
    %5236 = vrot.lane.b32.xlu0 %v2828, 104
    %v5237 = vpop.permute.xlu0 %5236
    %5240 = vrot.lane.b32.xlu0 %v2829, 112
    %v5241 = vpop.permute.xlu0 %5240
    %5244 = vrot.lane.b32.xlu0 %v2830, 120
    %v5245 = vpop.permute.xlu0 %5244
    %5248 = vrot.lane.b32.xlu0 %v2958, 8
    %v5249 = vpop.permute.xlu0 %5248
    %5252 = vrot.lane.b32.xlu0 %v2959, 16
    %v5253 = vpop.permute.xlu0 %5252
    %5256 = vrot.lane.b32.xlu0 %v2960, 24
    %v5257 = vpop.permute.xlu0 %5256
    %5260 = vrot.lane.b32.xlu0 %v2961, 32
    %v5261 = vpop.permute.xlu0 %5260
    %5264 = vrot.lane.b32.xlu0 %v2962, 40
    %v5265 = vpop.permute.xlu0 %5264
    %5268 = vrot.lane.b32.xlu0 %v2963, 48
    %v5269 = vpop.permute.xlu0 %5268
    %5272 = vrot.lane.b32.xlu0 %v2964, 56
    %v5273 = vpop.permute.xlu0 %5272
    %5276 = vrot.lane.b32.xlu0 %v3091, 64
    %v5277 = vpop.permute.xlu0 %5276
    %5280 = vrot.lane.b32.xlu0 %v3092, 72
    %v5281 = vpop.permute.xlu0 %5280
    %5284 = vrot.lane.b32.xlu0 %v3093, 80
    %v5285 = vpop.permute.xlu0 %5284
    %5288 = vrot.lane.b32.xlu0 %v3094, 88
    %v5289 = vpop.permute.xlu0 %5288
    %5292 = vrot.lane.b32.xlu0 %v3095, 96
    %v5293 = vpop.permute.xlu0 %5292
    %5296 = vrot.lane.b32.xlu0 %v3096, 104
    %v5297 = vpop.permute.xlu0 %5296
    %5300 = vrot.lane.b32.xlu0 %v3097, 112
    %v5301 = vpop.permute.xlu0 %5300
    %5304 = vrot.lane.b32.xlu0 %v3098, 120
    %v5305 = vpop.permute.xlu0 %5304
    %5308 = vrot.lane.b32.xlu0 %v3226, 8
    %v5309 = vpop.permute.xlu0 %5308
    %5312 = vrot.lane.b32.xlu0 %v3227, 16
    %v5313 = vpop.permute.xlu0 %5312
    %5316 = vrot.lane.b32.xlu0 %v3228, 24
    %v5317 = vpop.permute.xlu0 %5316
    %5320 = vrot.lane.b32.xlu0 %v3229, 32
    %v5321 = vpop.permute.xlu0 %5320
    %5324 = vrot.lane.b32.xlu0 %v3230, 40
    %v5325 = vpop.permute.xlu0 %5324
    %5328 = vrot.lane.b32.xlu0 %v3231, 48
    %v5329 = vpop.permute.xlu0 %5328
    %5332 = vrot.lane.b32.xlu0 %v3232, 56
    %v5333 = vpop.permute.xlu0 %5332
    %5336 = vrot.lane.b32.xlu0 %v3359, 64
    %v5337 = vpop.permute.xlu0 %5336
    %5340 = vrot.lane.b32.xlu0 %v3360, 72
    %v5341 = vpop.permute.xlu0 %5340
    %5344 = vrot.lane.b32.xlu0 %v3361, 80
    %v5345 = vpop.permute.xlu0 %5344
    %5348 = vrot.lane.b32.xlu0 %v3362, 88
    %v5349 = vpop.permute.xlu0 %5348
    %5352 = vrot.lane.b32.xlu0 %v3363, 96
    %v5353 = vpop.permute.xlu0 %5352
    %5356 = vrot.lane.b32.xlu0 %v3364, 104
    %v5357 = vpop.permute.xlu0 %5356
    %5360 = vrot.lane.b32.xlu0 %v3365, 112
    %v5361 = vpop.permute.xlu0 %5360
    %5364 = vrot.lane.b32.xlu0 %v3366, 120
    %v5365 = vpop.permute.xlu0 %5364
    %5368 = vrot.lane.b32.xlu0 %v3494, 8
    %v5369 = vpop.permute.xlu0 %5368
    %5372 = vrot.lane.b32.xlu0 %v3495, 16
    %v5373 = vpop.permute.xlu0 %5372
    %5376 = vrot.lane.b32.xlu0 %v3496, 24
    %v5377 = vpop.permute.xlu0 %5376
    %5380 = vrot.lane.b32.xlu0 %v3497, 32
    %v5381 = vpop.permute.xlu0 %5380
    %5384 = vrot.lane.b32.xlu0 %v3498, 40
    %v5385 = vpop.permute.xlu0 %5384
    %5388 = vrot.lane.b32.xlu0 %v3499, 48
    %v5389 = vpop.permute.xlu0 %5388
    %5392 = vrot.lane.b32.xlu0 %v3500, 56
    %v5393 = vpop.permute.xlu0 %5392
    %5396 = vrot.lane.b32.xlu0 %v3627, 64
    %v5397 = vpop.permute.xlu0 %5396
    %5400 = vrot.lane.b32.xlu0 %v3628, 72
    %v5401 = vpop.permute.xlu0 %5400
    %5404 = vrot.lane.b32.xlu0 %v3629, 80
    %v5405 = vpop.permute.xlu0 %5404
    %5408 = vrot.lane.b32.xlu0 %v3630, 88
    %v5409 = vpop.permute.xlu0 %5408
    %5412 = vrot.lane.b32.xlu0 %v3631, 96
    %v5413 = vpop.permute.xlu0 %5412
    %5416 = vrot.lane.b32.xlu0 %v3632, 104
    %v5417 = vpop.permute.xlu0 %5416
    %5420 = vrot.lane.b32.xlu0 %v3633, 112
    %v5421 = vpop.permute.xlu0 %5420
    %5424 = vrot.lane.b32.xlu0 %v3634, 120
    %v5425 = vpop.permute.xlu0 %5424
    %5428 = vrot.lane.b32.xlu0 %v3762, 8
    %v5429 = vpop.permute.xlu0 %5428
    %5432 = vrot.lane.b32.xlu0 %v3763, 16
    %v5433 = vpop.permute.xlu0 %5432
    %5436 = vrot.lane.b32.xlu0 %v3764, 24
    %v5437 = vpop.permute.xlu0 %5436
    %5440 = vrot.lane.b32.xlu0 %v3765, 32
    %v5441 = vpop.permute.xlu0 %5440
    %5444 = vrot.lane.b32.xlu0 %v3766, 40
    %v5445 = vpop.permute.xlu0 %5444
    %5448 = vrot.lane.b32.xlu0 %v3767, 48
    %v5449 = vpop.permute.xlu0 %5448
    %5452 = vrot.lane.b32.xlu0 %v3768, 56
    %v5453 = vpop.permute.xlu0 %5452
    %5456 = vrot.lane.b32.xlu0 %v3895, 64
    %v5457 = vpop.permute.xlu0 %5456
    %5460 = vrot.lane.b32.xlu0 %v3896, 72
    %v5461 = vpop.permute.xlu0 %5460
    %5464 = vrot.lane.b32.xlu0 %v3897, 80
    %v5465 = vpop.permute.xlu0 %5464
    %5468 = vrot.lane.b32.xlu0 %v3898, 88
    %v5469 = vpop.permute.xlu0 %5468
    %5472 = vrot.lane.b32.xlu0 %v3899, 96
    %v5473 = vpop.permute.xlu0 %5472
    %5476 = vrot.lane.b32.xlu0 %v3900, 104
    %v5477 = vpop.permute.xlu0 %5476
    %5480 = vrot.lane.b32.xlu0 %v3901, 112
    %v5481 = vpop.permute.xlu0 %5480
    %5484 = vrot.lane.b32.xlu0 %v3902, 120
    %v5485 = vpop.permute.xlu0 %5484
    %5488 = vrot.lane.b32.xlu0 %v4030, 8
    %v5489 = vpop.permute.xlu0 %5488
    %5492 = vrot.lane.b32.xlu0 %v4031, 16
    %v5493 = vpop.permute.xlu0 %5492
    %5496 = vrot.lane.b32.xlu0 %v4032, 24
    %v5497 = vpop.permute.xlu0 %5496
    %5500 = vrot.lane.b32.xlu0 %v4033, 32
    %v5501 = vpop.permute.xlu0 %5500
    %5504 = vrot.lane.b32.xlu0 %v4034, 40
    %v5505 = vpop.permute.xlu0 %5504
    %5508 = vrot.lane.b32.xlu0 %v4035, 48
    %v5509 = vpop.permute.xlu0 %5508
    %5512 = vrot.lane.b32.xlu0 %v4036, 56
    %v5513 = vpop.permute.xlu0 %5512
    %5516 = vrot.lane.b32.xlu0 %v4163, 64
    %v5517 = vpop.permute.xlu0 %5516
    %5520 = vrot.lane.b32.xlu0 %v4164, 72
    %v5521 = vpop.permute.xlu0 %5520
    %5524 = vrot.lane.b32.xlu0 %v4165, 80
    %v5525 = vpop.permute.xlu0 %5524
    %5528 = vrot.lane.b32.xlu0 %v4166, 88
    %v5529 = vpop.permute.xlu0 %5528
    %5532 = vrot.lane.b32.xlu0 %v4167, 96
    %v5533 = vpop.permute.xlu0 %5532
    %5536 = vrot.lane.b32.xlu0 %v4168, 104
    %v5537 = vpop.permute.xlu0 %5536
    %5540 = vrot.lane.b32.xlu0 %v4169, 112
    %v5541 = vpop.permute.xlu0 %5540
    %5544 = vrot.lane.b32.xlu0 %v4170, 120
    %v5545 = vpop.permute.xlu0 %5544
    %5548 = vrot.lane.b32.xlu0 %v4298, 8
    %v5549 = vpop.permute.xlu0 %5548
    %5552 = vrot.lane.b32.xlu0 %v4299, 16
    %v5553 = vpop.permute.xlu0 %5552
    %5556 = vrot.lane.b32.xlu0 %v4300, 24
    %v5557 = vpop.permute.xlu0 %5556
    %5560 = vrot.lane.b32.xlu0 %v4301, 32
    %v5561 = vpop.permute.xlu0 %5560
    %5564 = vrot.lane.b32.xlu0 %v4302, 40
    %v5565 = vpop.permute.xlu0 %5564
    %5568 = vrot.lane.b32.xlu0 %v4303, 48
    %v5569 = vpop.permute.xlu0 %5568
    %5572 = vrot.lane.b32.xlu0 %v4304, 56
    %v5573 = vpop.permute.xlu0 %5572
    %5576 = vrot.lane.b32.xlu0 %v4431, 64
    %v5577 = vpop.permute.xlu0 %5576
    %5580 = vrot.lane.b32.xlu0 %v4432, 72
    %v5581 = vpop.permute.xlu0 %5580
    %5584 = vrot.lane.b32.xlu0 %v4433, 80
    %v5585 = vpop.permute.xlu0 %5584
    %5588 = vrot.lane.b32.xlu0 %v4434, 88
    %v5589 = vpop.permute.xlu0 %5588
    %5592 = vrot.lane.b32.xlu0 %v4435, 96
    %v5593 = vpop.permute.xlu0 %5592
    %5596 = vrot.lane.b32.xlu0 %v4436, 104
    %v5597 = vpop.permute.xlu0 %5596
    %5600 = vrot.lane.b32.xlu0 %v4437, 112
    %v5601 = vpop.permute.xlu0 %5600
    %5604 = vrot.lane.b32.xlu0 %v4438, 120
    %v5605 = vpop.permute.xlu0 %5604
    %5608 = vrot.lane.b32.xlu0 %v4566, 8
    %v5609 = vpop.permute.xlu0 %5608
    %5612 = vrot.lane.b32.xlu0 %v4567, 16
    %v5613 = vpop.permute.xlu0 %5612
    %5616 = vrot.lane.b32.xlu0 %v4568, 24
    %v5617 = vpop.permute.xlu0 %5616
    %5620 = vrot.lane.b32.xlu0 %v4569, 32
    %v5621 = vpop.permute.xlu0 %5620
    %5624 = vrot.lane.b32.xlu0 %v4570, 40
    %v5625 = vpop.permute.xlu0 %5624
    %5628 = vrot.lane.b32.xlu0 %v4571, 48
    %v5629 = vpop.permute.xlu0 %5628
    %5632 = vrot.lane.b32.xlu0 %v4572, 56
    %v5633 = vpop.permute.xlu0 %5632
    %5636 = vrot.lane.b32.xlu0 %v4699, 64
    %v5637 = vpop.permute.xlu0 %5636
    %5640 = vrot.lane.b32.xlu0 %v4700, 72
    %v5641 = vpop.permute.xlu0 %5640
    %5644 = vrot.lane.b32.xlu0 %v4701, 80
    %v5645 = vpop.permute.xlu0 %5644
    %5648 = vrot.lane.b32.xlu0 %v4702, 88
    %v5649 = vpop.permute.xlu0 %5648
    %5652 = vrot.lane.b32.xlu0 %v4703, 96
    %v5653 = vpop.permute.xlu0 %5652
    %5656 = vrot.lane.b32.xlu0 %v4704, 104
    %v5657 = vpop.permute.xlu0 %5656
    %5660 = vrot.lane.b32.xlu0 %v4705, 112
    %v5661 = vpop.permute.xlu0 %5660
    %5664 = vrot.lane.b32.xlu0 %v4706, 120
    %v5665 = vpop.permute.xlu0 %5664
    %vm5667 = vcmask 64512
    %v5668 = vsel %vm5667, %v545, %v4709
    %vm5669 = vcmask 130048
    %v5670 = vsel %vm5669, %v5668, %v4713
    %vm5671 = vcmask 195584
    %v5672 = vsel %vm5671, %v5670, %v4717
    %vm5673 = vcmask 261120
    %v5674 = vsel %vm5673, %v5672, %v4721
    %vm5675 = vcmask 326656
    %v5676 = vsel %vm5675, %v5674, %v4725
    %vm5677 = vcmask 392192
    %v5678 = vsel %vm5677, %v5676, %v4729
    %vm5679 = vcmask 457728
    %v5680 = vsel %vm5679, %v5678, %v4733
    %vm5681 = vcmask 523264
    %v5682 = vsel %vm5681, %v5680, %v4737
    %vm5683 = vcmask 588800
    %v5684 = vsel %vm5683, %v5682, %v4741
    %vm5685 = vcmask 654336
    %v5686 = vsel %vm5685, %v5684, %v4745
    %vm5687 = vcmask 719872
    %v5688 = vsel %vm5687, %v5686, %v4749
    %vm5689 = vcmask 785408
    %v5690 = vsel %vm5689, %v5688, %v4753
    %vm5691 = vcmask 850944
    %v5692 = vsel %vm5691, %v5690, %v4757
    %vm5693 = vcmask 916480
    %v5694 = vsel %vm5693, %v5692, %v4761
    %vm5695 = vcmask 982016
    %v5696 = vsel %vm5695, %v5694, %v4765
    %v5697 = vsel %vm5667, %v813, %v4769
    %v5698 = vsel %vm5669, %v5697, %v4773
    %v5699 = vsel %vm5671, %v5698, %v4777
    %v5700 = vsel %vm5673, %v5699, %v4781
    %v5701 = vsel %vm5675, %v5700, %v4785
    %v5702 = vsel %vm5677, %v5701, %v4789
    %v5703 = vsel %vm5679, %v5702, %v4793
    %v5704 = vsel %vm5681, %v5703, %v4797
    %v5705 = vsel %vm5683, %v5704, %v4801
    %v5706 = vsel %vm5685, %v5705, %v4805
    %v5707 = vsel %vm5687, %v5706, %v4809
    %v5708 = vsel %vm5689, %v5707, %v4813
    %v5709 = vsel %vm5691, %v5708, %v4817
    %v5710 = vsel %vm5693, %v5709, %v4821
    %v5711 = vsel %vm5695, %v5710, %v4825
    %v5712 = vsel %vm5667, %v1081, %v4829
    %v5713 = vsel %vm5669, %v5712, %v4833
    %v5714 = vsel %vm5671, %v5713, %v4837
    %v5715 = vsel %vm5673, %v5714, %v4841
    %v5716 = vsel %vm5675, %v5715, %v4845
    %v5717 = vsel %vm5677, %v5716, %v4849
    %v5718 = vsel %vm5679, %v5717, %v4853
    %v5719 = vsel %vm5681, %v5718, %v4857
    %v5720 = vsel %vm5683, %v5719, %v4861
    %v5721 = vsel %vm5685, %v5720, %v4865
    %v5722 = vsel %vm5687, %v5721, %v4869
    %v5723 = vsel %vm5689, %v5722, %v4873
    %v5724 = vsel %vm5691, %v5723, %v4877
    %v5725 = vsel %vm5693, %v5724, %v4881
    %v5726 = vsel %vm5695, %v5725, %v4885
    %v5727 = vsel %vm5667, %v1349, %v4889
    %v5728 = vsel %vm5669, %v5727, %v4893
    %v5729 = vsel %vm5671, %v5728, %v4897
    %v5730 = vsel %vm5673, %v5729, %v4901
    %v5731 = vsel %vm5675, %v5730, %v4905
    %v5732 = vsel %vm5677, %v5731, %v4909
    %v5733 = vsel %vm5679, %v5732, %v4913
    %v5734 = vsel %vm5681, %v5733, %v4917
    %v5735 = vsel %vm5683, %v5734, %v4921
    %v5736 = vsel %vm5685, %v5735, %v4925
    %v5737 = vsel %vm5687, %v5736, %v4929
    %v5738 = vsel %vm5689, %v5737, %v4933
    %v5739 = vsel %vm5691, %v5738, %v4937
    %v5740 = vsel %vm5693, %v5739, %v4941
    %v5741 = vsel %vm5695, %v5740, %v4945
    %v5742 = vsel %vm5667, %v1617, %v4949
    %v5743 = vsel %vm5669, %v5742, %v4953
    %v5744 = vsel %vm5671, %v5743, %v4957
    %v5745 = vsel %vm5673, %v5744, %v4961
    %v5746 = vsel %vm5675, %v5745, %v4965
    %v5747 = vsel %vm5677, %v5746, %v4969
    %v5748 = vsel %vm5679, %v5747, %v4973
    %v5749 = vsel %vm5681, %v5748, %v4977
    %v5750 = vsel %vm5683, %v5749, %v4981
    %v5751 = vsel %vm5685, %v5750, %v4985
    %v5752 = vsel %vm5687, %v5751, %v4989
    %v5753 = vsel %vm5689, %v5752, %v4993
    %v5754 = vsel %vm5691, %v5753, %v4997
    %v5755 = vsel %vm5693, %v5754, %v5001
    %v5756 = vsel %vm5695, %v5755, %v5005
    %v5757 = vsel %vm5667, %v1885, %v5009
    %v5758 = vsel %vm5669, %v5757, %v5013
    %v5759 = vsel %vm5671, %v5758, %v5017
    %v5760 = vsel %vm5673, %v5759, %v5021
    %v5761 = vsel %vm5675, %v5760, %v5025
    %v5762 = vsel %vm5677, %v5761, %v5029
    %v5763 = vsel %vm5679, %v5762, %v5033
    %v5764 = vsel %vm5681, %v5763, %v5037
    %v5765 = vsel %vm5683, %v5764, %v5041
    %v5766 = vsel %vm5685, %v5765, %v5045
    %v5767 = vsel %vm5687, %v5766, %v5049
    %v5768 = vsel %vm5689, %v5767, %v5053
    %v5769 = vsel %vm5691, %v5768, %v5057
    %v5770 = vsel %vm5693, %v5769, %v5061
    %v5771 = vsel %vm5695, %v5770, %v5065
    %v5772 = vsel %vm5667, %v2153, %v5069
    %v5773 = vsel %vm5669, %v5772, %v5073
    %v5774 = vsel %vm5671, %v5773, %v5077
    %v5775 = vsel %vm5673, %v5774, %v5081
    %v5776 = vsel %vm5675, %v5775, %v5085
    %v5777 = vsel %vm5677, %v5776, %v5089
    %v5778 = vsel %vm5679, %v5777, %v5093
    %v5779 = vsel %vm5681, %v5778, %v5097
    %v5780 = vsel %vm5683, %v5779, %v5101
    %v5781 = vsel %vm5685, %v5780, %v5105
    %v5782 = vsel %vm5687, %v5781, %v5109
    %v5783 = vsel %vm5689, %v5782, %v5113
    %v5784 = vsel %vm5691, %v5783, %v5117
    %v5785 = vsel %vm5693, %v5784, %v5121
    %v5786 = vsel %vm5695, %v5785, %v5125
    %v5787 = vsel %vm5667, %v2421, %v5129
    %v5788 = vsel %vm5669, %v5787, %v5133
    %v5789 = vsel %vm5671, %v5788, %v5137
    %v5790 = vsel %vm5673, %v5789, %v5141
    %v5791 = vsel %vm5675, %v5790, %v5145
    %v5792 = vsel %vm5677, %v5791, %v5149
    %v5793 = vsel %vm5679, %v5792, %v5153
    %v5794 = vsel %vm5681, %v5793, %v5157
    %v5795 = vsel %vm5683, %v5794, %v5161
    %v5796 = vsel %vm5685, %v5795, %v5165
    %v5797 = vsel %vm5687, %v5796, %v5169
    %v5798 = vsel %vm5689, %v5797, %v5173
    %v5799 = vsel %vm5691, %v5798, %v5177
    %v5800 = vsel %vm5693, %v5799, %v5181
    %v5801 = vsel %vm5695, %v5800, %v5185
    %v5802 = vsel %vm5667, %v2689, %v5189
    %v5803 = vsel %vm5669, %v5802, %v5193
    %v5804 = vsel %vm5671, %v5803, %v5197
    %v5805 = vsel %vm5673, %v5804, %v5201
    %v5806 = vsel %vm5675, %v5805, %v5205
    %v5807 = vsel %vm5677, %v5806, %v5209
    %v5808 = vsel %vm5679, %v5807, %v5213
    %v5809 = vsel %vm5681, %v5808, %v5217
    %v5810 = vsel %vm5683, %v5809, %v5221
    %v5811 = vsel %vm5685, %v5810, %v5225
    %v5812 = vsel %vm5687, %v5811, %v5229
    %v5813 = vsel %vm5689, %v5812, %v5233
    %v5814 = vsel %vm5691, %v5813, %v5237
    %v5815 = vsel %vm5693, %v5814, %v5241
    %v5816 = vsel %vm5695, %v5815, %v5245
    %v5817 = vsel %vm5667, %v2957, %v5249
    %v5818 = vsel %vm5669, %v5817, %v5253
    %v5819 = vsel %vm5671, %v5818, %v5257
    %v5820 = vsel %vm5673, %v5819, %v5261
    %v5821 = vsel %vm5675, %v5820, %v5265
    %v5822 = vsel %vm5677, %v5821, %v5269
    %v5823 = vsel %vm5679, %v5822, %v5273
    %v5824 = vsel %vm5681, %v5823, %v5277
    %v5825 = vsel %vm5683, %v5824, %v5281
    %v5826 = vsel %vm5685, %v5825, %v5285
    %v5827 = vsel %vm5687, %v5826, %v5289
    %v5828 = vsel %vm5689, %v5827, %v5293
    %v5829 = vsel %vm5691, %v5828, %v5297
    %v5830 = vsel %vm5693, %v5829, %v5301
    %v5831 = vsel %vm5695, %v5830, %v5305
    %v5832 = vsel %vm5667, %v3225, %v5309
    %v5833 = vsel %vm5669, %v5832, %v5313
    %v5834 = vsel %vm5671, %v5833, %v5317
    %v5835 = vsel %vm5673, %v5834, %v5321
    %v5836 = vsel %vm5675, %v5835, %v5325
    %v5837 = vsel %vm5677, %v5836, %v5329
    %v5838 = vsel %vm5679, %v5837, %v5333
    %v5839 = vsel %vm5681, %v5838, %v5337
    %v5840 = vsel %vm5683, %v5839, %v5341
    %v5841 = vsel %vm5685, %v5840, %v5345
    %v5842 = vsel %vm5687, %v5841, %v5349
    %v5843 = vsel %vm5689, %v5842, %v5353
    %v5844 = vsel %vm5691, %v5843, %v5357
    %v5845 = vsel %vm5693, %v5844, %v5361
    %v5846 = vsel %vm5695, %v5845, %v5365
    %v5847 = vsel %vm5667, %v3493, %v5369
    %v5848 = vsel %vm5669, %v5847, %v5373
    %v5849 = vsel %vm5671, %v5848, %v5377
    %v5850 = vsel %vm5673, %v5849, %v5381
    %v5851 = vsel %vm5675, %v5850, %v5385
    %v5852 = vsel %vm5677, %v5851, %v5389
    %v5853 = vsel %vm5679, %v5852, %v5393
    %v5854 = vsel %vm5681, %v5853, %v5397
    %v5855 = vsel %vm5683, %v5854, %v5401
    %v5856 = vsel %vm5685, %v5855, %v5405
    %v5857 = vsel %vm5687, %v5856, %v5409
    %v5858 = vsel %vm5689, %v5857, %v5413
    %v5859 = vsel %vm5691, %v5858, %v5417
    %v5860 = vsel %vm5693, %v5859, %v5421
    %v5861 = vsel %vm5695, %v5860, %v5425
    %v5862 = vsel %vm5667, %v3761, %v5429
    %v5863 = vsel %vm5669, %v5862, %v5433
    %v5864 = vsel %vm5671, %v5863, %v5437
    %v5865 = vsel %vm5673, %v5864, %v5441
    %v5866 = vsel %vm5675, %v5865, %v5445
    %v5867 = vsel %vm5677, %v5866, %v5449
    %v5868 = vsel %vm5679, %v5867, %v5453
    %v5869 = vsel %vm5681, %v5868, %v5457
    %v5870 = vsel %vm5683, %v5869, %v5461
    %v5871 = vsel %vm5685, %v5870, %v5465
    %v5872 = vsel %vm5687, %v5871, %v5469
    %v5873 = vsel %vm5689, %v5872, %v5473
    %v5874 = vsel %vm5691, %v5873, %v5477
    %v5875 = vsel %vm5693, %v5874, %v5481
    %v5876 = vsel %vm5695, %v5875, %v5485
    %v5877 = vsel %vm5667, %v4029, %v5489
    %v5878 = vsel %vm5669, %v5877, %v5493
    %v5879 = vsel %vm5671, %v5878, %v5497
    %v5880 = vsel %vm5673, %v5879, %v5501
    %v5881 = vsel %vm5675, %v5880, %v5505
    %v5882 = vsel %vm5677, %v5881, %v5509
    %v5883 = vsel %vm5679, %v5882, %v5513
    %v5884 = vsel %vm5681, %v5883, %v5517
    %v5885 = vsel %vm5683, %v5884, %v5521
    %v5886 = vsel %vm5685, %v5885, %v5525
    %v5887 = vsel %vm5687, %v5886, %v5529
    %v5888 = vsel %vm5689, %v5887, %v5533
    %v5889 = vsel %vm5691, %v5888, %v5537
    %v5890 = vsel %vm5693, %v5889, %v5541
    %v5891 = vsel %vm5695, %v5890, %v5545
    %v5892 = vsel %vm5667, %v4297, %v5549
    %v5893 = vsel %vm5669, %v5892, %v5553
    %v5894 = vsel %vm5671, %v5893, %v5557
    %v5895 = vsel %vm5673, %v5894, %v5561
    %v5896 = vsel %vm5675, %v5895, %v5565
    %v5897 = vsel %vm5677, %v5896, %v5569
    %v5898 = vsel %vm5679, %v5897, %v5573
    %v5899 = vsel %vm5681, %v5898, %v5577
    %v5900 = vsel %vm5683, %v5899, %v5581
    %v5901 = vsel %vm5685, %v5900, %v5585
    %v5902 = vsel %vm5687, %v5901, %v5589
    %v5903 = vsel %vm5689, %v5902, %v5593
    %v5904 = vsel %vm5691, %v5903, %v5597
    %v5905 = vsel %vm5693, %v5904, %v5601
    %v5906 = vsel %vm5695, %v5905, %v5605
    %v5907 = vsel %vm5667, %v4565, %v5609
    %v5908 = vsel %vm5669, %v5907, %v5613
    %v5909 = vsel %vm5671, %v5908, %v5617
    %v5910 = vsel %vm5673, %v5909, %v5621
    %v5911 = vsel %vm5675, %v5910, %v5625
    %v5912 = vsel %vm5677, %v5911, %v5629
    %v5913 = vsel %vm5679, %v5912, %v5633
    %v5914 = vsel %vm5681, %v5913, %v5637
    %v5915 = vsel %vm5683, %v5914, %v5641
    %v5916 = vsel %vm5685, %v5915, %v5645
    %v5917 = vsel %vm5687, %v5916, %v5649
    %v5918 = vsel %vm5689, %v5917, %v5653
    %v5919 = vsel %vm5691, %v5918, %v5657
    %v5920 = vsel %vm5693, %v5919, %v5661
    %v5921 = vsel %vm5695, %v5920, %v5665
    %5922 = vst [vmem:[#allocation5] sm:$0x3f] %v5696
    %5923 = vst [vmem:[#allocation5 + $0x8] sm:$0x3f] %v5711
    %5924 = vst [vmem:[#allocation5 + $0x10] sm:$0x3f] %v5726
    %5925 = vst [vmem:[#allocation5 + $0x18] sm:$0x3f] %v5741
    %5926 = vst [vmem:[#allocation5 + $0x20] sm:$0x3f] %v5756
    %5927 = vst [vmem:[#allocation5 + $0x28] sm:$0x3f] %v5771
    %5928 = vst [vmem:[#allocation5 + $0x30] sm:$0x3f] %v5786
    %5929 = vst [vmem:[#allocation5 + $0x38] sm:$0x3f] %v5801
    %5930 = vst [vmem:[#allocation5 + $0x40] sm:$0x3f] %v5816
    %5931 = vst [vmem:[#allocation5 + $0x48] sm:$0x3f] %v5831
    %5932 = vst [vmem:[#allocation5 + $0x50] sm:$0x3f] %v5846
    %5933 = vst [vmem:[#allocation5 + $0x58] sm:$0x3f] %v5861
    %5934 = vst [vmem:[#allocation5 + $0x60] sm:$0x3f] %v5876
    %5935 = vst [vmem:[#allocation5 + $0x68] sm:$0x3f] %v5891
    %5936 = vst [vmem:[#allocation5 + $0x70] sm:$0x3f] %v5906
    %5937 = vst [vmem:[#allocation5 + $0x78] sm:$0x3f] %v5921
    // Predicated region
    $region10: #{tpu_custom_call.1} parent=1 // pred_check
      _
    $region11: #{tpu_custom_call.1} parent=1 // pred_check_branch
      %5939 = sbr.rel (0) target = $region13
    $region12: #{tpu_custom_call.1} parent=1 // pred_region
      %s5941 = ssub.s32 2048, 2048
      %5942 = vsyncadd [#allocation4], %s5941
      %s5944 = sshll.u32 [#allocation5], 4
      %s5945 = int_to_ptr.vmem [resolvable:$true] %s5944
      %5947 = dma.vmem_to_hbm [thread:$0]  %s5945, 2048, %s1, [#allocation4]
    $region13: #{tpu_custom_call.1} parent=1 // pred_fallthru
      _
    // Predicated region
    $region14: #{tpu_custom_call.1} parent=1 // pred_check
      _
    $region15: #{tpu_custom_call.1} parent=1 // pred_check_branch
      %5949 = sbr.rel (0) target = $region17
    $region16: #{tpu_custom_call.1} parent=1 // pred_region
      %5950 = dma.done [#allocation4], 2048
    $region17: #{tpu_custom_call.1} parent=1 // pred_fallthru
      _
    %5951 = vsyncpa [#allocation3], 1
    %5952 = vsyncpa [#allocation4], 1

</llo_original>
